<compile_context>
chip_gen: v7x
topology: tpu7x:2x2x1
jax: 0.10.0
libtpu: 0.0.40
codegen_flags: <defaults>
</compile_context>

<pallas_src>
import jax
import jax.numpy as jnp
from jax.experimental import pallas as pl
from jax.experimental.pallas import tpu as pltpu

CLS_PAD = 128  # lane-dense padding width for the classifier output (class_num <= 128)


# ----------------------------------------------------------------------------
# Fused kernel: one grid step per body part.
#   h = pooled @ [W1_folded | W_embed] + [b1_folded | b_embed]      (N, 512)
#   embedding = h[:, 256:]
#   logits    = LeakyReLU_{0.1}(h[:, :256]) @ W2 + b2               (N, 128 pad)
# ----------------------------------------------------------------------------
def _embeder_kernel(x_ref, w_ref, b_ref, w2_ref, b2_ref, logits_ref, emb_ref):
    pooled = x_ref[0].astype(jnp.bfloat16)                           # (N, 2048)

    h = jnp.dot(pooled, w_ref[0],
                preferred_element_type=jnp.float32) + b_ref[0]       # (N, 512)

    # embedder output: Linear(2048 -> 256) (bias already included via b_ref)
    emb_ref[0] = h[:, 256:].astype(emb_ref.dtype)

    # bottle path: Linear (BN folded) + LeakyReLU(0.1) + classifier Linear
    bottle = h[:, :256]
    a = jnp.where(bottle >= 0.0, bottle, 0.1 * bottle)
    logits_ref[0] = (jnp.dot(a.astype(jnp.bfloat16), w2_ref[0],
                             preferred_element_type=jnp.float32)
                     + b2_ref[0]).astype(logits_ref.dtype)


def run_parts(pooled_pnc, params, part_num):
    pnum, n, c = pooled_pnc.shape
    assert pnum == part_num

    w_comb = params["w_comb"]     # (P, 2048, 512) bf16 == [W1*bn_scale | We]
    b_comb = params["b_comb"]     # (P, 1, 512)    f32  == [b1_folded   | be]
    w2_pad = params["w2_pad"]     # (P, 256, 128)  bf16 (class_num cols valid)
    b2_pad = params["b2_pad"]     # (P, 1, 128)    f32

    logits_pad, emb = pl.pallas_call(
        _embeder_kernel,
        out_shape=(
            jax.ShapeDtypeStruct((part_num, n, CLS_PAD), jnp.float32),
            jax.ShapeDtypeStruct((part_num, n, 256), jnp.float32),
        ),
        grid=(part_num,),
        in_specs=[
            pl.BlockSpec((1, n, c), lambda p: (p, 0, 0)),         # pooled acts
            pl.BlockSpec((1, c, 512), lambda p: (p, 0, 0)),       # fused weights
            pl.BlockSpec((1, 1, 512), lambda p: (p, 0, 0)),       # fused biases
            pl.BlockSpec((1, 256, CLS_PAD), lambda p: (p, 0, 0)),  # classifier W
            pl.BlockSpec((1, 1, CLS_PAD), lambda p: (p, 0, 0)),    # classifier b
        ],
        out_specs=(
            pl.BlockSpec((1, n, CLS_PAD), lambda p: (p, 0, 0)),   # logits (pad)
            pl.BlockSpec((1, n, 256), lambda p: (p, 0, 0)),       # embedding
        ),
        compiler_params=pltpu.CompilerParams(
            dimension_semantics=("parallel",)),
    )(pooled_pnc, w_comb, b_comb, w2_pad, b2_pad)
    return logits_pad, emb


# ----------------------------------------------------------------------------
# Parameter construction (deterministic, mimicking the PyTorch init schemes),
# with eval-mode BatchNorm folded into the bottle Linear and weights packed
# into the layout the kernel consumes.
# ----------------------------------------------------------------------------
def init_params(key, part_num, class_num, in_dim=2048, bottle_dim=256,
                emb_dim=256):
    assert class_num <= CLS_PAD and bottle_dim == 256 and emb_dim == 256
    ks = jax.random.split(key, 5)

    # bottle Linear: kaiming_normal_(mode='fan_out') -> std = sqrt(2 / out), bias 0
    w1 = jax.random.normal(ks[0], (part_num, in_dim, bottle_dim), jnp.float32) \
        * jnp.sqrt(2.0 / bottle_dim)
    b1 = jnp.zeros((part_num, 1, bottle_dim), jnp.float32)

    # BatchNorm1d: gamma ~ N(1, 0.02), beta 0, running stats (0, 1), eps 1e-5.
    gamma = 1.0 + 0.02 * jax.random.normal(
        ks[1], (part_num, 1, bottle_dim), jnp.float32)
    beta = jnp.zeros((part_num, 1, bottle_dim), jnp.float32)
    bn_scale = gamma / jnp.sqrt(1.0 + 1e-5)
    bn_shift = beta
    # Fold BN into the bottle Linear (eval-mode exact).
    w1f = w1 * bn_scale
    b1f = b1 * bn_scale + bn_shift

    # classifier Linear: normal(std=0.001), bias 0
    w2 = 0.001 * jax.random.normal(
        ks[2], (part_num, bottle_dim, class_num), jnp.float32)
    b2 = jnp.zeros((part_num, 1, class_num), jnp.float32)

    # embedder Linear(2048, 256): PyTorch default uniform(-1/sqrt(in), 1/sqrt(in))
    lim = 1.0 / jnp.sqrt(jnp.float32(in_dim))
    we = jax.random.uniform(ks[3], (part_num, in_dim, emb_dim), jnp.float32,
                            -lim, lim)
    be = jax.random.uniform(ks[4], (part_num, 1, emb_dim), jnp.float32,
                            -lim, lim)

    # Fused big weights in bf16 (weight-DMA-bound kernel), biases f32.
    w_comb = jnp.concatenate([w1f, we], axis=2).astype(jnp.bfloat16)  # (P,2048,512)
    b_comb = jnp.concatenate([b1f, be], axis=2)                       # (P,1,512)

    # Classifier padded to a lane-dense 128-wide tile, stored in bf16.
    w2_pad = jnp.zeros((part_num, bottle_dim, CLS_PAD), jnp.float32)
    w2_pad = w2_pad.at[:, :, :class_num].set(w2).astype(jnp.bfloat16)
    b2_pad = jnp.zeros((part_num, 1, CLS_PAD), jnp.float32)
    b2_pad = b2_pad.at[:, :, :class_num].set(b2)

    return dict(w_comb=w_comb, b_comb=b_comb, w2_pad=w2_pad, b2_pad=b2_pad,
                class_num=class_num)


# ----------------------------------------------------------------------------
# Embeder.forward (eval mode)
# ----------------------------------------------------------------------------
def embeder_forward(features_nchw, params, part_num):
    n, c, h, wdt = features_nchw.shape
    assert h % part_num == 0, "equal adaptive bins required (H % part_num == 0)"
    hbin = h // part_num

    # features_c / features_e = AdaptiveAvgPool2d((part_num, 1)) (+ eval-identity
    # Dropout).  Shape (N, C, P) matches torch.squeeze for N > 1; for
    # part_num == 1 the part axis is dropped too.
    # TODO(synk): torch.squeeze would also drop the batch axis when N == 1.
    pooled_ncp = jnp.mean(
        features_nchw.reshape(n, c, part_num, hbin * wdt), axis=-1)   # (N, C, P)
    features_c = pooled_ncp if part_num > 1 else pooled_ncp[:, :, 0]
    features_e = features_c

    # (N, C, P) -> (P, N, C): channels on the lane axis for the fused kernel.
    pooled_pnc = jnp.transpose(pooled_ncp, (2, 0, 1))                 # (P, N, 2048)
    logits_pad, emb = run_parts(pooled_pnc, params, part_num)

    class_num = params["class_num"]
    logits_list = [logits_pad[i, :, :class_num] for i in range(part_num)]
    embedding_list = [emb[i] for i in range(part_num)]
    return features_c, features_e, logits_list, embedding_list


if __name__ == "__main__":
    key = jax.random.PRNGKey(0)
    part_num, class_num = 3, 32
    N, C, H, W = 2, 2048, 6, 4            # C fixed at 2048 by the module

    kx, kp = jax.random.split(key)
    features = jax.random.normal(kx, (N, C, H, W), jnp.float32)
    params = init_params(kp, part_num, class_num)

    fc, fe, logits_list, embedding_list = embeder_forward(features, params,
                                                          part_num)
    jax.block_until_ready((fc, fe, logits_list, embedding_list))

    assert fc.shape == (N, C, part_num)
    assert fe.shape == (N, C, part_num)
    assert all(l.shape == (N, class_num) for l in logits_list)
    assert all(e.shape == (N, 256) for e in embedding_list)
    print("KERNEL_OK")
</pallas_src>

<mosaic_0001>
module attributes {stable_mosaic.version = 11 : i64} {
  func.func @_embeder_kernel(%arg0: i32, %arg1: memref<1x2x2048xf32, #tpu.memory_space<vmem>>, %arg2: memref<1x2048x512xbf16, #tpu.memory_space<vmem>>, %arg3: memref<1x1x512xf32, #tpu.memory_space<vmem>>, %arg4: memref<1x256x128xbf16, #tpu.memory_space<vmem>>, %arg5: memref<1x1x128xf32, #tpu.memory_space<vmem>>, %arg6: memref<1x2x128xf32, #tpu.memory_space<vmem>>, %arg7: memref<1x2x256xf32, #tpu.memory_space<vmem>>) attributes {dimension_semantics = [#tpu.dimension_semantics<parallel>], iteration_bounds = array<i64: 3>, scalar_prefetch = 0 : i64, scratch_operands = 0 : i64, tpu.core_type = #tpu.core_type<tc>, window_params = [{transform_indices = @transform_0, window_bounds = array<i64: 1, 2, 2048>}, {transform_indices = @transform_1, window_bounds = array<i64: 1, 2048, 512>}, {transform_indices = @transform_2, window_bounds = array<i64: 1, 1, 512>}, {transform_indices = @transform_3, window_bounds = array<i64: 1, 256, 128>}, {transform_indices = @transform_4, window_bounds = array<i64: 1, 1, 128>}, {transform_indices = @transform_5, window_bounds = array<i64: 1, 2, 128>}, {transform_indices = @transform_6, window_bounds = array<i64: 1, 2, 256>}]} {
    %c0 = arith.constant 0 : index
    %c0_0 = arith.constant 0 : index
    %c0_1 = arith.constant 0 : index
    %0 = vector.load %arg1[%c0, %c0_0, %c0_1] : memref<1x2x2048xf32, #tpu.memory_space<vmem>>, vector<1x2x2048xf32>
    %1 = vector.shape_cast %0 : vector<1x2x2048xf32> to vector<2x2048xf32>
    %2 = arith.truncf %1 : vector<2x2048xf32> to vector<2x2048xbf16>
    %c0_2 = arith.constant 0 : index
    %c0_3 = arith.constant 0 : index
    %c0_4 = arith.constant 0 : index
    %3 = vector.load %arg2[%c0_2, %c0_3, %c0_4] : memref<1x2048x512xbf16, #tpu.memory_space<vmem>>, vector<1x2048x512xbf16>
    %4 = vector.shape_cast %3 : vector<1x2048x512xbf16> to vector<2048x512xbf16>
    %cst = arith.constant dense<0.000000e+00> : vector<2x512xf32>
    %5 = tpu.matmul %2, %4, %cst {dimension_numbers = #tpu.dot_dimension_numbers<[1], [0], [0], [1], [0, 0, 1, 1], [], []>} : vector<2x2048xbf16>, vector<2048x512xbf16>, vector<2x512xf32> -> vector<2x512xf32>
    %c0_5 = arith.constant 0 : index
    %c0_6 = arith.constant 0 : index
    %c0_7 = arith.constant 0 : index
    %6 = vector.load %arg3[%c0_5, %c0_6, %c0_7] : memref<1x1x512xf32, #tpu.memory_space<vmem>>, vector<1x1x512xf32>
    %7 = vector.shape_cast %6 : vector<1x1x512xf32> to vector<1x512xf32>
    %8 = vector.broadcast %7 : vector<1x512xf32> to vector<2x512xf32>
    %9 = arith.addf %5, %8 : vector<2x512xf32>
    %10 = vector.extract_strided_slice %9 {offsets = [0, 256], sizes = [2, 256], strides = [1, 1]} : vector<2x512xf32> to vector<2x256xf32>
    %c0_8 = arith.constant 0 : index
    %c0_9 = arith.constant 0 : index
    %c0_10 = arith.constant 0 : index
    %11 = vector.load %arg7[%c0_8, %c0_9, %c0_10] : memref<1x2x256xf32, #tpu.memory_space<vmem>>, vector<1x2x256xf32>
    %12 = vector.shape_cast %11 : vector<1x2x256xf32> to vector<2x256xf32>
    %13 = vector.shape_cast %10 : vector<2x256xf32> to vector<1x2x256xf32>
    tpu.vector_store %arg7[%c0_8, %c0_9, %c0_10], %13 {strides = array<i32>} : memref<1x2x256xf32, #tpu.memory_space<vmem>>, vector<1x2x256xf32>,
    %14 = vector.extract_strided_slice %9 {offsets = [0, 0], sizes = [2, 256], strides = [1, 1]} : vector<2x512xf32> to vector<2x256xf32>
    %cst_11 = arith.constant 0.000000e+00 : f32
    %15 = vector.broadcast %cst_11 : f32 to vector<2x256xf32>
    %16 = arith.cmpf oge, %14, %15 : vector<2x256xf32>
    %cst_12 = arith.constant 1.000000e-01 : f32
    %17 = vector.broadcast %cst_12 : f32 to vector<2x256xf32>
    %18 = arith.mulf %17, %14 : vector<2x256xf32>
    %19 = arith.select %16, %14, %18 : vector<2x256xi1>, vector<2x256xf32>
    %20 = arith.truncf %19 : vector<2x256xf32> to vector<2x256xbf16>
    %c0_13 = arith.constant 0 : index
    %c0_14 = arith.constant 0 : index
    %c0_15 = arith.constant 0 : index
    %21 = vector.load %arg4[%c0_13, %c0_14, %c0_15] : memref<1x256x128xbf16, #tpu.memory_space<vmem>>, vector<1x256x128xbf16>
    %22 = vector.shape_cast %21 : vector<1x256x128xbf16> to vector<256x128xbf16>
    %cst_16 = arith.constant dense<0.000000e+00> : vector<2x128xf32>
    %23 = tpu.matmul %20, %22, %cst_16 {dimension_numbers = #tpu.dot_dimension_numbers<[1], [0], [0], [1], [0, 0, 1, 1], [], []>} : vector<2x256xbf16>, vector<256x128xbf16>, vector<2x128xf32> -> vector<2x128xf32>
    %c0_17 = arith.constant 0 : index
    %c0_18 = arith.constant 0 : index
    %c0_19 = arith.constant 0 : index
    %24 = vector.load %arg5[%c0_17, %c0_18, %c0_19] : memref<1x1x128xf32, #tpu.memory_space<vmem>>, vector<1x1x128xf32>
    %25 = vector.shape_cast %24 : vector<1x1x128xf32> to vector<1x128xf32>
    %26 = vector.broadcast %25 : vector<1x128xf32> to vector<2x128xf32>
    %27 = arith.addf %23, %26 : vector<2x128xf32>
    %c0_20 = arith.constant 0 : index
    %c0_21 = arith.constant 0 : index
    %c0_22 = arith.constant 0 : index
    %28 = vector.load %arg6[%c0_20, %c0_21, %c0_22] : memref<1x2x128xf32, #tpu.memory_space<vmem>>, vector<1x2x128xf32>
    %29 = vector.shape_cast %28 : vector<1x2x128xf32> to vector<2x128xf32>
    %30 = vector.shape_cast %27 : vector<2x128xf32> to vector<1x2x128xf32>
    tpu.vector_store %arg6[%c0_20, %c0_21, %c0_22], %30 {strides = array<i32>} : memref<1x2x128xf32, #tpu.memory_space<vmem>>, vector<1x2x128xf32>,
    return
  }
  func.func @transform_0(%arg0: i32) -> (i32, i32, i32) {
    %c0_i32 = arith.constant 0 : i32
    %c0_i32_0 = arith.constant 0 : i32
    %c0_i32_1 = arith.constant 0 : i32
    return %arg0, %c0_i32, %c0_i32_0 : i32, i32, i32
  }
  func.func @transform_1(%arg0: i32) -> (i32, i32, i32) {
    %c0_i32 = arith.constant 0 : i32
    %c0_i32_0 = arith.constant 0 : i32
    %c0_i32_1 = arith.constant 0 : i32
    return %arg0, %c0_i32, %c0_i32_0 : i32, i32, i32
  }
  func.func @transform_2(%arg0: i32) -> (i32, i32, i32) {
    %c0_i32 = arith.constant 0 : i32
    %c0_i32_0 = arith.constant 0 : i32
    %c0_i32_1 = arith.constant 0 : i32
    return %arg0, %c0_i32, %c0_i32_0 : i32, i32, i32
  }
  func.func @transform_3(%arg0: i32) -> (i32, i32, i32) {
    %c0_i32 = arith.constant 0 : i32
    %c0_i32_0 = arith.constant 0 : i32
    %c0_i32_1 = arith.constant 0 : i32
    return %arg0, %c0_i32, %c0_i32_0 : i32, i32, i32
  }
  func.func @transform_4(%arg0: i32) -> (i32, i32, i32) {
    %c0_i32 = arith.constant 0 : i32
    %c0_i32_0 = arith.constant 0 : i32
    %c0_i32_1 = arith.constant 0 : i32
    return %arg0, %c0_i32, %c0_i32_0 : i32, i32, i32
  }
  func.func @transform_5(%arg0: i32) -> (i32, i32, i32) {
    %c0_i32 = arith.constant 0 : i32
    %c0_i32_0 = arith.constant 0 : i32
    %c0_i32_1 = arith.constant 0 : i32
    return %arg0, %c0_i32, %c0_i32_0 : i32, i32, i32
  }
  func.func @transform_6(%arg0: i32) -> (i32, i32, i32) {
    %c0_i32 = arith.constant 0 : i32
    %c0_i32_0 = arith.constant 0 : i32
    %c0_i32_1 = arith.constant 0 : i32
    return %arg0, %c0_i32, %c0_i32_0 : i32, i32, i32
  }
}

</mosaic_0001>

<llo_original>
// kernel: tpu_custom_call.1
$region0: #{tpu_custom_call.1}
  #allocation0 [shape = 'u32[]', space=smem, size = 0x4, offset = 0x4, fixed_abs, tag = 'smem constant byte address 0x4 - core index']
  #allocation1 [shape = 'u32[144,128]{1,0:T(1,128)}', space=vmem, size = 0x12000, scoped, tag = 'internal scratch']
  %s0 = inlined_call_operand.hbm [shape: f32[3,2,2048], index: 0, kind: input, shape index: {}]
  %s1 = inlined_call_operand.hbm [shape: bf16[3,2048,512], index: 1, kind: input, shape index: {}]
  %s2 = inlined_call_operand.hbm [shape: f32[3,1,512], index: 2, kind: input, shape index: {}]
  %s3 = inlined_call_operand.hbm [shape: bf16[3,256,128], index: 3, kind: input, shape index: {}]
  %s4 = inlined_call_operand.hbm [shape: f32[3,1,128], index: 4, kind: input, shape index: {}]
  %s5 = inlined_call_operand.hbm [shape: f32[3,2,128], index: 5, kind: output, shape index: {0}]
  %s6 = inlined_call_operand.hbm [shape: f32[3,2,256], index: 6, kind: output, shape index: {1}]
  %7 = xla_tuple %s5, %s6
  %s8 = sld [smem:[#allocation0]]
  $region81: #{tpu_custom_call.1} parent=0
    _
  %s10 = ssub.s32 1, %s8
  %s11 = scalar_select 0, %s10, %s8
  $region1: #{tpu_custom_call.1} parent=0
    #allocation2 [shape = 'u8[32768]{0}', space=vmem, size = 0x8000, scoped, tag = 'input window, operand 0']
    #allocation3 [shape = 's32[2]{0}', space=sflag, size = 0x8, scoped, tag = 'scoped memory for tpu_custom_call.1']
    #allocation4 [shape = 's32[2]{0}', space=sflag, size = 0x8, scoped, tag = 'scoped memory for tpu_custom_call.1']
    #allocation5 [shape = 'u8[4194304]{0}', space=vmem, size = 0x400000, scoped, tag = 'input window, operand 1']
    #allocation6 [shape = 's32[2]{0}', space=sflag, size = 0x8, scoped, tag = 'scoped memory for tpu_custom_call.1']
    #allocation7 [shape = 'u8[4096]{0}', space=vmem, size = 0x1000, scoped, tag = 'input window, operand 2']
    #allocation8 [shape = 'u8[131072]{0}', space=vmem, size = 0x20000, scoped, tag = 'input window, operand 3']
    #allocation9 [shape = 's32[2]{0}', space=sflag, size = 0x8, scoped, tag = 'scoped memory for tpu_custom_call.1']
    #allocation10 [shape = 'u8[1024]{0}', space=vmem, size = 0x400, scoped, tag = 'input window, operand 4']
    #allocation11 [shape = 'u8[2048]{0}', space=vmem, size = 0x800, scoped, tag = 'output window, operand 0']
    #allocation12 [shape = 'u8[4096]{0}', space=vmem, size = 0x1000, scoped, tag = 'output window, operand 1']
    #allocation13 [shape = 's32[2]{0}', space=sflag, size = 0x8, scoped, tag = 'scoped memory for tpu_custom_call.1']
    %12 = vsyncpa [#allocation3], 0
    %s13 = scalar_lea.sflag [#allocation3], 1
    %14 = vsyncpa %s13, 0
    %15 = vsyncpa [#allocation6], 0
    %s16 = scalar_lea.sflag [#allocation6], 1
    %17 = vsyncpa %s16, 0
    %18 = vsyncpa [#allocation9], 0
    %s19 = scalar_lea.sflag [#allocation9], 1
    %20 = vsyncpa %s19, 0
    %21 = vsyncpa [#allocation4], 0
    %s22 = scalar_lea.sflag [#allocation4], 1
    %23 = vsyncpa %s22, 0
    %24 = vsyncpa [#allocation13], 0
    %s25 = scalar_lea.sflag [#allocation13], 1
    %26 = vsyncpa %s25, 0
    loop: start=0, step=1, limit=5
    $region2: #{tpu_custom_call.1} parent=1 // loop_pre_header
      _
    $region3: #{tpu_custom_call.1} parent=1 // loop_header
      %s28 = sphi 0, %s32
      %p29 = scmp.ge.s32.totalorder %s28, 5
      %s38 = sphi 0, %s40
      %s41 = sphi 0, %s38
      %s42 = sphi 0, %s41
      %s58 = sphi 0, %s42
      %s64 = sphi 0, %s66
      %s67 = sphi 0, %s64
      %s68 = sphi 0, %s67
      %s84 = sphi 0, %s68
      %s90 = sphi 0, %s92
      %s93 = sphi 0, %s90
      %s94 = sphi 0, %s93
      %s110 = sphi 0, %s94
      %s116 = sphi 0, %s118
      %s119 = sphi 0, %s116
      %s120 = sphi 0, %s119
      %s136 = sphi 0, %s120
      %s142 = sphi 0, %s144
      %s145 = sphi 0, %s142
      %s146 = sphi 0, %s145
      %s162 = sphi 0, %s146
      %s168 = sphi 0, %s170
      %s171 = sphi 0, %s168
      %s172 = sphi 0, %s171
      %s188 = sphi 0, %s172
      %s194 = sphi 0, %s196
      %s197 = sphi 0, %s194
      %s198 = sphi 0, %s197
      %s214 = sphi 0, %s198
    $region4: #{tpu_custom_call.1} parent=1 // loop_header_branch
      %31 = sbr.rel (%p29) target = $region8
    $region5: #{tpu_custom_call.1} parent=1 // loop_body
      %s33 = ssub.s32 %s28, 1
      %s34 = ssub.s32 %s28, 2
      %s35 = sadd.s32 %s28, 1
      %s36 = ssub.s32 %s28, %s35
      %p37 = scmp.eq.s32.totalorder %s36, 0
      %s39 = sadd.s32 %s38, 1
      %s40 = scalar_select %p37, %s38, %s39
      %p43 = pneg %p37
      %p44 = scmp.eq.s32.totalorder %s28, 2
      %p45 = por %p43, %p44
      %p46 = scmp.ne.s32.totalorder %s38, %s41
      %p47 = scmp.eq.s32.totalorder %s28, 0
      %p48 = por %p46, %p47
      %p49 = scmp.ne.s32.totalorder %s38, %s41
      %p50 = scmp.eq.s32.totalorder %s33, 2
      %p51 = por %p49, %p50
      %p52 = scmp.ne.s32.totalorder %s41, %s42
      %p53 = scmp.eq.s32.totalorder %s33, 0
      %p54 = por %p52, %p53
      %p55 = scmp.ne.s32.totalorder %s41, %s42
      %p56 = scmp.eq.s32.totalorder %s34, 2
      %p57 = por %p55, %p56
      %p59 = scmp.ne.s32.totalorder %s42, %s58
      %p60 = scmp.eq.s32.totalorder %s34, 0
      %p61 = por %p59, %p60
      %s62 = ssub.s32 %s28, %s35
      %p63 = scmp.eq.s32.totalorder %s62, 0
      %s65 = sadd.s32 %s64, 1
      %s66 = scalar_select %p63, %s64, %s65
      %p69 = pneg %p63
      %p70 = scmp.eq.s32.totalorder %s28, 2
      %p71 = por %p69, %p70
      %p72 = scmp.ne.s32.totalorder %s64, %s67
      %p73 = scmp.eq.s32.totalorder %s28, 0
      %p74 = por %p72, %p73
      %p75 = scmp.ne.s32.totalorder %s64, %s67
      %p76 = scmp.eq.s32.totalorder %s33, 2
      %p77 = por %p75, %p76
      %p78 = scmp.ne.s32.totalorder %s67, %s68
      %p79 = scmp.eq.s32.totalorder %s33, 0
      %p80 = por %p78, %p79
      %p81 = scmp.ne.s32.totalorder %s67, %s68
      %p82 = scmp.eq.s32.totalorder %s34, 2
      %p83 = por %p81, %p82
      %p85 = scmp.ne.s32.totalorder %s68, %s84
      %p86 = scmp.eq.s32.totalorder %s34, 0
      %p87 = por %p85, %p86
      %s88 = ssub.s32 %s28, %s35
      %p89 = scmp.eq.s32.totalorder %s88, 0
      %s91 = sadd.s32 %s90, 1
      %s92 = scalar_select %p89, %s90, %s91
      %p95 = pneg %p89
      %p96 = scmp.eq.s32.totalorder %s28, 2
      %p97 = por %p95, %p96
      %p98 = scmp.ne.s32.totalorder %s90, %s93
      %p99 = scmp.eq.s32.totalorder %s28, 0
      %p100 = por %p98, %p99
      %p101 = scmp.ne.s32.totalorder %s90, %s93
      %p102 = scmp.eq.s32.totalorder %s33, 2
      %p103 = por %p101, %p102
      %p104 = scmp.ne.s32.totalorder %s93, %s94
      %p105 = scmp.eq.s32.totalorder %s33, 0
      %p106 = por %p104, %p105
      %p107 = scmp.ne.s32.totalorder %s93, %s94
      %p108 = scmp.eq.s32.totalorder %s34, 2
      %p109 = por %p107, %p108
      %p111 = scmp.ne.s32.totalorder %s94, %s110
      %p112 = scmp.eq.s32.totalorder %s34, 0
      %p113 = por %p111, %p112
      %s114 = ssub.s32 %s28, %s35
      %p115 = scmp.eq.s32.totalorder %s114, 0
      %s117 = sadd.s32 %s116, 1
      %s118 = scalar_select %p115, %s116, %s117
      %p121 = pneg %p115
      %p122 = scmp.eq.s32.totalorder %s28, 2
      %p123 = por %p121, %p122
      %p124 = scmp.ne.s32.totalorder %s116, %s119
      %p125 = scmp.eq.s32.totalorder %s28, 0
      %p126 = por %p124, %p125
      %p127 = scmp.ne.s32.totalorder %s116, %s119
      %p128 = scmp.eq.s32.totalorder %s33, 2
      %p129 = por %p127, %p128
      %p130 = scmp.ne.s32.totalorder %s119, %s120
      %p131 = scmp.eq.s32.totalorder %s33, 0
      %p132 = por %p130, %p131
      %p133 = scmp.ne.s32.totalorder %s119, %s120
      %p134 = scmp.eq.s32.totalorder %s34, 2
      %p135 = por %p133, %p134
      %p137 = scmp.ne.s32.totalorder %s120, %s136
      %p138 = scmp.eq.s32.totalorder %s34, 0
      %p139 = por %p137, %p138
      %s140 = ssub.s32 %s28, %s35
      %p141 = scmp.eq.s32.totalorder %s140, 0
      %s143 = sadd.s32 %s142, 1
      %s144 = scalar_select %p141, %s142, %s143
      %p147 = pneg %p141
      %p148 = scmp.eq.s32.totalorder %s28, 2
      %p149 = por %p147, %p148
      %p150 = scmp.ne.s32.totalorder %s142, %s145
      %p151 = scmp.eq.s32.totalorder %s28, 0
      %p152 = por %p150, %p151
      %p153 = scmp.ne.s32.totalorder %s142, %s145
      %p154 = scmp.eq.s32.totalorder %s33, 2
      %p155 = por %p153, %p154
      %p156 = scmp.ne.s32.totalorder %s145, %s146
      %p157 = scmp.eq.s32.totalorder %s33, 0
      %p158 = por %p156, %p157
      %p159 = scmp.ne.s32.totalorder %s145, %s146
      %p160 = scmp.eq.s32.totalorder %s34, 2
      %p161 = por %p159, %p160
      %p163 = scmp.ne.s32.totalorder %s146, %s162
      %p164 = scmp.eq.s32.totalorder %s34, 0
      %p165 = por %p163, %p164
      %s166 = ssub.s32 %s28, %s35
      %p167 = scmp.eq.s32.totalorder %s166, 0
      %s169 = sadd.s32 %s168, 1
      %s170 = scalar_select %p167, %s168, %s169
      %p173 = pneg %p167
      %p174 = scmp.eq.s32.totalorder %s28, 2
      %p175 = por %p173, %p174
      %p176 = scmp.ne.s32.totalorder %s168, %s171
      %p177 = scmp.eq.s32.totalorder %s28, 0
      %p178 = por %p176, %p177
      %p179 = scmp.ne.s32.totalorder %s168, %s171
      %p180 = scmp.eq.s32.totalorder %s33, 2
      %p181 = por %p179, %p180
      %p182 = scmp.ne.s32.totalorder %s171, %s172
      %p183 = scmp.eq.s32.totalorder %s33, 0
      %p184 = por %p182, %p183
      %p185 = scmp.ne.s32.totalorder %s171, %s172
      %p186 = scmp.eq.s32.totalorder %s34, 2
      %p187 = por %p185, %p186
      %p189 = scmp.ne.s32.totalorder %s172, %s188
      %p190 = scmp.eq.s32.totalorder %s34, 0
      %p191 = por %p189, %p190
      %s192 = ssub.s32 %s28, %s35
      %p193 = scmp.eq.s32.totalorder %s192, 0
      %s195 = sadd.s32 %s194, 1
      %s196 = scalar_select %p193, %s194, %s195
      %p199 = pneg %p193
      %p200 = scmp.eq.s32.totalorder %s28, 2
      %p201 = por %p199, %p200
      %p202 = scmp.ne.s32.totalorder %s194, %s197
      %p203 = scmp.eq.s32.totalorder %s28, 0
      %p204 = por %p202, %p203
      %p205 = scmp.ne.s32.totalorder %s194, %s197
      %p206 = scmp.eq.s32.totalorder %s33, 2
      %p207 = por %p205, %p206
      %p208 = scmp.ne.s32.totalorder %s197, %s198
      %p209 = scmp.eq.s32.totalorder %s33, 0
      %p210 = por %p208, %p209
      %p211 = scmp.ne.s32.totalorder %s197, %s198
      %p212 = scmp.eq.s32.totalorder %s34, 2
      %p213 = por %p211, %p212
      %p215 = scmp.ne.s32.totalorder %s198, %s214
      %p216 = scmp.eq.s32.totalorder %s34, 0
      %p217 = por %p215, %p216
      %p218 = scmp.le.s32.totalorder 1, %s28
      %p219 = scmp.lt.s32.totalorder %s28, 4
      %p220 = pnand %p218, %p219
      %p221 = pneg %p220
      // Predicated region
      $region9: #{tpu_custom_call.1} parent=5 // pred_check
        _
      $region10: #{tpu_custom_call.1} parent=5 // pred_check_branch
        %223 = sbr.rel (%p220) target = $region12
      $region11: #{tpu_custom_call.1} parent=5 // pred_region
        %s224 = ssub.s32 %s28, 1
      $region12: #{tpu_custom_call.1} parent=5 // pred_fallthru
        _
      %p225 = scmp.lt.s32.totalorder %s28, 3
      // Predicated region
      $region13: #{tpu_custom_call.1} parent=5 // pred_check
        %p226 = pneg %p225
      $region14: #{tpu_custom_call.1} parent=5 // pred_check_branch
        %228 = sbr.rel (%p226) target = $region16
      $region15: #{tpu_custom_call.1} parent=5 // pred_region
        // Predicated region
        $region17: #{tpu_custom_call.1} parent=15 // pred_check
          %p229 = pneg %p48
        $region18: #{tpu_custom_call.1} parent=15 // pred_check_branch
          %231 = sbr.rel (%p229) target = $region20
        $region19: #{tpu_custom_call.1} parent=15 // pred_region
          %s232 = sand.u32 %s38, 1
          %s233 = scalar_lea.sflag [#allocation3], %s232
          %s234 = sand.u32 %s38, 1
          %s235 = smul.addr %s234, 32
          %s236 = scalar_lea.vmem [#allocation2], %s235
          %s238 = ssub.s32 512, 512
          %239 = vsyncadd %s233, %s238
          %s240 = smul.addr %s28, 16
          %s241 = smul.addr %s240, 32
          %s242 = scalar_lea.hbm %s0, %s241
          %s244 = sshll.u32 %s236, 4
          %s245 = int_to_ptr.vmem [resolvable:$true] %s244
          %247 = dma.hbm_to_vmem [thread:$0]  %s242, 512, %s245, %s233
        $region20: #{tpu_custom_call.1} parent=15 // pred_fallthru
          _
        // Predicated region
        $region21: #{tpu_custom_call.1} parent=15 // pred_check
          %p248 = pneg %p74
        $region22: #{tpu_custom_call.1} parent=15 // pred_check_branch
          %250 = sbr.rel (%p248) target = $region24
        $region23: #{tpu_custom_call.1} parent=15 // pred_region
          %s251 = sand.u32 %s28, 1
          %s252 = scalar_lea.sflag [#allocation6], %s251
          %s253 = sand.u32 %s64, 1
          %s254 = smul.addr %s253, 4096
          %s255 = scalar_lea.vmem [#allocation5], %s254
          %s257 = ssub.s32 65536, 65536
          %258 = vsyncadd %s252, %s257
          %s259 = smul.addr %s28, 1024
          %s260 = smul.addr %s259, 64
          %s261 = scalar_lea.hbm %s1, %s260
          %s262 = sshll.u32 %s255, 4
          %s263 = int_to_ptr.vmem [resolvable:$true] %s262
          %268 = dma.hbm_to_vmem [thread:$0]  %s261, 65536, %s263, %s252, 256, 256, 16
        $region24: #{tpu_custom_call.1} parent=15 // pred_fallthru
          _
        // Predicated region
        $region25: #{tpu_custom_call.1} parent=15 // pred_check
          %p269 = pneg %p100
        $region26: #{tpu_custom_call.1} parent=15 // pred_check_branch
          %271 = sbr.rel (%p269) target = $region28
        $region27: #{tpu_custom_call.1} parent=15 // pred_region
          %s272 = sand.u32 %s28, 1
          %s273 = scalar_lea.sflag [#allocation6], %s272
          %s274 = sand.u32 %s90, 1
          %s275 = smul.addr %s274, 4
          %s276 = scalar_lea.vmem [#allocation7], %s275
          %s278 = ssub.s32 64, 64
          %279 = vsyncadd %s273, %s278
          %s280 = smul.addr %s28, 4
          %s281 = smul.addr %s280, 16
          %s282 = scalar_lea.hbm %s2, %s281
          %s284 = sshll.u32 %s276, 4
          %s285 = int_to_ptr.vmem [resolvable:$true] %s284
          %287 = dma.hbm_to_vmem [thread:$0]  %s282, 64, %s285, %s273
        $region28: #{tpu_custom_call.1} parent=15 // pred_fallthru
          _
        // Predicated region
        $region29: #{tpu_custom_call.1} parent=15 // pred_check
          %p288 = pneg %p126
        $region30: #{tpu_custom_call.1} parent=15 // pred_check_branch
          %290 = sbr.rel (%p288) target = $region32
        $region31: #{tpu_custom_call.1} parent=15 // pred_region
          %s291 = sand.u32 %s28, 1
          %s292 = scalar_lea.sflag [#allocation9], %s291
          %s293 = sand.u32 %s116, 1
          %s294 = smul.addr %s293, 128
          %s295 = scalar_lea.vmem [#allocation8], %s294
          %s297 = ssub.s32 2048, 2048
          %298 = vsyncadd %s292, %s297
          %s299 = smul.addr %s28, 32
          %s300 = smul.addr %s299, 64
          %s301 = scalar_lea.hbm %s3, %s300
          %s302 = sshll.u32 %s295, 4
          %s303 = int_to_ptr.vmem [resolvable:$true] %s302
          %308 = dma.hbm_to_vmem [thread:$0]  %s301, 2048, %s303, %s292, 64, 64, 4
        $region32: #{tpu_custom_call.1} parent=15 // pred_fallthru
          _
        // Predicated region
        $region33: #{tpu_custom_call.1} parent=15 // pred_check
          %p309 = pneg %p152
        $region34: #{tpu_custom_call.1} parent=15 // pred_check_branch
          %311 = sbr.rel (%p309) target = $region36
        $region35: #{tpu_custom_call.1} parent=15 // pred_region
          %s312 = sand.u32 %s28, 1
          %s313 = scalar_lea.sflag [#allocation9], %s312
          %s314 = sand.u32 %s142, 1
          %s315 = scalar_lea.vmem [#allocation10], %s314
          %s317 = ssub.s32 16, 16
          %318 = vsyncadd %s313, %s317
          %s319 = smul.addr %s28, 16
          %s320 = scalar_lea.hbm %s4, %s319
          %s322 = sshll.u32 %s315, 4
          %s323 = int_to_ptr.vmem [resolvable:$true] %s322
          %325 = dma.hbm_to_vmem [thread:$0]  %s320, 16, %s323, %s313
        $region36: #{tpu_custom_call.1} parent=15 // pred_fallthru
          _
      $region16: #{tpu_custom_call.1} parent=5 // pred_fallthru
        _
      %p326 = scmp.le.s32.totalorder 1, %s28
      %p327 = scmp.lt.s32.totalorder %s28, 4
      %p328 = pnand %p326, %p327
      %p329 = pneg %p328
      // Predicated region
      $region37: #{tpu_custom_call.1} parent=5 // pred_check
        _
      $region38: #{tpu_custom_call.1} parent=5 // pred_check_branch
        %331 = sbr.rel (%p328) target = $region40
      $region39: #{tpu_custom_call.1} parent=5 // pred_region
        %s332 = ssub.s32 %s28, 1
        %s333 = sand.u32 %s41, 1
        %s334 = scalar_lea.sflag [#allocation3], %s333
        %s335 = sand.u32 %s41, 1
        %s336 = smul.addr %s335, 32
        %s337 = scalar_lea.vmem [#allocation2], %s336
        // Predicated region
        $region41: #{tpu_custom_call.1} parent=39 // pred_check
          %p338 = pneg %p54
        $region42: #{tpu_custom_call.1} parent=39 // pred_check_branch
          %340 = sbr.rel (%p338) target = $region44
        $region43: #{tpu_custom_call.1} parent=39 // pred_region
          %341 = dma.done %s334, 512
        $region44: #{tpu_custom_call.1} parent=39 // pred_fallthru
          _
        %s342 = sand.u32 %s33, 1
        %s343 = scalar_lea.sflag [#allocation6], %s342
        %s344 = sand.u32 %s67, 1
        %s345 = smul.addr %s344, 4096
        %s346 = scalar_lea.vmem [#allocation5], %s345
        // Predicated region
        $region45: #{tpu_custom_call.1} parent=39 // pred_check
          %p347 = pneg %p80
        $region46: #{tpu_custom_call.1} parent=39 // pred_check_branch
          %349 = sbr.rel (%p347) target = $region48
        $region47: #{tpu_custom_call.1} parent=39 // pred_region
          %350 = dma.done %s343, 65536
        $region48: #{tpu_custom_call.1} parent=39 // pred_fallthru
          _
        %s351 = sand.u32 %s33, 1
        %s352 = scalar_lea.sflag [#allocation6], %s351
        %s353 = sand.u32 %s93, 1
        %s354 = smul.addr %s353, 4
        %s355 = scalar_lea.vmem [#allocation7], %s354
        // Predicated region
        $region49: #{tpu_custom_call.1} parent=39 // pred_check
          %p356 = pneg %p106
        $region50: #{tpu_custom_call.1} parent=39 // pred_check_branch
          %358 = sbr.rel (%p356) target = $region52
        $region51: #{tpu_custom_call.1} parent=39 // pred_region
          %359 = dma.done %s352, 64
        $region52: #{tpu_custom_call.1} parent=39 // pred_fallthru
          _
        %s360 = sand.u32 %s33, 1
        %s361 = scalar_lea.sflag [#allocation9], %s360
        %s362 = sand.u32 %s119, 1
        %s363 = smul.addr %s362, 128
        %s364 = scalar_lea.vmem [#allocation8], %s363
        // Predicated region
        $region53: #{tpu_custom_call.1} parent=39 // pred_check
          %p365 = pneg %p132
        $region54: #{tpu_custom_call.1} parent=39 // pred_check_branch
          %367 = sbr.rel (%p365) target = $region56
        $region55: #{tpu_custom_call.1} parent=39 // pred_region
          %368 = dma.done %s361, 2048
        $region56: #{tpu_custom_call.1} parent=39 // pred_fallthru
          _
        %s369 = sand.u32 %s33, 1
        %s370 = scalar_lea.sflag [#allocation9], %s369
        %s371 = sand.u32 %s145, 1
        %s372 = scalar_lea.vmem [#allocation10], %s371
        // Predicated region
        $region57: #{tpu_custom_call.1} parent=39 // pred_check
          %p373 = pneg %p158
        $region58: #{tpu_custom_call.1} parent=39 // pred_check_branch
          %375 = sbr.rel (%p373) target = $region60
        $region59: #{tpu_custom_call.1} parent=39 // pred_region
          %376 = dma.done %s370, 16
        $region60: #{tpu_custom_call.1} parent=39 // pred_fallthru
          _
        %s377 = sand.u32 %s41, 1
        %s378 = scalar_lea.sflag [#allocation3], %s377
        %s379 = sand.u32 %s41, 1
        %s380 = smul.addr %s379, 32
        %s381 = scalar_lea.vmem [#allocation2], %s380
        %p382 = pneg %p54
        %p383 = pneg %p51
        %s384 = sand.u32 %s33, 1
        %s385 = scalar_lea.sflag [#allocation6], %s384
        %s386 = sand.u32 %s67, 1
        %s387 = smul.addr %s386, 4096
        %s388 = scalar_lea.vmem [#allocation5], %s387
        %p389 = pneg %p80
        %p390 = pneg %p77
        %s391 = sand.u32 %s33, 1
        %s392 = scalar_lea.sflag [#allocation6], %s391
        %s393 = sand.u32 %s93, 1
        %s394 = smul.addr %s393, 4
        %s395 = scalar_lea.vmem [#allocation7], %s394
        %p396 = pneg %p106
        %p397 = pneg %p103
        %s398 = sand.u32 %s33, 1
        %s399 = scalar_lea.sflag [#allocation9], %s398
        %s400 = sand.u32 %s119, 1
        %s401 = smul.addr %s400, 128
        %s402 = scalar_lea.vmem [#allocation8], %s401
        %p403 = pneg %p132
        %p404 = pneg %p129
        %s405 = sand.u32 %s33, 1
        %s406 = scalar_lea.sflag [#allocation9], %s405
        %s407 = sand.u32 %s145, 1
        %s408 = scalar_lea.vmem [#allocation10], %s407
        %p409 = pneg %p158
        %p410 = pneg %p155
        %p411 = pneg %p184
        %p412 = pneg %p181
        %s413 = sand.u32 %s171, 1
        %s414 = scalar_lea.sflag [#allocation4], %s413
        %s415 = sand.u32 %s171, 1
        %s416 = smul.addr %s415, 2
        %s417 = scalar_lea.vmem [#allocation11], %s416
        %p418 = pneg %p210
        %p419 = pneg %p207
        %s420 = sand.u32 %s197, 1
        %s421 = scalar_lea.sflag [#allocation13], %s420
        %s422 = sand.u32 %s197, 1
        %s423 = smul.addr %s422, 4
        %s424 = scalar_lea.vmem [#allocation12], %s423
        %v426 = vld [vmem:[%s337] sm:$0xff]
        %v427 = vld [vmem:[%s337 + $0x8] sm:$0xff]
        %v428 = vld [vmem:[%s337 + $0x10] sm:$0xff]
        %v429 = vld [vmem:[%s337 + $0x18] sm:$0xff]
        %v434 = vcombine.high %v426, %v426
        %v436 = vunpack.c.l.s4 1983009808
        %v437 = vunpack.c.0.s8 %v436
        %v438 = vlaneseq
        %v439 = vshrl.u32 %v438, 7
        %v440 = vsub.s32 %v437, %v439
        %v441 = vrot.slane %v426, %v440
        %v443 = vunpack.c.l.s4 1983009808
        %v444 = vunpack.c.0.s8 %v443
        %v445 = vlaneseq
        %v446 = vshrl.u32 %v445, 7
        %v447 = vsub.s32 %v444, %v446
        %v448 = vrot.slane %v434, %v447
        %v449 = vcombine.high %v441, %v441
        %v450 = vcombine.high %v448, %v448
        %v451 = vcombine.high %v427, %v427
        %v453 = vunpack.c.l.s4 1983009808
        %v454 = vunpack.c.0.s8 %v453
        %v455 = vlaneseq
        %v456 = vshrl.u32 %v455, 7
        %v457 = vsub.s32 %v454, %v456
        %v458 = vrot.slane %v427, %v457
        %v460 = vunpack.c.l.s4 1983009808
        %v461 = vunpack.c.0.s8 %v460
        %v462 = vlaneseq
        %v463 = vshrl.u32 %v462, 7
        %v464 = vsub.s32 %v461, %v463
        %v465 = vrot.slane %v451, %v464
        %v466 = vcombine.high %v458, %v458
        %v467 = vcombine.high %v465, %v465
        %v468 = vcombine.high %v428, %v428
        %v470 = vunpack.c.l.s4 1983009808
        %v471 = vunpack.c.0.s8 %v470
        %v472 = vlaneseq
        %v473 = vshrl.u32 %v472, 7
        %v474 = vsub.s32 %v471, %v473
        %v475 = vrot.slane %v428, %v474
        %v477 = vunpack.c.l.s4 1983009808
        %v478 = vunpack.c.0.s8 %v477
        %v479 = vlaneseq
        %v480 = vshrl.u32 %v479, 7
        %v481 = vsub.s32 %v478, %v480
        %v482 = vrot.slane %v468, %v481
        %v483 = vcombine.high %v475, %v475
        %v484 = vcombine.high %v482, %v482
        %v485 = vcombine.high %v429, %v429
        %v487 = vunpack.c.l.s4 1983009808
        %v488 = vunpack.c.0.s8 %v487
        %v489 = vlaneseq
        %v490 = vshrl.u32 %v489, 7
        %v491 = vsub.s32 %v488, %v490
        %v492 = vrot.slane %v429, %v491
        %v494 = vunpack.c.l.s4 1983009808
        %v495 = vunpack.c.0.s8 %v494
        %v496 = vlaneseq
        %v497 = vshrl.u32 %v496, 7
        %v498 = vsub.s32 %v495, %v497
        %v499 = vrot.slane %v485, %v498
        %v500 = vcombine.high %v492, %v492
        %v501 = vcombine.high %v499, %v499
        %v518 = vpack.c.bf16 %v441, %v441
        %v519 = vpack.c.bf16 %v449, %v449
        %v520 = vpack.c.bf16 %v448, %v448
        %v521 = vpack.c.bf16 %v450, %v450
        %v522 = vpack.c.bf16 %v458, %v458
        %v523 = vpack.c.bf16 %v466, %v466
        %v524 = vpack.c.bf16 %v465, %v465
        %v525 = vpack.c.bf16 %v467, %v467
        %v526 = vpack.c.bf16 %v475, %v475
        %v527 = vpack.c.bf16 %v483, %v483
        %v528 = vpack.c.bf16 %v482, %v482
        %v529 = vpack.c.bf16 %v484, %v484
        %v530 = vpack.c.bf16 %v492, %v492
        %v531 = vpack.c.bf16 %v500, %v500
        %v532 = vpack.c.bf16 %v499, %v499
        %v533 = vpack.c.bf16 %v501, %v501
        %v534 = vld [vmem:[%s346] sm:$0xff]
        %v535 = vld [vmem:[%s346 + $0x8] sm:$0xff]
        %v536 = vld [vmem:[%s346 + $0x10] sm:$0xff]
        %v537 = vld [vmem:[%s346 + $0x18] sm:$0xff]
        %v538 = vld [vmem:[%s346 + $0x20] sm:$0xff]
        %v539 = vld [vmem:[%s346 + $0x28] sm:$0xff]
        %v540 = vld [vmem:[%s346 + $0x30] sm:$0xff]
        %v541 = vld [vmem:[%s346 + $0x38] sm:$0xff]
        %v542 = vld [vmem:[%s346 + $0x40] sm:$0xff]
        %v543 = vld [vmem:[%s346 + $0x48] sm:$0xff]
        %v544 = vld [vmem:[%s346 + $0x50] sm:$0xff]
        %v545 = vld [vmem:[%s346 + $0x58] sm:$0xff]
        %v546 = vld [vmem:[%s346 + $0x60] sm:$0xff]
        %v547 = vld [vmem:[%s346 + $0x68] sm:$0xff]
        %v548 = vld [vmem:[%s346 + $0x70] sm:$0xff]
        %v549 = vld [vmem:[%s346 + $0x78] sm:$0xff]
        %v550 = vld [vmem:[%s346 + $0x80] sm:$0xff]
        %v551 = vld [vmem:[%s346 + $0x88] sm:$0xff]
        %v552 = vld [vmem:[%s346 + $0x90] sm:$0xff]
        %v553 = vld [vmem:[%s346 + $0x98] sm:$0xff]
        %v554 = vld [vmem:[%s346 + $0xa0] sm:$0xff]
        %v555 = vld [vmem:[%s346 + $0xa8] sm:$0xff]
        %v556 = vld [vmem:[%s346 + $0xb0] sm:$0xff]
        %v557 = vld [vmem:[%s346 + $0xb8] sm:$0xff]
        %v558 = vld [vmem:[%s346 + $0xc0] sm:$0xff]
        %v559 = vld [vmem:[%s346 + $0xc8] sm:$0xff]
        %v560 = vld [vmem:[%s346 + $0xd0] sm:$0xff]
        %v561 = vld [vmem:[%s346 + $0xd8] sm:$0xff]
        %v562 = vld [vmem:[%s346 + $0xe0] sm:$0xff]
        %v563 = vld [vmem:[%s346 + $0xe8] sm:$0xff]
        %v564 = vld [vmem:[%s346 + $0xf0] sm:$0xff]
        %v565 = vld [vmem:[%s346 + $0xf8] sm:$0xff]
        %v566 = vld [vmem:[%s346 + $0x100] sm:$0xff]
        %v567 = vld [vmem:[%s346 + $0x108] sm:$0xff]
        %v568 = vld [vmem:[%s346 + $0x110] sm:$0xff]
        %v569 = vld [vmem:[%s346 + $0x118] sm:$0xff]
        %v570 = vld [vmem:[%s346 + $0x120] sm:$0xff]
        %v571 = vld [vmem:[%s346 + $0x128] sm:$0xff]
        %v572 = vld [vmem:[%s346 + $0x130] sm:$0xff]
        %v573 = vld [vmem:[%s346 + $0x138] sm:$0xff]
        %v574 = vld [vmem:[%s346 + $0x140] sm:$0xff]
        %v575 = vld [vmem:[%s346 + $0x148] sm:$0xff]
        %v576 = vld [vmem:[%s346 + $0x150] sm:$0xff]
        %v577 = vld [vmem:[%s346 + $0x158] sm:$0xff]
        %v578 = vld [vmem:[%s346 + $0x160] sm:$0xff]
        %v579 = vld [vmem:[%s346 + $0x168] sm:$0xff]
        %v580 = vld [vmem:[%s346 + $0x170] sm:$0xff]
        %v581 = vld [vmem:[%s346 + $0x178] sm:$0xff]
        %v582 = vld [vmem:[%s346 + $0x180] sm:$0xff]
        %v583 = vld [vmem:[%s346 + $0x188] sm:$0xff]
        %v584 = vld [vmem:[%s346 + $0x190] sm:$0xff]
        %v585 = vld [vmem:[%s346 + $0x198] sm:$0xff]
        %v586 = vld [vmem:[%s346 + $0x1a0] sm:$0xff]
        %v587 = vld [vmem:[%s346 + $0x1a8] sm:$0xff]
        %v588 = vld [vmem:[%s346 + $0x1b0] sm:$0xff]
        %v589 = vld [vmem:[%s346 + $0x1b8] sm:$0xff]
        %v590 = vld [vmem:[%s346 + $0x1c0] sm:$0xff]
        %v591 = vld [vmem:[%s346 + $0x1c8] sm:$0xff]
        %v592 = vld [vmem:[%s346 + $0x1d0] sm:$0xff]
        %v593 = vld [vmem:[%s346 + $0x1d8] sm:$0xff]
        %v594 = vld [vmem:[%s346 + $0x1e0] sm:$0xff]
        %v595 = vld [vmem:[%s346 + $0x1e8] sm:$0xff]
        %v596 = vld [vmem:[%s346 + $0x1f0] sm:$0xff]
        %v597 = vld [vmem:[%s346 + $0x1f8] sm:$0xff]
        %v598 = vld [vmem:[%s346 + $0x200] sm:$0xff]
        %v599 = vld [vmem:[%s346 + $0x208] sm:$0xff]
        %v600 = vld [vmem:[%s346 + $0x210] sm:$0xff]
        %v601 = vld [vmem:[%s346 + $0x218] sm:$0xff]
        %v602 = vld [vmem:[%s346 + $0x220] sm:$0xff]
        %v603 = vld [vmem:[%s346 + $0x228] sm:$0xff]
        %v604 = vld [vmem:[%s346 + $0x230] sm:$0xff]
        %v605 = vld [vmem:[%s346 + $0x238] sm:$0xff]
        %v606 = vld [vmem:[%s346 + $0x240] sm:$0xff]
        %v607 = vld [vmem:[%s346 + $0x248] sm:$0xff]
        %v608 = vld [vmem:[%s346 + $0x250] sm:$0xff]
        %v609 = vld [vmem:[%s346 + $0x258] sm:$0xff]
        %v610 = vld [vmem:[%s346 + $0x260] sm:$0xff]
        %v611 = vld [vmem:[%s346 + $0x268] sm:$0xff]
        %v612 = vld [vmem:[%s346 + $0x270] sm:$0xff]
        %v613 = vld [vmem:[%s346 + $0x278] sm:$0xff]
        %v614 = vld [vmem:[%s346 + $0x280] sm:$0xff]
        %v615 = vld [vmem:[%s346 + $0x288] sm:$0xff]
        %v616 = vld [vmem:[%s346 + $0x290] sm:$0xff]
        %v617 = vld [vmem:[%s346 + $0x298] sm:$0xff]
        %v618 = vld [vmem:[%s346 + $0x2a0] sm:$0xff]
        %v619 = vld [vmem:[%s346 + $0x2a8] sm:$0xff]
        %v620 = vld [vmem:[%s346 + $0x2b0] sm:$0xff]
        %v621 = vld [vmem:[%s346 + $0x2b8] sm:$0xff]
        %v622 = vld [vmem:[%s346 + $0x2c0] sm:$0xff]
        %v623 = vld [vmem:[%s346 + $0x2c8] sm:$0xff]
        %v624 = vld [vmem:[%s346 + $0x2d0] sm:$0xff]
        %v625 = vld [vmem:[%s346 + $0x2d8] sm:$0xff]
        %v626 = vld [vmem:[%s346 + $0x2e0] sm:$0xff]
        %v627 = vld [vmem:[%s346 + $0x2e8] sm:$0xff]
        %v628 = vld [vmem:[%s346 + $0x2f0] sm:$0xff]
        %v629 = vld [vmem:[%s346 + $0x2f8] sm:$0xff]
        %v630 = vld [vmem:[%s346 + $0x300] sm:$0xff]
        %v631 = vld [vmem:[%s346 + $0x308] sm:$0xff]
        %v632 = vld [vmem:[%s346 + $0x310] sm:$0xff]
        %v633 = vld [vmem:[%s346 + $0x318] sm:$0xff]
        %v634 = vld [vmem:[%s346 + $0x320] sm:$0xff]
        %v635 = vld [vmem:[%s346 + $0x328] sm:$0xff]
        %v636 = vld [vmem:[%s346 + $0x330] sm:$0xff]
        %v637 = vld [vmem:[%s346 + $0x338] sm:$0xff]
        %v638 = vld [vmem:[%s346 + $0x340] sm:$0xff]
        %v639 = vld [vmem:[%s346 + $0x348] sm:$0xff]
        %v640 = vld [vmem:[%s346 + $0x350] sm:$0xff]
        %v641 = vld [vmem:[%s346 + $0x358] sm:$0xff]
        %v642 = vld [vmem:[%s346 + $0x360] sm:$0xff]
        %v643 = vld [vmem:[%s346 + $0x368] sm:$0xff]
        %v644 = vld [vmem:[%s346 + $0x370] sm:$0xff]
        %v645 = vld [vmem:[%s346 + $0x378] sm:$0xff]
        %v646 = vld [vmem:[%s346 + $0x380] sm:$0xff]
        %v647 = vld [vmem:[%s346 + $0x388] sm:$0xff]
        %v648 = vld [vmem:[%s346 + $0x390] sm:$0xff]
        %v649 = vld [vmem:[%s346 + $0x398] sm:$0xff]
        %v650 = vld [vmem:[%s346 + $0x3a0] sm:$0xff]
        %v651 = vld [vmem:[%s346 + $0x3a8] sm:$0xff]
        %v652 = vld [vmem:[%s346 + $0x3b0] sm:$0xff]
        %v653 = vld [vmem:[%s346 + $0x3b8] sm:$0xff]
        %v654 = vld [vmem:[%s346 + $0x3c0] sm:$0xff]
        %v655 = vld [vmem:[%s346 + $0x3c8] sm:$0xff]
        %v656 = vld [vmem:[%s346 + $0x3d0] sm:$0xff]
        %v657 = vld [vmem:[%s346 + $0x3d8] sm:$0xff]
        %v658 = vld [vmem:[%s346 + $0x3e0] sm:$0xff]
        %v659 = vld [vmem:[%s346 + $0x3e8] sm:$0xff]
        %v660 = vld [vmem:[%s346 + $0x3f0] sm:$0xff]
        %v661 = vld [vmem:[%s346 + $0x3f8] sm:$0xff]
        %v662 = vld [vmem:[%s346 + $0x400] sm:$0xff]
        %v663 = vld [vmem:[%s346 + $0x408] sm:$0xff]
        %v664 = vld [vmem:[%s346 + $0x410] sm:$0xff]
        %v665 = vld [vmem:[%s346 + $0x418] sm:$0xff]
        %v666 = vld [vmem:[%s346 + $0x420] sm:$0xff]
        %v667 = vld [vmem:[%s346 + $0x428] sm:$0xff]
        %v668 = vld [vmem:[%s346 + $0x430] sm:$0xff]
        %v669 = vld [vmem:[%s346 + $0x438] sm:$0xff]
        %v670 = vld [vmem:[%s346 + $0x440] sm:$0xff]
        %v671 = vld [vmem:[%s346 + $0x448] sm:$0xff]
        %v672 = vld [vmem:[%s346 + $0x450] sm:$0xff]
        %v673 = vld [vmem:[%s346 + $0x458] sm:$0xff]
        %v674 = vld [vmem:[%s346 + $0x460] sm:$0xff]
        %v675 = vld [vmem:[%s346 + $0x468] sm:$0xff]
        %v676 = vld [vmem:[%s346 + $0x470] sm:$0xff]
        %v677 = vld [vmem:[%s346 + $0x478] sm:$0xff]
        %v678 = vld [vmem:[%s346 + $0x480] sm:$0xff]
        %v679 = vld [vmem:[%s346 + $0x488] sm:$0xff]
        %v680 = vld [vmem:[%s346 + $0x490] sm:$0xff]
        %v681 = vld [vmem:[%s346 + $0x498] sm:$0xff]
        %v682 = vld [vmem:[%s346 + $0x4a0] sm:$0xff]
        %v683 = vld [vmem:[%s346 + $0x4a8] sm:$0xff]
        %v684 = vld [vmem:[%s346 + $0x4b0] sm:$0xff]
        %v685 = vld [vmem:[%s346 + $0x4b8] sm:$0xff]
        %v686 = vld [vmem:[%s346 + $0x4c0] sm:$0xff]
        %v687 = vld [vmem:[%s346 + $0x4c8] sm:$0xff]
        %v688 = vld [vmem:[%s346 + $0x4d0] sm:$0xff]
        %v689 = vld [vmem:[%s346 + $0x4d8] sm:$0xff]
        %v690 = vld [vmem:[%s346 + $0x4e0] sm:$0xff]
        %v691 = vld [vmem:[%s346 + $0x4e8] sm:$0xff]
        %v692 = vld [vmem:[%s346 + $0x4f0] sm:$0xff]
        %v693 = vld [vmem:[%s346 + $0x4f8] sm:$0xff]
        %v694 = vld [vmem:[%s346 + $0x500] sm:$0xff]
        %v695 = vld [vmem:[%s346 + $0x508] sm:$0xff]
        %v696 = vld [vmem:[%s346 + $0x510] sm:$0xff]
        %v697 = vld [vmem:[%s346 + $0x518] sm:$0xff]
        %v698 = vld [vmem:[%s346 + $0x520] sm:$0xff]
        %v699 = vld [vmem:[%s346 + $0x528] sm:$0xff]
        %v700 = vld [vmem:[%s346 + $0x530] sm:$0xff]
        %v701 = vld [vmem:[%s346 + $0x538] sm:$0xff]
        %v702 = vld [vmem:[%s346 + $0x540] sm:$0xff]
        %v703 = vld [vmem:[%s346 + $0x548] sm:$0xff]
        %v704 = vld [vmem:[%s346 + $0x550] sm:$0xff]
        %v705 = vld [vmem:[%s346 + $0x558] sm:$0xff]
        %v706 = vld [vmem:[%s346 + $0x560] sm:$0xff]
        %v707 = vld [vmem:[%s346 + $0x568] sm:$0xff]
        %v708 = vld [vmem:[%s346 + $0x570] sm:$0xff]
        %v709 = vld [vmem:[%s346 + $0x578] sm:$0xff]
        %v710 = vld [vmem:[%s346 + $0x580] sm:$0xff]
        %v711 = vld [vmem:[%s346 + $0x588] sm:$0xff]
        %v712 = vld [vmem:[%s346 + $0x590] sm:$0xff]
        %v713 = vld [vmem:[%s346 + $0x598] sm:$0xff]
        %v714 = vld [vmem:[%s346 + $0x5a0] sm:$0xff]
        %v715 = vld [vmem:[%s346 + $0x5a8] sm:$0xff]
        %v716 = vld [vmem:[%s346 + $0x5b0] sm:$0xff]
        %v717 = vld [vmem:[%s346 + $0x5b8] sm:$0xff]
        %v718 = vld [vmem:[%s346 + $0x5c0] sm:$0xff]
        %v719 = vld [vmem:[%s346 + $0x5c8] sm:$0xff]
        %v720 = vld [vmem:[%s346 + $0x5d0] sm:$0xff]
        %v721 = vld [vmem:[%s346 + $0x5d8] sm:$0xff]
        %v722 = vld [vmem:[%s346 + $0x5e0] sm:$0xff]
        %v723 = vld [vmem:[%s346 + $0x5e8] sm:$0xff]
        %v724 = vld [vmem:[%s346 + $0x5f0] sm:$0xff]
        %v725 = vld [vmem:[%s346 + $0x5f8] sm:$0xff]
        %v726 = vld [vmem:[%s346 + $0x600] sm:$0xff]
        %v727 = vld [vmem:[%s346 + $0x608] sm:$0xff]
        %v728 = vld [vmem:[%s346 + $0x610] sm:$0xff]
        %v729 = vld [vmem:[%s346 + $0x618] sm:$0xff]
        %v730 = vld [vmem:[%s346 + $0x620] sm:$0xff]
        %v731 = vld [vmem:[%s346 + $0x628] sm:$0xff]
        %v732 = vld [vmem:[%s346 + $0x630] sm:$0xff]
        %v733 = vld [vmem:[%s346 + $0x638] sm:$0xff]
        %v734 = vld [vmem:[%s346 + $0x640] sm:$0xff]
        %v735 = vld [vmem:[%s346 + $0x648] sm:$0xff]
        %v736 = vld [vmem:[%s346 + $0x650] sm:$0xff]
        %v737 = vld [vmem:[%s346 + $0x658] sm:$0xff]
        %v738 = vld [vmem:[%s346 + $0x660] sm:$0xff]
        %v739 = vld [vmem:[%s346 + $0x668] sm:$0xff]
        %v740 = vld [vmem:[%s346 + $0x670] sm:$0xff]
        %v741 = vld [vmem:[%s346 + $0x678] sm:$0xff]
        %v742 = vld [vmem:[%s346 + $0x680] sm:$0xff]
        %v743 = vld [vmem:[%s346 + $0x688] sm:$0xff]
        %v744 = vld [vmem:[%s346 + $0x690] sm:$0xff]
        %v745 = vld [vmem:[%s346 + $0x698] sm:$0xff]
        %v746 = vld [vmem:[%s346 + $0x6a0] sm:$0xff]
        %v747 = vld [vmem:[%s346 + $0x6a8] sm:$0xff]
        %v748 = vld [vmem:[%s346 + $0x6b0] sm:$0xff]
        %v749 = vld [vmem:[%s346 + $0x6b8] sm:$0xff]
        %v750 = vld [vmem:[%s346 + $0x6c0] sm:$0xff]
        %v751 = vld [vmem:[%s346 + $0x6c8] sm:$0xff]
        %v752 = vld [vmem:[%s346 + $0x6d0] sm:$0xff]
        %v753 = vld [vmem:[%s346 + $0x6d8] sm:$0xff]
        %v754 = vld [vmem:[%s346 + $0x6e0] sm:$0xff]
        %v755 = vld [vmem:[%s346 + $0x6e8] sm:$0xff]
        %v756 = vld [vmem:[%s346 + $0x6f0] sm:$0xff]
        %v757 = vld [vmem:[%s346 + $0x6f8] sm:$0xff]
        %v758 = vld [vmem:[%s346 + $0x700] sm:$0xff]
        %v759 = vld [vmem:[%s346 + $0x708] sm:$0xff]
        %v760 = vld [vmem:[%s346 + $0x710] sm:$0xff]
        %v761 = vld [vmem:[%s346 + $0x718] sm:$0xff]
        %v762 = vld [vmem:[%s346 + $0x720] sm:$0xff]
        %v763 = vld [vmem:[%s346 + $0x728] sm:$0xff]
        %v764 = vld [vmem:[%s346 + $0x730] sm:$0xff]
        %v765 = vld [vmem:[%s346 + $0x738] sm:$0xff]
        %v766 = vld [vmem:[%s346 + $0x740] sm:$0xff]
        %v767 = vld [vmem:[%s346 + $0x748] sm:$0xff]
        %v768 = vld [vmem:[%s346 + $0x750] sm:$0xff]
        %v769 = vld [vmem:[%s346 + $0x758] sm:$0xff]
        %v770 = vld [vmem:[%s346 + $0x760] sm:$0xff]
        %v771 = vld [vmem:[%s346 + $0x768] sm:$0xff]
        %v772 = vld [vmem:[%s346 + $0x770] sm:$0xff]
        %v773 = vld [vmem:[%s346 + $0x778] sm:$0xff]
        %v774 = vld [vmem:[%s346 + $0x780] sm:$0xff]
        %v775 = vld [vmem:[%s346 + $0x788] sm:$0xff]
        %v776 = vld [vmem:[%s346 + $0x790] sm:$0xff]
        %v777 = vld [vmem:[%s346 + $0x798] sm:$0xff]
        %v778 = vld [vmem:[%s346 + $0x7a0] sm:$0xff]
        %v779 = vld [vmem:[%s346 + $0x7a8] sm:$0xff]
        %v780 = vld [vmem:[%s346 + $0x7b0] sm:$0xff]
        %v781 = vld [vmem:[%s346 + $0x7b8] sm:$0xff]
        %v782 = vld [vmem:[%s346 + $0x7c0] sm:$0xff]
        %v783 = vld [vmem:[%s346 + $0x7c8] sm:$0xff]
        %v784 = vld [vmem:[%s346 + $0x7d0] sm:$0xff]
        %v785 = vld [vmem:[%s346 + $0x7d8] sm:$0xff]
        %v786 = vld [vmem:[%s346 + $0x7e0] sm:$0xff]
        %v787 = vld [vmem:[%s346 + $0x7e8] sm:$0xff]
        %v788 = vld [vmem:[%s346 + $0x7f0] sm:$0xff]
        %v789 = vld [vmem:[%s346 + $0x7f8] sm:$0xff]
        %v790 = vld [vmem:[%s346 + $0x800] sm:$0xff]
        %v791 = vld [vmem:[%s346 + $0x808] sm:$0xff]
        %v792 = vld [vmem:[%s346 + $0x810] sm:$0xff]
        %v793 = vld [vmem:[%s346 + $0x818] sm:$0xff]
        %v794 = vld [vmem:[%s346 + $0x820] sm:$0xff]
        %v795 = vld [vmem:[%s346 + $0x828] sm:$0xff]
        %v796 = vld [vmem:[%s346 + $0x830] sm:$0xff]
        %v797 = vld [vmem:[%s346 + $0x838] sm:$0xff]
        %v798 = vld [vmem:[%s346 + $0x840] sm:$0xff]
        %v799 = vld [vmem:[%s346 + $0x848] sm:$0xff]
        %v800 = vld [vmem:[%s346 + $0x850] sm:$0xff]
        %v801 = vld [vmem:[%s346 + $0x858] sm:$0xff]
        %v802 = vld [vmem:[%s346 + $0x860] sm:$0xff]
        %v803 = vld [vmem:[%s346 + $0x868] sm:$0xff]
        %v804 = vld [vmem:[%s346 + $0x870] sm:$0xff]
        %v805 = vld [vmem:[%s346 + $0x878] sm:$0xff]
        %v806 = vld [vmem:[%s346 + $0x880] sm:$0xff]
        %v807 = vld [vmem:[%s346 + $0x888] sm:$0xff]
        %v808 = vld [vmem:[%s346 + $0x890] sm:$0xff]
        %v809 = vld [vmem:[%s346 + $0x898] sm:$0xff]
        %v810 = vld [vmem:[%s346 + $0x8a0] sm:$0xff]
        %v811 = vld [vmem:[%s346 + $0x8a8] sm:$0xff]
        %v812 = vld [vmem:[%s346 + $0x8b0] sm:$0xff]
        %v813 = vld [vmem:[%s346 + $0x8b8] sm:$0xff]
        %v814 = vld [vmem:[%s346 + $0x8c0] sm:$0xff]
        %v815 = vld [vmem:[%s346 + $0x8c8] sm:$0xff]
        %v816 = vld [vmem:[%s346 + $0x8d0] sm:$0xff]
        %v817 = vld [vmem:[%s346 + $0x8d8] sm:$0xff]
        %v818 = vld [vmem:[%s346 + $0x8e0] sm:$0xff]
        %v819 = vld [vmem:[%s346 + $0x8e8] sm:$0xff]
        %v820 = vld [vmem:[%s346 + $0x8f0] sm:$0xff]
        %v821 = vld [vmem:[%s346 + $0x8f8] sm:$0xff]
        %v822 = vld [vmem:[%s346 + $0x900] sm:$0xff]
        %v823 = vld [vmem:[%s346 + $0x908] sm:$0xff]
        %v824 = vld [vmem:[%s346 + $0x910] sm:$0xff]
        %v825 = vld [vmem:[%s346 + $0x918] sm:$0xff]
        %v826 = vld [vmem:[%s346 + $0x920] sm:$0xff]
        %v827 = vld [vmem:[%s346 + $0x928] sm:$0xff]
        %v828 = vld [vmem:[%s346 + $0x930] sm:$0xff]
        %v829 = vld [vmem:[%s346 + $0x938] sm:$0xff]
        %v830 = vld [vmem:[%s346 + $0x940] sm:$0xff]
        %v831 = vld [vmem:[%s346 + $0x948] sm:$0xff]
        %v832 = vld [vmem:[%s346 + $0x950] sm:$0xff]
        %v833 = vld [vmem:[%s346 + $0x958] sm:$0xff]
        %v834 = vld [vmem:[%s346 + $0x960] sm:$0xff]
        %v835 = vld [vmem:[%s346 + $0x968] sm:$0xff]
        %v836 = vld [vmem:[%s346 + $0x970] sm:$0xff]
        %v837 = vld [vmem:[%s346 + $0x978] sm:$0xff]
        %v838 = vld [vmem:[%s346 + $0x980] sm:$0xff]
        %v839 = vld [vmem:[%s346 + $0x988] sm:$0xff]
        %v840 = vld [vmem:[%s346 + $0x990] sm:$0xff]
        %v841 = vld [vmem:[%s346 + $0x998] sm:$0xff]
        %v842 = vld [vmem:[%s346 + $0x9a0] sm:$0xff]
        %v843 = vld [vmem:[%s346 + $0x9a8] sm:$0xff]
        %v844 = vld [vmem:[%s346 + $0x9b0] sm:$0xff]
        %v845 = vld [vmem:[%s346 + $0x9b8] sm:$0xff]
        %v846 = vld [vmem:[%s346 + $0x9c0] sm:$0xff]
        %v847 = vld [vmem:[%s346 + $0x9c8] sm:$0xff]
        %v848 = vld [vmem:[%s346 + $0x9d0] sm:$0xff]
        %v849 = vld [vmem:[%s346 + $0x9d8] sm:$0xff]
        %v850 = vld [vmem:[%s346 + $0x9e0] sm:$0xff]
        %v851 = vld [vmem:[%s346 + $0x9e8] sm:$0xff]
        %v852 = vld [vmem:[%s346 + $0x9f0] sm:$0xff]
        %v853 = vld [vmem:[%s346 + $0x9f8] sm:$0xff]
        %v854 = vld [vmem:[%s346 + $0xa00] sm:$0xff]
        %v855 = vld [vmem:[%s346 + $0xa08] sm:$0xff]
        %v856 = vld [vmem:[%s346 + $0xa10] sm:$0xff]
        %v857 = vld [vmem:[%s346 + $0xa18] sm:$0xff]
        %v858 = vld [vmem:[%s346 + $0xa20] sm:$0xff]
        %v859 = vld [vmem:[%s346 + $0xa28] sm:$0xff]
        %v860 = vld [vmem:[%s346 + $0xa30] sm:$0xff]
        %v861 = vld [vmem:[%s346 + $0xa38] sm:$0xff]
        %v862 = vld [vmem:[%s346 + $0xa40] sm:$0xff]
        %v863 = vld [vmem:[%s346 + $0xa48] sm:$0xff]
        %v864 = vld [vmem:[%s346 + $0xa50] sm:$0xff]
        %v865 = vld [vmem:[%s346 + $0xa58] sm:$0xff]
        %v866 = vld [vmem:[%s346 + $0xa60] sm:$0xff]
        %v867 = vld [vmem:[%s346 + $0xa68] sm:$0xff]
        %v868 = vld [vmem:[%s346 + $0xa70] sm:$0xff]
        %v869 = vld [vmem:[%s346 + $0xa78] sm:$0xff]
        %v870 = vld [vmem:[%s346 + $0xa80] sm:$0xff]
        %v871 = vld [vmem:[%s346 + $0xa88] sm:$0xff]
        %v872 = vld [vmem:[%s346 + $0xa90] sm:$0xff]
        %v873 = vld [vmem:[%s346 + $0xa98] sm:$0xff]
        %v874 = vld [vmem:[%s346 + $0xaa0] sm:$0xff]
        %v875 = vld [vmem:[%s346 + $0xaa8] sm:$0xff]
        %v876 = vld [vmem:[%s346 + $0xab0] sm:$0xff]
        %v877 = vld [vmem:[%s346 + $0xab8] sm:$0xff]
        %v878 = vld [vmem:[%s346 + $0xac0] sm:$0xff]
        %v879 = vld [vmem:[%s346 + $0xac8] sm:$0xff]
        %v880 = vld [vmem:[%s346 + $0xad0] sm:$0xff]
        %v881 = vld [vmem:[%s346 + $0xad8] sm:$0xff]
        %v882 = vld [vmem:[%s346 + $0xae0] sm:$0xff]
        %v883 = vld [vmem:[%s346 + $0xae8] sm:$0xff]
        %v884 = vld [vmem:[%s346 + $0xaf0] sm:$0xff]
        %v885 = vld [vmem:[%s346 + $0xaf8] sm:$0xff]
        %v886 = vld [vmem:[%s346 + $0xb00] sm:$0xff]
        %v887 = vld [vmem:[%s346 + $0xb08] sm:$0xff]
        %v888 = vld [vmem:[%s346 + $0xb10] sm:$0xff]
        %v889 = vld [vmem:[%s346 + $0xb18] sm:$0xff]
        %v890 = vld [vmem:[%s346 + $0xb20] sm:$0xff]
        %v891 = vld [vmem:[%s346 + $0xb28] sm:$0xff]
        %v892 = vld [vmem:[%s346 + $0xb30] sm:$0xff]
        %v893 = vld [vmem:[%s346 + $0xb38] sm:$0xff]
        %v894 = vld [vmem:[%s346 + $0xb40] sm:$0xff]
        %v895 = vld [vmem:[%s346 + $0xb48] sm:$0xff]
        %v896 = vld [vmem:[%s346 + $0xb50] sm:$0xff]
        %v897 = vld [vmem:[%s346 + $0xb58] sm:$0xff]
        %v898 = vld [vmem:[%s346 + $0xb60] sm:$0xff]
        %v899 = vld [vmem:[%s346 + $0xb68] sm:$0xff]
        %v900 = vld [vmem:[%s346 + $0xb70] sm:$0xff]
        %v901 = vld [vmem:[%s346 + $0xb78] sm:$0xff]
        %v902 = vld [vmem:[%s346 + $0xb80] sm:$0xff]
        %v903 = vld [vmem:[%s346 + $0xb88] sm:$0xff]
        %v904 = vld [vmem:[%s346 + $0xb90] sm:$0xff]
        %v905 = vld [vmem:[%s346 + $0xb98] sm:$0xff]
        %v906 = vld [vmem:[%s346 + $0xba0] sm:$0xff]
        %v907 = vld [vmem:[%s346 + $0xba8] sm:$0xff]
        %v908 = vld [vmem:[%s346 + $0xbb0] sm:$0xff]
        %v909 = vld [vmem:[%s346 + $0xbb8] sm:$0xff]
        %v910 = vld [vmem:[%s346 + $0xbc0] sm:$0xff]
        %v911 = vld [vmem:[%s346 + $0xbc8] sm:$0xff]
        %v912 = vld [vmem:[%s346 + $0xbd0] sm:$0xff]
        %v913 = vld [vmem:[%s346 + $0xbd8] sm:$0xff]
        %v914 = vld [vmem:[%s346 + $0xbe0] sm:$0xff]
        %v915 = vld [vmem:[%s346 + $0xbe8] sm:$0xff]
        %v916 = vld [vmem:[%s346 + $0xbf0] sm:$0xff]
        %v917 = vld [vmem:[%s346 + $0xbf8] sm:$0xff]
        %v918 = vld [vmem:[%s346 + $0xc00] sm:$0xff]
        %v919 = vld [vmem:[%s346 + $0xc08] sm:$0xff]
        %v920 = vld [vmem:[%s346 + $0xc10] sm:$0xff]
        %v921 = vld [vmem:[%s346 + $0xc18] sm:$0xff]
        %v922 = vld [vmem:[%s346 + $0xc20] sm:$0xff]
        %v923 = vld [vmem:[%s346 + $0xc28] sm:$0xff]
        %v924 = vld [vmem:[%s346 + $0xc30] sm:$0xff]
        %v925 = vld [vmem:[%s346 + $0xc38] sm:$0xff]
        %v926 = vld [vmem:[%s346 + $0xc40] sm:$0xff]
        %v927 = vld [vmem:[%s346 + $0xc48] sm:$0xff]
        %v928 = vld [vmem:[%s346 + $0xc50] sm:$0xff]
        %v929 = vld [vmem:[%s346 + $0xc58] sm:$0xff]
        %v930 = vld [vmem:[%s346 + $0xc60] sm:$0xff]
        %v931 = vld [vmem:[%s346 + $0xc68] sm:$0xff]
        %v932 = vld [vmem:[%s346 + $0xc70] sm:$0xff]
        %v933 = vld [vmem:[%s346 + $0xc78] sm:$0xff]
        %v934 = vld [vmem:[%s346 + $0xc80] sm:$0xff]
        %v935 = vld [vmem:[%s346 + $0xc88] sm:$0xff]
        %v936 = vld [vmem:[%s346 + $0xc90] sm:$0xff]
        %v937 = vld [vmem:[%s346 + $0xc98] sm:$0xff]
        %v938 = vld [vmem:[%s346 + $0xca0] sm:$0xff]
        %v939 = vld [vmem:[%s346 + $0xca8] sm:$0xff]
        %v940 = vld [vmem:[%s346 + $0xcb0] sm:$0xff]
        %v941 = vld [vmem:[%s346 + $0xcb8] sm:$0xff]
        %v942 = vld [vmem:[%s346 + $0xcc0] sm:$0xff]
        %v943 = vld [vmem:[%s346 + $0xcc8] sm:$0xff]
        %v944 = vld [vmem:[%s346 + $0xcd0] sm:$0xff]
        %v945 = vld [vmem:[%s346 + $0xcd8] sm:$0xff]
        %v946 = vld [vmem:[%s346 + $0xce0] sm:$0xff]
        %v947 = vld [vmem:[%s346 + $0xce8] sm:$0xff]
        %v948 = vld [vmem:[%s346 + $0xcf0] sm:$0xff]
        %v949 = vld [vmem:[%s346 + $0xcf8] sm:$0xff]
        %v950 = vld [vmem:[%s346 + $0xd00] sm:$0xff]
        %v951 = vld [vmem:[%s346 + $0xd08] sm:$0xff]
        %v952 = vld [vmem:[%s346 + $0xd10] sm:$0xff]
        %v953 = vld [vmem:[%s346 + $0xd18] sm:$0xff]
        %v954 = vld [vmem:[%s346 + $0xd20] sm:$0xff]
        %v955 = vld [vmem:[%s346 + $0xd28] sm:$0xff]
        %v956 = vld [vmem:[%s346 + $0xd30] sm:$0xff]
        %v957 = vld [vmem:[%s346 + $0xd38] sm:$0xff]
        %v958 = vld [vmem:[%s346 + $0xd40] sm:$0xff]
        %v959 = vld [vmem:[%s346 + $0xd48] sm:$0xff]
        %v960 = vld [vmem:[%s346 + $0xd50] sm:$0xff]
        %v961 = vld [vmem:[%s346 + $0xd58] sm:$0xff]
        %v962 = vld [vmem:[%s346 + $0xd60] sm:$0xff]
        %v963 = vld [vmem:[%s346 + $0xd68] sm:$0xff]
        %v964 = vld [vmem:[%s346 + $0xd70] sm:$0xff]
        %v965 = vld [vmem:[%s346 + $0xd78] sm:$0xff]
        %v966 = vld [vmem:[%s346 + $0xd80] sm:$0xff]
        %v967 = vld [vmem:[%s346 + $0xd88] sm:$0xff]
        %v968 = vld [vmem:[%s346 + $0xd90] sm:$0xff]
        %v969 = vld [vmem:[%s346 + $0xd98] sm:$0xff]
        %v970 = vld [vmem:[%s346 + $0xda0] sm:$0xff]
        %v971 = vld [vmem:[%s346 + $0xda8] sm:$0xff]
        %v972 = vld [vmem:[%s346 + $0xdb0] sm:$0xff]
        %v973 = vld [vmem:[%s346 + $0xdb8] sm:$0xff]
        %v974 = vld [vmem:[%s346 + $0xdc0] sm:$0xff]
        %v975 = vld [vmem:[%s346 + $0xdc8] sm:$0xff]
        %v976 = vld [vmem:[%s346 + $0xdd0] sm:$0xff]
        %v977 = vld [vmem:[%s346 + $0xdd8] sm:$0xff]
        %v978 = vld [vmem:[%s346 + $0xde0] sm:$0xff]
        %v979 = vld [vmem:[%s346 + $0xde8] sm:$0xff]
        %v980 = vld [vmem:[%s346 + $0xdf0] sm:$0xff]
        %v981 = vld [vmem:[%s346 + $0xdf8] sm:$0xff]
        %v982 = vld [vmem:[%s346 + $0xe00] sm:$0xff]
        %v983 = vld [vmem:[%s346 + $0xe08] sm:$0xff]
        %v984 = vld [vmem:[%s346 + $0xe10] sm:$0xff]
        %v985 = vld [vmem:[%s346 + $0xe18] sm:$0xff]
        %v986 = vld [vmem:[%s346 + $0xe20] sm:$0xff]
        %v987 = vld [vmem:[%s346 + $0xe28] sm:$0xff]
        %v988 = vld [vmem:[%s346 + $0xe30] sm:$0xff]
        %v989 = vld [vmem:[%s346 + $0xe38] sm:$0xff]
        %v990 = vld [vmem:[%s346 + $0xe40] sm:$0xff]
        %v991 = vld [vmem:[%s346 + $0xe48] sm:$0xff]
        %v992 = vld [vmem:[%s346 + $0xe50] sm:$0xff]
        %v993 = vld [vmem:[%s346 + $0xe58] sm:$0xff]
        %v994 = vld [vmem:[%s346 + $0xe60] sm:$0xff]
        %v995 = vld [vmem:[%s346 + $0xe68] sm:$0xff]
        %v996 = vld [vmem:[%s346 + $0xe70] sm:$0xff]
        %v997 = vld [vmem:[%s346 + $0xe78] sm:$0xff]
        %v998 = vld [vmem:[%s346 + $0xe80] sm:$0xff]
        %v999 = vld [vmem:[%s346 + $0xe88] sm:$0xff]
        %v1000 = vld [vmem:[%s346 + $0xe90] sm:$0xff]
        %v1001 = vld [vmem:[%s346 + $0xe98] sm:$0xff]
        %v1002 = vld [vmem:[%s346 + $0xea0] sm:$0xff]
        %v1003 = vld [vmem:[%s346 + $0xea8] sm:$0xff]
        %v1004 = vld [vmem:[%s346 + $0xeb0] sm:$0xff]
        %v1005 = vld [vmem:[%s346 + $0xeb8] sm:$0xff]
        %v1006 = vld [vmem:[%s346 + $0xec0] sm:$0xff]
        %v1007 = vld [vmem:[%s346 + $0xec8] sm:$0xff]
        %v1008 = vld [vmem:[%s346 + $0xed0] sm:$0xff]
        %v1009 = vld [vmem:[%s346 + $0xed8] sm:$0xff]
        %v1010 = vld [vmem:[%s346 + $0xee0] sm:$0xff]
        %v1011 = vld [vmem:[%s346 + $0xee8] sm:$0xff]
        %v1012 = vld [vmem:[%s346 + $0xef0] sm:$0xff]
        %v1013 = vld [vmem:[%s346 + $0xef8] sm:$0xff]
        %v1014 = vld [vmem:[%s346 + $0xf00] sm:$0xff]
        %v1015 = vld [vmem:[%s346 + $0xf08] sm:$0xff]
        %v1016 = vld [vmem:[%s346 + $0xf10] sm:$0xff]
        %v1017 = vld [vmem:[%s346 + $0xf18] sm:$0xff]
        %v1018 = vld [vmem:[%s346 + $0xf20] sm:$0xff]
        %v1019 = vld [vmem:[%s346 + $0xf28] sm:$0xff]
        %v1020 = vld [vmem:[%s346 + $0xf30] sm:$0xff]
        %v1021 = vld [vmem:[%s346 + $0xf38] sm:$0xff]
        %v1022 = vld [vmem:[%s346 + $0xf40] sm:$0xff]
        %v1023 = vld [vmem:[%s346 + $0xf48] sm:$0xff]
        %v1024 = vld [vmem:[%s346 + $0xf50] sm:$0xff]
        %v1025 = vld [vmem:[%s346 + $0xf58] sm:$0xff]
        %v1026 = vld [vmem:[%s346 + $0xf60] sm:$0xff]
        %v1027 = vld [vmem:[%s346 + $0xf68] sm:$0xff]
        %v1028 = vld [vmem:[%s346 + $0xf70] sm:$0xff]
        %v1029 = vld [vmem:[%s346 + $0xf78] sm:$0xff]
        %v1030 = vld [vmem:[%s346 + $0xf80] sm:$0xff]
        %v1031 = vld [vmem:[%s346 + $0xf88] sm:$0xff]
        %v1032 = vld [vmem:[%s346 + $0xf90] sm:$0xff]
        %v1033 = vld [vmem:[%s346 + $0xf98] sm:$0xff]
        %v1034 = vld [vmem:[%s346 + $0xfa0] sm:$0xff]
        %v1035 = vld [vmem:[%s346 + $0xfa8] sm:$0xff]
        %v1036 = vld [vmem:[%s346 + $0xfb0] sm:$0xff]
        %v1037 = vld [vmem:[%s346 + $0xfb8] sm:$0xff]
        %v1038 = vld [vmem:[%s346 + $0xfc0] sm:$0xff]
        %v1039 = vld [vmem:[%s346 + $0xfc8] sm:$0xff]
        %v1040 = vld [vmem:[%s346 + $0xfd0] sm:$0xff]
        %v1041 = vld [vmem:[%s346 + $0xfd8] sm:$0xff]
        %v1042 = vld [vmem:[%s346 + $0xfe0] sm:$0xff]
        %v1043 = vld [vmem:[%s346 + $0xfe8] sm:$0xff]
        %v1044 = vld [vmem:[%s346 + $0xff0] sm:$0xff]
        %v1045 = vld [vmem:[%s346 + $0xff8] sm:$0xff]
        %v1046 = vld [vmem:[%s355] sm:$0xf]
        %v1048 = vlaneseq
        %v1049 = vshrl.u32 %v1048, 7
        %v1050 = vsub.s32 0, %v1049
        %v1051 = vrot.slane %v1046, %v1050
        %v1052 = vlaneseq
        %v1053 = vshrl.u32 %v1052, 7
        %v1054 = vsub.s32 1, %v1053
        %v1055 = vrot.slane %v1046, %v1054
        %v1056 = vlaneseq
        %v1057 = vshrl.u32 %v1056, 7
        %v1058 = vsub.s32 2, %v1057
        %v1059 = vrot.slane %v1046, %v1058
        %v1060 = vlaneseq
        %v1061 = vshrl.u32 %v1060, 7
        %v1062 = vsub.s32 3, %v1061
        %v1063 = vrot.slane %v1046, %v1062
        %v1580 = vunpack.c.l.b16 %v534
        %v1581 = vunpack.c.h.b16 %v534
        %v1582 = vunpack.c.l.b16 %v535
        %v1583 = vunpack.c.h.b16 %v535
        %v1584 = vunpack.c.l.b16 %v536
        %v1585 = vunpack.c.h.b16 %v536
        %v1586 = vunpack.c.l.b16 %v537
        %v1587 = vunpack.c.h.b16 %v537
        %v1588 = vunpack.c.l.b16 %v538
        %v1589 = vunpack.c.h.b16 %v538
        %v1590 = vunpack.c.l.b16 %v539
        %v1591 = vunpack.c.h.b16 %v539
        %v1592 = vunpack.c.l.b16 %v540
        %v1593 = vunpack.c.h.b16 %v540
        %v1594 = vunpack.c.l.b16 %v541
        %v1595 = vunpack.c.h.b16 %v541
        %v1596 = vunpack.c.l.b16 %v542
        %v1597 = vunpack.c.h.b16 %v542
        %v1598 = vunpack.c.l.b16 %v543
        %v1599 = vunpack.c.h.b16 %v543
        %v1600 = vunpack.c.l.b16 %v544
        %v1601 = vunpack.c.h.b16 %v544
        %v1602 = vunpack.c.l.b16 %v545
        %v1603 = vunpack.c.h.b16 %v545
        %v1604 = vunpack.c.l.b16 %v546
        %v1605 = vunpack.c.h.b16 %v546
        %v1606 = vunpack.c.l.b16 %v547
        %v1607 = vunpack.c.h.b16 %v547
        %v1608 = vunpack.c.l.b16 %v548
        %v1609 = vunpack.c.h.b16 %v548
        %v1610 = vunpack.c.l.b16 %v549
        %v1611 = vunpack.c.h.b16 %v549
        %v1612 = vunpack.c.l.b16 %v550
        %v1613 = vunpack.c.h.b16 %v550
        %v1614 = vunpack.c.l.b16 %v551
        %v1615 = vunpack.c.h.b16 %v551
        %v1616 = vunpack.c.l.b16 %v552
        %v1617 = vunpack.c.h.b16 %v552
        %v1618 = vunpack.c.l.b16 %v553
        %v1619 = vunpack.c.h.b16 %v553
        %v1620 = vunpack.c.l.b16 %v554
        %v1621 = vunpack.c.h.b16 %v554
        %v1622 = vunpack.c.l.b16 %v555
        %v1623 = vunpack.c.h.b16 %v555
        %v1624 = vunpack.c.l.b16 %v556
        %v1625 = vunpack.c.h.b16 %v556
        %v1626 = vunpack.c.l.b16 %v557
        %v1627 = vunpack.c.h.b16 %v557
        %v1628 = vunpack.c.l.b16 %v558
        %v1629 = vunpack.c.h.b16 %v558
        %v1630 = vunpack.c.l.b16 %v559
        %v1631 = vunpack.c.h.b16 %v559
        %v1632 = vunpack.c.l.b16 %v560
        %v1633 = vunpack.c.h.b16 %v560
        %v1634 = vunpack.c.l.b16 %v561
        %v1635 = vunpack.c.h.b16 %v561
        %v1636 = vunpack.c.l.b16 %v562
        %v1637 = vunpack.c.h.b16 %v562
        %v1638 = vunpack.c.l.b16 %v563
        %v1639 = vunpack.c.h.b16 %v563
        %v1640 = vunpack.c.l.b16 %v564
        %v1641 = vunpack.c.h.b16 %v564
        %v1642 = vunpack.c.l.b16 %v565
        %v1643 = vunpack.c.h.b16 %v565
        %v1644 = vunpack.c.l.b16 %v566
        %v1645 = vunpack.c.h.b16 %v566
        %v1646 = vunpack.c.l.b16 %v567
        %v1647 = vunpack.c.h.b16 %v567
        %v1648 = vunpack.c.l.b16 %v568
        %v1649 = vunpack.c.h.b16 %v568
        %v1650 = vunpack.c.l.b16 %v569
        %v1651 = vunpack.c.h.b16 %v569
        %v1652 = vunpack.c.l.b16 %v570
        %v1653 = vunpack.c.h.b16 %v570
        %v1654 = vunpack.c.l.b16 %v571
        %v1655 = vunpack.c.h.b16 %v571
        %v1656 = vunpack.c.l.b16 %v572
        %v1657 = vunpack.c.h.b16 %v572
        %v1658 = vunpack.c.l.b16 %v573
        %v1659 = vunpack.c.h.b16 %v573
        %v1660 = vunpack.c.l.b16 %v574
        %v1661 = vunpack.c.h.b16 %v574
        %v1662 = vunpack.c.l.b16 %v575
        %v1663 = vunpack.c.h.b16 %v575
        %v1664 = vunpack.c.l.b16 %v576
        %v1665 = vunpack.c.h.b16 %v576
        %v1666 = vunpack.c.l.b16 %v577
        %v1667 = vunpack.c.h.b16 %v577
        %v1668 = vunpack.c.l.b16 %v578
        %v1669 = vunpack.c.h.b16 %v578
        %v1670 = vunpack.c.l.b16 %v579
        %v1671 = vunpack.c.h.b16 %v579
        %v1672 = vunpack.c.l.b16 %v580
        %v1673 = vunpack.c.h.b16 %v580
        %v1674 = vunpack.c.l.b16 %v581
        %v1675 = vunpack.c.h.b16 %v581
        %v1676 = vunpack.c.l.b16 %v582
        %v1677 = vunpack.c.h.b16 %v582
        %v1678 = vunpack.c.l.b16 %v583
        %v1679 = vunpack.c.h.b16 %v583
        %v1680 = vunpack.c.l.b16 %v584
        %v1681 = vunpack.c.h.b16 %v584
        %v1682 = vunpack.c.l.b16 %v585
        %v1683 = vunpack.c.h.b16 %v585
        %v1684 = vunpack.c.l.b16 %v586
        %v1685 = vunpack.c.h.b16 %v586
        %v1686 = vunpack.c.l.b16 %v587
        %v1687 = vunpack.c.h.b16 %v587
        %v1688 = vunpack.c.l.b16 %v588
        %v1689 = vunpack.c.h.b16 %v588
        %v1690 = vunpack.c.l.b16 %v589
        %v1691 = vunpack.c.h.b16 %v589
        %v1692 = vunpack.c.l.b16 %v590
        %v1693 = vunpack.c.h.b16 %v590
        %v1694 = vunpack.c.l.b16 %v591
        %v1695 = vunpack.c.h.b16 %v591
        %v1696 = vunpack.c.l.b16 %v592
        %v1697 = vunpack.c.h.b16 %v592
        %v1698 = vunpack.c.l.b16 %v593
        %v1699 = vunpack.c.h.b16 %v593
        %v1700 = vunpack.c.l.b16 %v594
        %v1701 = vunpack.c.h.b16 %v594
        %v1702 = vunpack.c.l.b16 %v595
        %v1703 = vunpack.c.h.b16 %v595
        %v1704 = vunpack.c.l.b16 %v596
        %v1705 = vunpack.c.h.b16 %v596
        %v1706 = vunpack.c.l.b16 %v597
        %v1707 = vunpack.c.h.b16 %v597
        %v1708 = vunpack.c.l.b16 %v598
        %v1709 = vunpack.c.h.b16 %v598
        %v1710 = vunpack.c.l.b16 %v599
        %v1711 = vunpack.c.h.b16 %v599
        %v1712 = vunpack.c.l.b16 %v600
        %v1713 = vunpack.c.h.b16 %v600
        %v1714 = vunpack.c.l.b16 %v601
        %v1715 = vunpack.c.h.b16 %v601
        %v1716 = vunpack.c.l.b16 %v602
        %v1717 = vunpack.c.h.b16 %v602
        %v1718 = vunpack.c.l.b16 %v603
        %v1719 = vunpack.c.h.b16 %v603
        %v1720 = vunpack.c.l.b16 %v604
        %v1721 = vunpack.c.h.b16 %v604
        %v1722 = vunpack.c.l.b16 %v605
        %v1723 = vunpack.c.h.b16 %v605
        %v1724 = vunpack.c.l.b16 %v606
        %v1725 = vunpack.c.h.b16 %v606
        %v1726 = vunpack.c.l.b16 %v607
        %v1727 = vunpack.c.h.b16 %v607
        %v1728 = vunpack.c.l.b16 %v608
        %v1729 = vunpack.c.h.b16 %v608
        %v1730 = vunpack.c.l.b16 %v609
        %v1731 = vunpack.c.h.b16 %v609
        %v1732 = vunpack.c.l.b16 %v610
        %v1733 = vunpack.c.h.b16 %v610
        %v1734 = vunpack.c.l.b16 %v611
        %v1735 = vunpack.c.h.b16 %v611
        %v1736 = vunpack.c.l.b16 %v612
        %v1737 = vunpack.c.h.b16 %v612
        %v1738 = vunpack.c.l.b16 %v613
        %v1739 = vunpack.c.h.b16 %v613
        %v1740 = vunpack.c.l.b16 %v614
        %v1741 = vunpack.c.h.b16 %v614
        %v1742 = vunpack.c.l.b16 %v615
        %v1743 = vunpack.c.h.b16 %v615
        %v1744 = vunpack.c.l.b16 %v616
        %v1745 = vunpack.c.h.b16 %v616
        %v1746 = vunpack.c.l.b16 %v617
        %v1747 = vunpack.c.h.b16 %v617
        %v1748 = vunpack.c.l.b16 %v618
        %v1749 = vunpack.c.h.b16 %v618
        %v1750 = vunpack.c.l.b16 %v619
        %v1751 = vunpack.c.h.b16 %v619
        %v1752 = vunpack.c.l.b16 %v620
        %v1753 = vunpack.c.h.b16 %v620
        %v1754 = vunpack.c.l.b16 %v621
        %v1755 = vunpack.c.h.b16 %v621
        %v1756 = vunpack.c.l.b16 %v622
        %v1757 = vunpack.c.h.b16 %v622
        %v1758 = vunpack.c.l.b16 %v623
        %v1759 = vunpack.c.h.b16 %v623
        %v1760 = vunpack.c.l.b16 %v624
        %v1761 = vunpack.c.h.b16 %v624
        %v1762 = vunpack.c.l.b16 %v625
        %v1763 = vunpack.c.h.b16 %v625
        %v1764 = vunpack.c.l.b16 %v626
        %v1765 = vunpack.c.h.b16 %v626
        %v1766 = vunpack.c.l.b16 %v627
        %v1767 = vunpack.c.h.b16 %v627
        %v1768 = vunpack.c.l.b16 %v628
        %v1769 = vunpack.c.h.b16 %v628
        %v1770 = vunpack.c.l.b16 %v629
        %v1771 = vunpack.c.h.b16 %v629
        %v1772 = vunpack.c.l.b16 %v630
        %v1773 = vunpack.c.h.b16 %v630
        %v1774 = vunpack.c.l.b16 %v631
        %v1775 = vunpack.c.h.b16 %v631
        %v1776 = vunpack.c.l.b16 %v632
        %v1777 = vunpack.c.h.b16 %v632
        %v1778 = vunpack.c.l.b16 %v633
        %v1779 = vunpack.c.h.b16 %v633
        %v1780 = vunpack.c.l.b16 %v634
        %v1781 = vunpack.c.h.b16 %v634
        %v1782 = vunpack.c.l.b16 %v635
        %v1783 = vunpack.c.h.b16 %v635
        %v1784 = vunpack.c.l.b16 %v636
        %v1785 = vunpack.c.h.b16 %v636
        %v1786 = vunpack.c.l.b16 %v637
        %v1787 = vunpack.c.h.b16 %v637
        %v1788 = vunpack.c.l.b16 %v638
        %v1789 = vunpack.c.h.b16 %v638
        %v1790 = vunpack.c.l.b16 %v639
        %v1791 = vunpack.c.h.b16 %v639
        %v1792 = vunpack.c.l.b16 %v640
        %v1793 = vunpack.c.h.b16 %v640
        %v1794 = vunpack.c.l.b16 %v641
        %v1795 = vunpack.c.h.b16 %v641
        %v1796 = vunpack.c.l.b16 %v642
        %v1797 = vunpack.c.h.b16 %v642
        %v1798 = vunpack.c.l.b16 %v643
        %v1799 = vunpack.c.h.b16 %v643
        %v1800 = vunpack.c.l.b16 %v644
        %v1801 = vunpack.c.h.b16 %v644
        %v1802 = vunpack.c.l.b16 %v645
        %v1803 = vunpack.c.h.b16 %v645
        %v1804 = vunpack.c.l.b16 %v646
        %v1805 = vunpack.c.h.b16 %v646
        %v1806 = vunpack.c.l.b16 %v647
        %v1807 = vunpack.c.h.b16 %v647
        %v1808 = vunpack.c.l.b16 %v648
        %v1809 = vunpack.c.h.b16 %v648
        %v1810 = vunpack.c.l.b16 %v649
        %v1811 = vunpack.c.h.b16 %v649
        %v1812 = vunpack.c.l.b16 %v650
        %v1813 = vunpack.c.h.b16 %v650
        %v1814 = vunpack.c.l.b16 %v651
        %v1815 = vunpack.c.h.b16 %v651
        %v1816 = vunpack.c.l.b16 %v652
        %v1817 = vunpack.c.h.b16 %v652
        %v1818 = vunpack.c.l.b16 %v653
        %v1819 = vunpack.c.h.b16 %v653
        %v1820 = vunpack.c.l.b16 %v654
        %v1821 = vunpack.c.h.b16 %v654
        %v1822 = vunpack.c.l.b16 %v655
        %v1823 = vunpack.c.h.b16 %v655
        %v1824 = vunpack.c.l.b16 %v656
        %v1825 = vunpack.c.h.b16 %v656
        %v1826 = vunpack.c.l.b16 %v657
        %v1827 = vunpack.c.h.b16 %v657
        %v1828 = vunpack.c.l.b16 %v658
        %v1829 = vunpack.c.h.b16 %v658
        %v1830 = vunpack.c.l.b16 %v659
        %v1831 = vunpack.c.h.b16 %v659
        %v1832 = vunpack.c.l.b16 %v660
        %v1833 = vunpack.c.h.b16 %v660
        %v1834 = vunpack.c.l.b16 %v661
        %v1835 = vunpack.c.h.b16 %v661
        %v1836 = vunpack.c.l.b16 %v662
        %v1837 = vunpack.c.h.b16 %v662
        %v1838 = vunpack.c.l.b16 %v663
        %v1839 = vunpack.c.h.b16 %v663
        %v1840 = vunpack.c.l.b16 %v664
        %v1841 = vunpack.c.h.b16 %v664
        %v1842 = vunpack.c.l.b16 %v665
        %v1843 = vunpack.c.h.b16 %v665
        %v1844 = vunpack.c.l.b16 %v666
        %v1845 = vunpack.c.h.b16 %v666
        %v1846 = vunpack.c.l.b16 %v667
        %v1847 = vunpack.c.h.b16 %v667
        %v1848 = vunpack.c.l.b16 %v668
        %v1849 = vunpack.c.h.b16 %v668
        %v1850 = vunpack.c.l.b16 %v669
        %v1851 = vunpack.c.h.b16 %v669
        %v1852 = vunpack.c.l.b16 %v670
        %v1853 = vunpack.c.h.b16 %v670
        %v1854 = vunpack.c.l.b16 %v671
        %v1855 = vunpack.c.h.b16 %v671
        %v1856 = vunpack.c.l.b16 %v672
        %v1857 = vunpack.c.h.b16 %v672
        %v1858 = vunpack.c.l.b16 %v673
        %v1859 = vunpack.c.h.b16 %v673
        %v1860 = vunpack.c.l.b16 %v674
        %v1861 = vunpack.c.h.b16 %v674
        %v1862 = vunpack.c.l.b16 %v675
        %v1863 = vunpack.c.h.b16 %v675
        %v1864 = vunpack.c.l.b16 %v676
        %v1865 = vunpack.c.h.b16 %v676
        %v1866 = vunpack.c.l.b16 %v677
        %v1867 = vunpack.c.h.b16 %v677
        %v1868 = vunpack.c.l.b16 %v678
        %v1869 = vunpack.c.h.b16 %v678
        %v1870 = vunpack.c.l.b16 %v679
        %v1871 = vunpack.c.h.b16 %v679
        %v1872 = vunpack.c.l.b16 %v680
        %v1873 = vunpack.c.h.b16 %v680
        %v1874 = vunpack.c.l.b16 %v681
        %v1875 = vunpack.c.h.b16 %v681
        %v1876 = vunpack.c.l.b16 %v682
        %v1877 = vunpack.c.h.b16 %v682
        %v1878 = vunpack.c.l.b16 %v683
        %v1879 = vunpack.c.h.b16 %v683
        %v1880 = vunpack.c.l.b16 %v684
        %v1881 = vunpack.c.h.b16 %v684
        %v1882 = vunpack.c.l.b16 %v685
        %v1883 = vunpack.c.h.b16 %v685
        %v1884 = vunpack.c.l.b16 %v686
        %v1885 = vunpack.c.h.b16 %v686
        %v1886 = vunpack.c.l.b16 %v687
        %v1887 = vunpack.c.h.b16 %v687
        %v1888 = vunpack.c.l.b16 %v688
        %v1889 = vunpack.c.h.b16 %v688
        %v1890 = vunpack.c.l.b16 %v689
        %v1891 = vunpack.c.h.b16 %v689
        %v1892 = vunpack.c.l.b16 %v690
        %v1893 = vunpack.c.h.b16 %v690
        %v1894 = vunpack.c.l.b16 %v691
        %v1895 = vunpack.c.h.b16 %v691
        %v1896 = vunpack.c.l.b16 %v692
        %v1897 = vunpack.c.h.b16 %v692
        %v1898 = vunpack.c.l.b16 %v693
        %v1899 = vunpack.c.h.b16 %v693
        %v1900 = vunpack.c.l.b16 %v694
        %v1901 = vunpack.c.h.b16 %v694
        %v1902 = vunpack.c.l.b16 %v695
        %v1903 = vunpack.c.h.b16 %v695
        %v1904 = vunpack.c.l.b16 %v696
        %v1905 = vunpack.c.h.b16 %v696
        %v1906 = vunpack.c.l.b16 %v697
        %v1907 = vunpack.c.h.b16 %v697
        %v1908 = vunpack.c.l.b16 %v698
        %v1909 = vunpack.c.h.b16 %v698
        %v1910 = vunpack.c.l.b16 %v699
        %v1911 = vunpack.c.h.b16 %v699
        %v1912 = vunpack.c.l.b16 %v700
        %v1913 = vunpack.c.h.b16 %v700
        %v1914 = vunpack.c.l.b16 %v701
        %v1915 = vunpack.c.h.b16 %v701
        %v1916 = vunpack.c.l.b16 %v702
        %v1917 = vunpack.c.h.b16 %v702
        %v1918 = vunpack.c.l.b16 %v703
        %v1919 = vunpack.c.h.b16 %v703
        %v1920 = vunpack.c.l.b16 %v704
        %v1921 = vunpack.c.h.b16 %v704
        %v1922 = vunpack.c.l.b16 %v705
        %v1923 = vunpack.c.h.b16 %v705
        %v1924 = vunpack.c.l.b16 %v706
        %v1925 = vunpack.c.h.b16 %v706
        %v1926 = vunpack.c.l.b16 %v707
        %v1927 = vunpack.c.h.b16 %v707
        %v1928 = vunpack.c.l.b16 %v708
        %v1929 = vunpack.c.h.b16 %v708
        %v1930 = vunpack.c.l.b16 %v709
        %v1931 = vunpack.c.h.b16 %v709
        %v1932 = vunpack.c.l.b16 %v710
        %v1933 = vunpack.c.h.b16 %v710
        %v1934 = vunpack.c.l.b16 %v711
        %v1935 = vunpack.c.h.b16 %v711
        %v1936 = vunpack.c.l.b16 %v712
        %v1937 = vunpack.c.h.b16 %v712
        %v1938 = vunpack.c.l.b16 %v713
        %v1939 = vunpack.c.h.b16 %v713
        %v1940 = vunpack.c.l.b16 %v714
        %v1941 = vunpack.c.h.b16 %v714
        %v1942 = vunpack.c.l.b16 %v715
        %v1943 = vunpack.c.h.b16 %v715
        %v1944 = vunpack.c.l.b16 %v716
        %v1945 = vunpack.c.h.b16 %v716
        %v1946 = vunpack.c.l.b16 %v717
        %v1947 = vunpack.c.h.b16 %v717
        %v1948 = vunpack.c.l.b16 %v718
        %v1949 = vunpack.c.h.b16 %v718
        %v1950 = vunpack.c.l.b16 %v719
        %v1951 = vunpack.c.h.b16 %v719
        %v1952 = vunpack.c.l.b16 %v720
        %v1953 = vunpack.c.h.b16 %v720
        %v1954 = vunpack.c.l.b16 %v721
        %v1955 = vunpack.c.h.b16 %v721
        %v1956 = vunpack.c.l.b16 %v722
        %v1957 = vunpack.c.h.b16 %v722
        %v1958 = vunpack.c.l.b16 %v723
        %v1959 = vunpack.c.h.b16 %v723
        %v1960 = vunpack.c.l.b16 %v724
        %v1961 = vunpack.c.h.b16 %v724
        %v1962 = vunpack.c.l.b16 %v725
        %v1963 = vunpack.c.h.b16 %v725
        %v1964 = vunpack.c.l.b16 %v726
        %v1965 = vunpack.c.h.b16 %v726
        %v1966 = vunpack.c.l.b16 %v727
        %v1967 = vunpack.c.h.b16 %v727
        %v1968 = vunpack.c.l.b16 %v728
        %v1969 = vunpack.c.h.b16 %v728
        %v1970 = vunpack.c.l.b16 %v729
        %v1971 = vunpack.c.h.b16 %v729
        %v1972 = vunpack.c.l.b16 %v730
        %v1973 = vunpack.c.h.b16 %v730
        %v1974 = vunpack.c.l.b16 %v731
        %v1975 = vunpack.c.h.b16 %v731
        %v1976 = vunpack.c.l.b16 %v732
        %v1977 = vunpack.c.h.b16 %v732
        %v1978 = vunpack.c.l.b16 %v733
        %v1979 = vunpack.c.h.b16 %v733
        %v1980 = vunpack.c.l.b16 %v734
        %v1981 = vunpack.c.h.b16 %v734
        %v1982 = vunpack.c.l.b16 %v735
        %v1983 = vunpack.c.h.b16 %v735
        %v1984 = vunpack.c.l.b16 %v736
        %v1985 = vunpack.c.h.b16 %v736
        %v1986 = vunpack.c.l.b16 %v737
        %v1987 = vunpack.c.h.b16 %v737
        %v1988 = vunpack.c.l.b16 %v738
        %v1989 = vunpack.c.h.b16 %v738
        %v1990 = vunpack.c.l.b16 %v739
        %v1991 = vunpack.c.h.b16 %v739
        %v1992 = vunpack.c.l.b16 %v740
        %v1993 = vunpack.c.h.b16 %v740
        %v1994 = vunpack.c.l.b16 %v741
        %v1995 = vunpack.c.h.b16 %v741
        %v1996 = vunpack.c.l.b16 %v742
        %v1997 = vunpack.c.h.b16 %v742
        %v1998 = vunpack.c.l.b16 %v743
        %v1999 = vunpack.c.h.b16 %v743
        %v2000 = vunpack.c.l.b16 %v744
        %v2001 = vunpack.c.h.b16 %v744
        %v2002 = vunpack.c.l.b16 %v745
        %v2003 = vunpack.c.h.b16 %v745
        %v2004 = vunpack.c.l.b16 %v746
        %v2005 = vunpack.c.h.b16 %v746
        %v2006 = vunpack.c.l.b16 %v747
        %v2007 = vunpack.c.h.b16 %v747
        %v2008 = vunpack.c.l.b16 %v748
        %v2009 = vunpack.c.h.b16 %v748
        %v2010 = vunpack.c.l.b16 %v749
        %v2011 = vunpack.c.h.b16 %v749
        %v2012 = vunpack.c.l.b16 %v750
        %v2013 = vunpack.c.h.b16 %v750
        %v2014 = vunpack.c.l.b16 %v751
        %v2015 = vunpack.c.h.b16 %v751
        %v2016 = vunpack.c.l.b16 %v752
        %v2017 = vunpack.c.h.b16 %v752
        %v2018 = vunpack.c.l.b16 %v753
        %v2019 = vunpack.c.h.b16 %v753
        %v2020 = vunpack.c.l.b16 %v754
        %v2021 = vunpack.c.h.b16 %v754
        %v2022 = vunpack.c.l.b16 %v755
        %v2023 = vunpack.c.h.b16 %v755
        %v2024 = vunpack.c.l.b16 %v756
        %v2025 = vunpack.c.h.b16 %v756
        %v2026 = vunpack.c.l.b16 %v757
        %v2027 = vunpack.c.h.b16 %v757
        %v2028 = vunpack.c.l.b16 %v758
        %v2029 = vunpack.c.h.b16 %v758
        %v2030 = vunpack.c.l.b16 %v759
        %v2031 = vunpack.c.h.b16 %v759
        %v2032 = vunpack.c.l.b16 %v760
        %v2033 = vunpack.c.h.b16 %v760
        %v2034 = vunpack.c.l.b16 %v761
        %v2035 = vunpack.c.h.b16 %v761
        %v2036 = vunpack.c.l.b16 %v762
        %v2037 = vunpack.c.h.b16 %v762
        %v2038 = vunpack.c.l.b16 %v763
        %v2039 = vunpack.c.h.b16 %v763
        %v2040 = vunpack.c.l.b16 %v764
        %v2041 = vunpack.c.h.b16 %v764
        %v2042 = vunpack.c.l.b16 %v765
        %v2043 = vunpack.c.h.b16 %v765
        %v2044 = vunpack.c.l.b16 %v766
        %v2045 = vunpack.c.h.b16 %v766
        %v2046 = vunpack.c.l.b16 %v767
        %v2047 = vunpack.c.h.b16 %v767
        %v2048 = vunpack.c.l.b16 %v768
        %v2049 = vunpack.c.h.b16 %v768
        %v2050 = vunpack.c.l.b16 %v769
        %v2051 = vunpack.c.h.b16 %v769
        %v2052 = vunpack.c.l.b16 %v770
        %v2053 = vunpack.c.h.b16 %v770
        %v2054 = vunpack.c.l.b16 %v771
        %v2055 = vunpack.c.h.b16 %v771
        %v2056 = vunpack.c.l.b16 %v772
        %v2057 = vunpack.c.h.b16 %v772
        %v2058 = vunpack.c.l.b16 %v773
        %v2059 = vunpack.c.h.b16 %v773
        %v2060 = vunpack.c.l.b16 %v774
        %v2061 = vunpack.c.h.b16 %v774
        %v2062 = vunpack.c.l.b16 %v775
        %v2063 = vunpack.c.h.b16 %v775
        %v2064 = vunpack.c.l.b16 %v776
        %v2065 = vunpack.c.h.b16 %v776
        %v2066 = vunpack.c.l.b16 %v777
        %v2067 = vunpack.c.h.b16 %v777
        %v2068 = vunpack.c.l.b16 %v778
        %v2069 = vunpack.c.h.b16 %v778
        %v2070 = vunpack.c.l.b16 %v779
        %v2071 = vunpack.c.h.b16 %v779
        %v2072 = vunpack.c.l.b16 %v780
        %v2073 = vunpack.c.h.b16 %v780
        %v2074 = vunpack.c.l.b16 %v781
        %v2075 = vunpack.c.h.b16 %v781
        %v2076 = vunpack.c.l.b16 %v782
        %v2077 = vunpack.c.h.b16 %v782
        %v2078 = vunpack.c.l.b16 %v783
        %v2079 = vunpack.c.h.b16 %v783
        %v2080 = vunpack.c.l.b16 %v784
        %v2081 = vunpack.c.h.b16 %v784
        %v2082 = vunpack.c.l.b16 %v785
        %v2083 = vunpack.c.h.b16 %v785
        %v2084 = vunpack.c.l.b16 %v786
        %v2085 = vunpack.c.h.b16 %v786
        %v2086 = vunpack.c.l.b16 %v787
        %v2087 = vunpack.c.h.b16 %v787
        %v2088 = vunpack.c.l.b16 %v788
        %v2089 = vunpack.c.h.b16 %v788
        %v2090 = vunpack.c.l.b16 %v789
        %v2091 = vunpack.c.h.b16 %v789
        %v2092 = vunpack.c.l.b16 %v790
        %v2093 = vunpack.c.h.b16 %v790
        %v2094 = vunpack.c.l.b16 %v791
        %v2095 = vunpack.c.h.b16 %v791
        %v2096 = vunpack.c.l.b16 %v792
        %v2097 = vunpack.c.h.b16 %v792
        %v2098 = vunpack.c.l.b16 %v793
        %v2099 = vunpack.c.h.b16 %v793
        %v2100 = vunpack.c.l.b16 %v794
        %v2101 = vunpack.c.h.b16 %v794
        %v2102 = vunpack.c.l.b16 %v795
        %v2103 = vunpack.c.h.b16 %v795
        %v2104 = vunpack.c.l.b16 %v796
        %v2105 = vunpack.c.h.b16 %v796
        %v2106 = vunpack.c.l.b16 %v797
        %v2107 = vunpack.c.h.b16 %v797
        %v2108 = vunpack.c.l.b16 %v798
        %v2109 = vunpack.c.h.b16 %v798
        %v2110 = vunpack.c.l.b16 %v799
        %v2111 = vunpack.c.h.b16 %v799
        %v2112 = vunpack.c.l.b16 %v800
        %v2113 = vunpack.c.h.b16 %v800
        %v2114 = vunpack.c.l.b16 %v801
        %v2115 = vunpack.c.h.b16 %v801
        %v2116 = vunpack.c.l.b16 %v802
        %v2117 = vunpack.c.h.b16 %v802
        %v2118 = vunpack.c.l.b16 %v803
        %v2119 = vunpack.c.h.b16 %v803
        %v2120 = vunpack.c.l.b16 %v804
        %v2121 = vunpack.c.h.b16 %v804
        %v2122 = vunpack.c.l.b16 %v805
        %v2123 = vunpack.c.h.b16 %v805
        %v2124 = vunpack.c.l.b16 %v806
        %v2125 = vunpack.c.h.b16 %v806
        %v2126 = vunpack.c.l.b16 %v807
        %v2127 = vunpack.c.h.b16 %v807
        %v2128 = vunpack.c.l.b16 %v808
        %v2129 = vunpack.c.h.b16 %v808
        %v2130 = vunpack.c.l.b16 %v809
        %v2131 = vunpack.c.h.b16 %v809
        %v2132 = vunpack.c.l.b16 %v810
        %v2133 = vunpack.c.h.b16 %v810
        %v2134 = vunpack.c.l.b16 %v811
        %v2135 = vunpack.c.h.b16 %v811
        %v2136 = vunpack.c.l.b16 %v812
        %v2137 = vunpack.c.h.b16 %v812
        %v2138 = vunpack.c.l.b16 %v813
        %v2139 = vunpack.c.h.b16 %v813
        %v2140 = vunpack.c.l.b16 %v814
        %v2141 = vunpack.c.h.b16 %v814
        %v2142 = vunpack.c.l.b16 %v815
        %v2143 = vunpack.c.h.b16 %v815
        %v2144 = vunpack.c.l.b16 %v816
        %v2145 = vunpack.c.h.b16 %v816
        %v2146 = vunpack.c.l.b16 %v817
        %v2147 = vunpack.c.h.b16 %v817
        %v2148 = vunpack.c.l.b16 %v818
        %v2149 = vunpack.c.h.b16 %v818
        %v2150 = vunpack.c.l.b16 %v819
        %v2151 = vunpack.c.h.b16 %v819
        %v2152 = vunpack.c.l.b16 %v820
        %v2153 = vunpack.c.h.b16 %v820
        %v2154 = vunpack.c.l.b16 %v821
        %v2155 = vunpack.c.h.b16 %v821
        %v2156 = vunpack.c.l.b16 %v822
        %v2157 = vunpack.c.h.b16 %v822
        %v2158 = vunpack.c.l.b16 %v823
        %v2159 = vunpack.c.h.b16 %v823
        %v2160 = vunpack.c.l.b16 %v824
        %v2161 = vunpack.c.h.b16 %v824
        %v2162 = vunpack.c.l.b16 %v825
        %v2163 = vunpack.c.h.b16 %v825
        %v2164 = vunpack.c.l.b16 %v826
        %v2165 = vunpack.c.h.b16 %v826
        %v2166 = vunpack.c.l.b16 %v827
        %v2167 = vunpack.c.h.b16 %v827
        %v2168 = vunpack.c.l.b16 %v828
        %v2169 = vunpack.c.h.b16 %v828
        %v2170 = vunpack.c.l.b16 %v829
        %v2171 = vunpack.c.h.b16 %v829
        %v2172 = vunpack.c.l.b16 %v830
        %v2173 = vunpack.c.h.b16 %v830
        %v2174 = vunpack.c.l.b16 %v831
        %v2175 = vunpack.c.h.b16 %v831
        %v2176 = vunpack.c.l.b16 %v832
        %v2177 = vunpack.c.h.b16 %v832
        %v2178 = vunpack.c.l.b16 %v833
        %v2179 = vunpack.c.h.b16 %v833
        %v2180 = vunpack.c.l.b16 %v834
        %v2181 = vunpack.c.h.b16 %v834
        %v2182 = vunpack.c.l.b16 %v835
        %v2183 = vunpack.c.h.b16 %v835
        %v2184 = vunpack.c.l.b16 %v836
        %v2185 = vunpack.c.h.b16 %v836
        %v2186 = vunpack.c.l.b16 %v837
        %v2187 = vunpack.c.h.b16 %v837
        %v2188 = vunpack.c.l.b16 %v838
        %v2189 = vunpack.c.h.b16 %v838
        %v2190 = vunpack.c.l.b16 %v839
        %v2191 = vunpack.c.h.b16 %v839
        %v2192 = vunpack.c.l.b16 %v840
        %v2193 = vunpack.c.h.b16 %v840
        %v2194 = vunpack.c.l.b16 %v841
        %v2195 = vunpack.c.h.b16 %v841
        %v2196 = vunpack.c.l.b16 %v842
        %v2197 = vunpack.c.h.b16 %v842
        %v2198 = vunpack.c.l.b16 %v843
        %v2199 = vunpack.c.h.b16 %v843
        %v2200 = vunpack.c.l.b16 %v844
        %v2201 = vunpack.c.h.b16 %v844
        %v2202 = vunpack.c.l.b16 %v845
        %v2203 = vunpack.c.h.b16 %v845
        %v2204 = vunpack.c.l.b16 %v846
        %v2205 = vunpack.c.h.b16 %v846
        %v2206 = vunpack.c.l.b16 %v847
        %v2207 = vunpack.c.h.b16 %v847
        %v2208 = vunpack.c.l.b16 %v848
        %v2209 = vunpack.c.h.b16 %v848
        %v2210 = vunpack.c.l.b16 %v849
        %v2211 = vunpack.c.h.b16 %v849
        %v2212 = vunpack.c.l.b16 %v850
        %v2213 = vunpack.c.h.b16 %v850
        %v2214 = vunpack.c.l.b16 %v851
        %v2215 = vunpack.c.h.b16 %v851
        %v2216 = vunpack.c.l.b16 %v852
        %v2217 = vunpack.c.h.b16 %v852
        %v2218 = vunpack.c.l.b16 %v853
        %v2219 = vunpack.c.h.b16 %v853
        %v2220 = vunpack.c.l.b16 %v854
        %v2221 = vunpack.c.h.b16 %v854
        %v2222 = vunpack.c.l.b16 %v855
        %v2223 = vunpack.c.h.b16 %v855
        %v2224 = vunpack.c.l.b16 %v856
        %v2225 = vunpack.c.h.b16 %v856
        %v2226 = vunpack.c.l.b16 %v857
        %v2227 = vunpack.c.h.b16 %v857
        %v2228 = vunpack.c.l.b16 %v858
        %v2229 = vunpack.c.h.b16 %v858
        %v2230 = vunpack.c.l.b16 %v859
        %v2231 = vunpack.c.h.b16 %v859
        %v2232 = vunpack.c.l.b16 %v860
        %v2233 = vunpack.c.h.b16 %v860
        %v2234 = vunpack.c.l.b16 %v861
        %v2235 = vunpack.c.h.b16 %v861
        %v2236 = vunpack.c.l.b16 %v862
        %v2237 = vunpack.c.h.b16 %v862
        %v2238 = vunpack.c.l.b16 %v863
        %v2239 = vunpack.c.h.b16 %v863
        %v2240 = vunpack.c.l.b16 %v864
        %v2241 = vunpack.c.h.b16 %v864
        %v2242 = vunpack.c.l.b16 %v865
        %v2243 = vunpack.c.h.b16 %v865
        %v2244 = vunpack.c.l.b16 %v866
        %v2245 = vunpack.c.h.b16 %v866
        %v2246 = vunpack.c.l.b16 %v867
        %v2247 = vunpack.c.h.b16 %v867
        %v2248 = vunpack.c.l.b16 %v868
        %v2249 = vunpack.c.h.b16 %v868
        %v2250 = vunpack.c.l.b16 %v869
        %v2251 = vunpack.c.h.b16 %v869
        %v2252 = vunpack.c.l.b16 %v870
        %v2253 = vunpack.c.h.b16 %v870
        %v2254 = vunpack.c.l.b16 %v871
        %v2255 = vunpack.c.h.b16 %v871
        %v2256 = vunpack.c.l.b16 %v872
        %v2257 = vunpack.c.h.b16 %v872
        %v2258 = vunpack.c.l.b16 %v873
        %v2259 = vunpack.c.h.b16 %v873
        %v2260 = vunpack.c.l.b16 %v874
        %v2261 = vunpack.c.h.b16 %v874
        %v2262 = vunpack.c.l.b16 %v875
        %v2263 = vunpack.c.h.b16 %v875
        %v2264 = vunpack.c.l.b16 %v876
        %v2265 = vunpack.c.h.b16 %v876
        %v2266 = vunpack.c.l.b16 %v877
        %v2267 = vunpack.c.h.b16 %v877
        %v2268 = vunpack.c.l.b16 %v878
        %v2269 = vunpack.c.h.b16 %v878
        %v2270 = vunpack.c.l.b16 %v879
        %v2271 = vunpack.c.h.b16 %v879
        %v2272 = vunpack.c.l.b16 %v880
        %v2273 = vunpack.c.h.b16 %v880
        %v2274 = vunpack.c.l.b16 %v881
        %v2275 = vunpack.c.h.b16 %v881
        %v2276 = vunpack.c.l.b16 %v882
        %v2277 = vunpack.c.h.b16 %v882
        %v2278 = vunpack.c.l.b16 %v883
        %v2279 = vunpack.c.h.b16 %v883
        %v2280 = vunpack.c.l.b16 %v884
        %v2281 = vunpack.c.h.b16 %v884
        %v2282 = vunpack.c.l.b16 %v885
        %v2283 = vunpack.c.h.b16 %v885
        %v2284 = vunpack.c.l.b16 %v886
        %v2285 = vunpack.c.h.b16 %v886
        %v2286 = vunpack.c.l.b16 %v887
        %v2287 = vunpack.c.h.b16 %v887
        %v2288 = vunpack.c.l.b16 %v888
        %v2289 = vunpack.c.h.b16 %v888
        %v2290 = vunpack.c.l.b16 %v889
        %v2291 = vunpack.c.h.b16 %v889
        %v2292 = vunpack.c.l.b16 %v890
        %v2293 = vunpack.c.h.b16 %v890
        %v2294 = vunpack.c.l.b16 %v891
        %v2295 = vunpack.c.h.b16 %v891
        %v2296 = vunpack.c.l.b16 %v892
        %v2297 = vunpack.c.h.b16 %v892
        %v2298 = vunpack.c.l.b16 %v893
        %v2299 = vunpack.c.h.b16 %v893
        %v2300 = vunpack.c.l.b16 %v894
        %v2301 = vunpack.c.h.b16 %v894
        %v2302 = vunpack.c.l.b16 %v895
        %v2303 = vunpack.c.h.b16 %v895
        %v2304 = vunpack.c.l.b16 %v896
        %v2305 = vunpack.c.h.b16 %v896
        %v2306 = vunpack.c.l.b16 %v897
        %v2307 = vunpack.c.h.b16 %v897
        %v2308 = vunpack.c.l.b16 %v898
        %v2309 = vunpack.c.h.b16 %v898
        %v2310 = vunpack.c.l.b16 %v899
        %v2311 = vunpack.c.h.b16 %v899
        %v2312 = vunpack.c.l.b16 %v900
        %v2313 = vunpack.c.h.b16 %v900
        %v2314 = vunpack.c.l.b16 %v901
        %v2315 = vunpack.c.h.b16 %v901
        %v2316 = vunpack.c.l.b16 %v902
        %v2317 = vunpack.c.h.b16 %v902
        %v2318 = vunpack.c.l.b16 %v903
        %v2319 = vunpack.c.h.b16 %v903
        %v2320 = vunpack.c.l.b16 %v904
        %v2321 = vunpack.c.h.b16 %v904
        %v2322 = vunpack.c.l.b16 %v905
        %v2323 = vunpack.c.h.b16 %v905
        %v2324 = vunpack.c.l.b16 %v906
        %v2325 = vunpack.c.h.b16 %v906
        %v2326 = vunpack.c.l.b16 %v907
        %v2327 = vunpack.c.h.b16 %v907
        %v2328 = vunpack.c.l.b16 %v908
        %v2329 = vunpack.c.h.b16 %v908
        %v2330 = vunpack.c.l.b16 %v909
        %v2331 = vunpack.c.h.b16 %v909
        %v2332 = vunpack.c.l.b16 %v910
        %v2333 = vunpack.c.h.b16 %v910
        %v2334 = vunpack.c.l.b16 %v911
        %v2335 = vunpack.c.h.b16 %v911
        %v2336 = vunpack.c.l.b16 %v912
        %v2337 = vunpack.c.h.b16 %v912
        %v2338 = vunpack.c.l.b16 %v913
        %v2339 = vunpack.c.h.b16 %v913
        %v2340 = vunpack.c.l.b16 %v914
        %v2341 = vunpack.c.h.b16 %v914
        %v2342 = vunpack.c.l.b16 %v915
        %v2343 = vunpack.c.h.b16 %v915
        %v2344 = vunpack.c.l.b16 %v916
        %v2345 = vunpack.c.h.b16 %v916
        %v2346 = vunpack.c.l.b16 %v917
        %v2347 = vunpack.c.h.b16 %v917
        %v2348 = vunpack.c.l.b16 %v918
        %v2349 = vunpack.c.h.b16 %v918
        %v2350 = vunpack.c.l.b16 %v919
        %v2351 = vunpack.c.h.b16 %v919
        %v2352 = vunpack.c.l.b16 %v920
        %v2353 = vunpack.c.h.b16 %v920
        %v2354 = vunpack.c.l.b16 %v921
        %v2355 = vunpack.c.h.b16 %v921
        %v2356 = vunpack.c.l.b16 %v922
        %v2357 = vunpack.c.h.b16 %v922
        %v2358 = vunpack.c.l.b16 %v923
        %v2359 = vunpack.c.h.b16 %v923
        %v2360 = vunpack.c.l.b16 %v924
        %v2361 = vunpack.c.h.b16 %v924
        %v2362 = vunpack.c.l.b16 %v925
        %v2363 = vunpack.c.h.b16 %v925
        %v2364 = vunpack.c.l.b16 %v926
        %v2365 = vunpack.c.h.b16 %v926
        %v2366 = vunpack.c.l.b16 %v927
        %v2367 = vunpack.c.h.b16 %v927
        %v2368 = vunpack.c.l.b16 %v928
        %v2369 = vunpack.c.h.b16 %v928
        %v2370 = vunpack.c.l.b16 %v929
        %v2371 = vunpack.c.h.b16 %v929
        %v2372 = vunpack.c.l.b16 %v930
        %v2373 = vunpack.c.h.b16 %v930
        %v2374 = vunpack.c.l.b16 %v931
        %v2375 = vunpack.c.h.b16 %v931
        %v2376 = vunpack.c.l.b16 %v932
        %v2377 = vunpack.c.h.b16 %v932
        %v2378 = vunpack.c.l.b16 %v933
        %v2379 = vunpack.c.h.b16 %v933
        %v2380 = vunpack.c.l.b16 %v934
        %v2381 = vunpack.c.h.b16 %v934
        %v2382 = vunpack.c.l.b16 %v935
        %v2383 = vunpack.c.h.b16 %v935
        %v2384 = vunpack.c.l.b16 %v936
        %v2385 = vunpack.c.h.b16 %v936
        %v2386 = vunpack.c.l.b16 %v937
        %v2387 = vunpack.c.h.b16 %v937
        %v2388 = vunpack.c.l.b16 %v938
        %v2389 = vunpack.c.h.b16 %v938
        %v2390 = vunpack.c.l.b16 %v939
        %v2391 = vunpack.c.h.b16 %v939
        %v2392 = vunpack.c.l.b16 %v940
        %v2393 = vunpack.c.h.b16 %v940
        %v2394 = vunpack.c.l.b16 %v941
        %v2395 = vunpack.c.h.b16 %v941
        %v2396 = vunpack.c.l.b16 %v942
        %v2397 = vunpack.c.h.b16 %v942
        %v2398 = vunpack.c.l.b16 %v943
        %v2399 = vunpack.c.h.b16 %v943
        %v2400 = vunpack.c.l.b16 %v944
        %v2401 = vunpack.c.h.b16 %v944
        %v2402 = vunpack.c.l.b16 %v945
        %v2403 = vunpack.c.h.b16 %v945
        %v2404 = vunpack.c.l.b16 %v946
        %v2405 = vunpack.c.h.b16 %v946
        %v2406 = vunpack.c.l.b16 %v947
        %v2407 = vunpack.c.h.b16 %v947
        %v2408 = vunpack.c.l.b16 %v948
        %v2409 = vunpack.c.h.b16 %v948
        %v2410 = vunpack.c.l.b16 %v949
        %v2411 = vunpack.c.h.b16 %v949
        %v2412 = vunpack.c.l.b16 %v950
        %v2413 = vunpack.c.h.b16 %v950
        %v2414 = vunpack.c.l.b16 %v951
        %v2415 = vunpack.c.h.b16 %v951
        %v2416 = vunpack.c.l.b16 %v952
        %v2417 = vunpack.c.h.b16 %v952
        %v2418 = vunpack.c.l.b16 %v953
        %v2419 = vunpack.c.h.b16 %v953
        %v2420 = vunpack.c.l.b16 %v954
        %v2421 = vunpack.c.h.b16 %v954
        %v2422 = vunpack.c.l.b16 %v955
        %v2423 = vunpack.c.h.b16 %v955
        %v2424 = vunpack.c.l.b16 %v956
        %v2425 = vunpack.c.h.b16 %v956
        %v2426 = vunpack.c.l.b16 %v957
        %v2427 = vunpack.c.h.b16 %v957
        %v2428 = vunpack.c.l.b16 %v958
        %v2429 = vunpack.c.h.b16 %v958
        %v2430 = vunpack.c.l.b16 %v959
        %v2431 = vunpack.c.h.b16 %v959
        %v2432 = vunpack.c.l.b16 %v960
        %v2433 = vunpack.c.h.b16 %v960
        %v2434 = vunpack.c.l.b16 %v961
        %v2435 = vunpack.c.h.b16 %v961
        %v2436 = vunpack.c.l.b16 %v962
        %v2437 = vunpack.c.h.b16 %v962
        %v2438 = vunpack.c.l.b16 %v963
        %v2439 = vunpack.c.h.b16 %v963
        %v2440 = vunpack.c.l.b16 %v964
        %v2441 = vunpack.c.h.b16 %v964
        %v2442 = vunpack.c.l.b16 %v965
        %v2443 = vunpack.c.h.b16 %v965
        %v2444 = vunpack.c.l.b16 %v966
        %v2445 = vunpack.c.h.b16 %v966
        %v2446 = vunpack.c.l.b16 %v967
        %v2447 = vunpack.c.h.b16 %v967
        %v2448 = vunpack.c.l.b16 %v968
        %v2449 = vunpack.c.h.b16 %v968
        %v2450 = vunpack.c.l.b16 %v969
        %v2451 = vunpack.c.h.b16 %v969
        %v2452 = vunpack.c.l.b16 %v970
        %v2453 = vunpack.c.h.b16 %v970
        %v2454 = vunpack.c.l.b16 %v971
        %v2455 = vunpack.c.h.b16 %v971
        %v2456 = vunpack.c.l.b16 %v972
        %v2457 = vunpack.c.h.b16 %v972
        %v2458 = vunpack.c.l.b16 %v973
        %v2459 = vunpack.c.h.b16 %v973
        %v2460 = vunpack.c.l.b16 %v974
        %v2461 = vunpack.c.h.b16 %v974
        %v2462 = vunpack.c.l.b16 %v975
        %v2463 = vunpack.c.h.b16 %v975
        %v2464 = vunpack.c.l.b16 %v976
        %v2465 = vunpack.c.h.b16 %v976
        %v2466 = vunpack.c.l.b16 %v977
        %v2467 = vunpack.c.h.b16 %v977
        %v2468 = vunpack.c.l.b16 %v978
        %v2469 = vunpack.c.h.b16 %v978
        %v2470 = vunpack.c.l.b16 %v979
        %v2471 = vunpack.c.h.b16 %v979
        %v2472 = vunpack.c.l.b16 %v980
        %v2473 = vunpack.c.h.b16 %v980
        %v2474 = vunpack.c.l.b16 %v981
        %v2475 = vunpack.c.h.b16 %v981
        %v2476 = vunpack.c.l.b16 %v982
        %v2477 = vunpack.c.h.b16 %v982
        %v2478 = vunpack.c.l.b16 %v983
        %v2479 = vunpack.c.h.b16 %v983
        %v2480 = vunpack.c.l.b16 %v984
        %v2481 = vunpack.c.h.b16 %v984
        %v2482 = vunpack.c.l.b16 %v985
        %v2483 = vunpack.c.h.b16 %v985
        %v2484 = vunpack.c.l.b16 %v986
        %v2485 = vunpack.c.h.b16 %v986
        %v2486 = vunpack.c.l.b16 %v987
        %v2487 = vunpack.c.h.b16 %v987
        %v2488 = vunpack.c.l.b16 %v988
        %v2489 = vunpack.c.h.b16 %v988
        %v2490 = vunpack.c.l.b16 %v989
        %v2491 = vunpack.c.h.b16 %v989
        %v2492 = vunpack.c.l.b16 %v990
        %v2493 = vunpack.c.h.b16 %v990
        %v2494 = vunpack.c.l.b16 %v991
        %v2495 = vunpack.c.h.b16 %v991
        %v2496 = vunpack.c.l.b16 %v992
        %v2497 = vunpack.c.h.b16 %v992
        %v2498 = vunpack.c.l.b16 %v993
        %v2499 = vunpack.c.h.b16 %v993
        %v2500 = vunpack.c.l.b16 %v994
        %v2501 = vunpack.c.h.b16 %v994
        %v2502 = vunpack.c.l.b16 %v995
        %v2503 = vunpack.c.h.b16 %v995
        %v2504 = vunpack.c.l.b16 %v996
        %v2505 = vunpack.c.h.b16 %v996
        %v2506 = vunpack.c.l.b16 %v997
        %v2507 = vunpack.c.h.b16 %v997
        %v2508 = vunpack.c.l.b16 %v998
        %v2509 = vunpack.c.h.b16 %v998
        %v2510 = vunpack.c.l.b16 %v999
        %v2511 = vunpack.c.h.b16 %v999
        %v2512 = vunpack.c.l.b16 %v1000
        %v2513 = vunpack.c.h.b16 %v1000
        %v2514 = vunpack.c.l.b16 %v1001
        %v2515 = vunpack.c.h.b16 %v1001
        %v2516 = vunpack.c.l.b16 %v1002
        %v2517 = vunpack.c.h.b16 %v1002
        %v2518 = vunpack.c.l.b16 %v1003
        %v2519 = vunpack.c.h.b16 %v1003
        %v2520 = vunpack.c.l.b16 %v1004
        %v2521 = vunpack.c.h.b16 %v1004
        %v2522 = vunpack.c.l.b16 %v1005
        %v2523 = vunpack.c.h.b16 %v1005
        %v2524 = vunpack.c.l.b16 %v1006
        %v2525 = vunpack.c.h.b16 %v1006
        %v2526 = vunpack.c.l.b16 %v1007
        %v2527 = vunpack.c.h.b16 %v1007
        %v2528 = vunpack.c.l.b16 %v1008
        %v2529 = vunpack.c.h.b16 %v1008
        %v2530 = vunpack.c.l.b16 %v1009
        %v2531 = vunpack.c.h.b16 %v1009
        %v2532 = vunpack.c.l.b16 %v1010
        %v2533 = vunpack.c.h.b16 %v1010
        %v2534 = vunpack.c.l.b16 %v1011
        %v2535 = vunpack.c.h.b16 %v1011
        %v2536 = vunpack.c.l.b16 %v1012
        %v2537 = vunpack.c.h.b16 %v1012
        %v2538 = vunpack.c.l.b16 %v1013
        %v2539 = vunpack.c.h.b16 %v1013
        %v2540 = vunpack.c.l.b16 %v1014
        %v2541 = vunpack.c.h.b16 %v1014
        %v2542 = vunpack.c.l.b16 %v1015
        %v2543 = vunpack.c.h.b16 %v1015
        %v2544 = vunpack.c.l.b16 %v1016
        %v2545 = vunpack.c.h.b16 %v1016
        %v2546 = vunpack.c.l.b16 %v1017
        %v2547 = vunpack.c.h.b16 %v1017
        %v2548 = vunpack.c.l.b16 %v1018
        %v2549 = vunpack.c.h.b16 %v1018
        %v2550 = vunpack.c.l.b16 %v1019
        %v2551 = vunpack.c.h.b16 %v1019
        %v2552 = vunpack.c.l.b16 %v1020
        %v2553 = vunpack.c.h.b16 %v1020
        %v2554 = vunpack.c.l.b16 %v1021
        %v2555 = vunpack.c.h.b16 %v1021
        %v2556 = vunpack.c.l.b16 %v1022
        %v2557 = vunpack.c.h.b16 %v1022
        %v2558 = vunpack.c.l.b16 %v1023
        %v2559 = vunpack.c.h.b16 %v1023
        %v2560 = vunpack.c.l.b16 %v1024
        %v2561 = vunpack.c.h.b16 %v1024
        %v2562 = vunpack.c.l.b16 %v1025
        %v2563 = vunpack.c.h.b16 %v1025
        %v2564 = vunpack.c.l.b16 %v1026
        %v2565 = vunpack.c.h.b16 %v1026
        %v2566 = vunpack.c.l.b16 %v1027
        %v2567 = vunpack.c.h.b16 %v1027
        %v2568 = vunpack.c.l.b16 %v1028
        %v2569 = vunpack.c.h.b16 %v1028
        %v2570 = vunpack.c.l.b16 %v1029
        %v2571 = vunpack.c.h.b16 %v1029
        %v2572 = vunpack.c.l.b16 %v1030
        %v2573 = vunpack.c.h.b16 %v1030
        %v2574 = vunpack.c.l.b16 %v1031
        %v2575 = vunpack.c.h.b16 %v1031
        %v2576 = vunpack.c.l.b16 %v1032
        %v2577 = vunpack.c.h.b16 %v1032
        %v2578 = vunpack.c.l.b16 %v1033
        %v2579 = vunpack.c.h.b16 %v1033
        %v2580 = vunpack.c.l.b16 %v1034
        %v2581 = vunpack.c.h.b16 %v1034
        %v2582 = vunpack.c.l.b16 %v1035
        %v2583 = vunpack.c.h.b16 %v1035
        %v2584 = vunpack.c.l.b16 %v1036
        %v2585 = vunpack.c.h.b16 %v1036
        %v2586 = vunpack.c.l.b16 %v1037
        %v2587 = vunpack.c.h.b16 %v1037
        %v2588 = vunpack.c.l.b16 %v1038
        %v2589 = vunpack.c.h.b16 %v1038
        %v2590 = vunpack.c.l.b16 %v1039
        %v2591 = vunpack.c.h.b16 %v1039
        %v2592 = vunpack.c.l.b16 %v1040
        %v2593 = vunpack.c.h.b16 %v1040
        %v2594 = vunpack.c.l.b16 %v1041
        %v2595 = vunpack.c.h.b16 %v1041
        %v2596 = vunpack.c.l.b16 %v1042
        %v2597 = vunpack.c.h.b16 %v1042
        %v2598 = vunpack.c.l.b16 %v1043
        %v2599 = vunpack.c.h.b16 %v1043
        %v2600 = vunpack.c.l.b16 %v1044
        %v2601 = vunpack.c.h.b16 %v1044
        %v2602 = vunpack.c.l.b16 %v1045
        %v2603 = vunpack.c.h.b16 %v1045
        %v2604 = vpack.c.b16 %v1584, %v1580
        %v2605 = vpack.c.b16 %v1585, %v1581
        %v2606 = vpack.c.b16 %v1586, %v1582
        %v2607 = vpack.c.b16 %v1587, %v1583
        %v2608 = vpack.c.b16 %v1592, %v1588
        %v2609 = vpack.c.b16 %v1593, %v1589
        %v2610 = vpack.c.b16 %v1594, %v1590
        %v2611 = vpack.c.b16 %v1595, %v1591
        %v2612 = vpack.c.b16 %v1600, %v1596
        %v2613 = vpack.c.b16 %v1601, %v1597
        %v2614 = vpack.c.b16 %v1602, %v1598
        %v2615 = vpack.c.b16 %v1603, %v1599
        %v2616 = vpack.c.b16 %v1608, %v1604
        %v2617 = vpack.c.b16 %v1609, %v1605
        %v2618 = vpack.c.b16 %v1610, %v1606
        %v2619 = vpack.c.b16 %v1611, %v1607
        %v2620 = vpack.c.b16 %v1616, %v1612
        %v2621 = vpack.c.b16 %v1617, %v1613
        %v2622 = vpack.c.b16 %v1618, %v1614
        %v2623 = vpack.c.b16 %v1619, %v1615
        %v2624 = vpack.c.b16 %v1624, %v1620
        %v2625 = vpack.c.b16 %v1625, %v1621
        %v2626 = vpack.c.b16 %v1626, %v1622
        %v2627 = vpack.c.b16 %v1627, %v1623
        %v2628 = vpack.c.b16 %v1632, %v1628
        %v2629 = vpack.c.b16 %v1633, %v1629
        %v2630 = vpack.c.b16 %v1634, %v1630
        %v2631 = vpack.c.b16 %v1635, %v1631
        %v2632 = vpack.c.b16 %v1640, %v1636
        %v2633 = vpack.c.b16 %v1641, %v1637
        %v2634 = vpack.c.b16 %v1642, %v1638
        %v2635 = vpack.c.b16 %v1643, %v1639
        %v2636 = vpack.c.b16 %v1648, %v1644
        %v2637 = vpack.c.b16 %v1649, %v1645
        %v2638 = vpack.c.b16 %v1650, %v1646
        %v2639 = vpack.c.b16 %v1651, %v1647
        %v2640 = vpack.c.b16 %v1656, %v1652
        %v2641 = vpack.c.b16 %v1657, %v1653
        %v2642 = vpack.c.b16 %v1658, %v1654
        %v2643 = vpack.c.b16 %v1659, %v1655
        %v2644 = vpack.c.b16 %v1664, %v1660
        %v2645 = vpack.c.b16 %v1665, %v1661
        %v2646 = vpack.c.b16 %v1666, %v1662
        %v2647 = vpack.c.b16 %v1667, %v1663
        %v2648 = vpack.c.b16 %v1672, %v1668
        %v2649 = vpack.c.b16 %v1673, %v1669
        %v2650 = vpack.c.b16 %v1674, %v1670
        %v2651 = vpack.c.b16 %v1675, %v1671
        %v2652 = vpack.c.b16 %v1680, %v1676
        %v2653 = vpack.c.b16 %v1681, %v1677
        %v2654 = vpack.c.b16 %v1682, %v1678
        %v2655 = vpack.c.b16 %v1683, %v1679
        %v2656 = vpack.c.b16 %v1688, %v1684
        %v2657 = vpack.c.b16 %v1689, %v1685
        %v2658 = vpack.c.b16 %v1690, %v1686
        %v2659 = vpack.c.b16 %v1691, %v1687
        %v2660 = vpack.c.b16 %v1696, %v1692
        %v2661 = vpack.c.b16 %v1697, %v1693
        %v2662 = vpack.c.b16 %v1698, %v1694
        %v2663 = vpack.c.b16 %v1699, %v1695
        %v2664 = vpack.c.b16 %v1704, %v1700
        %v2665 = vpack.c.b16 %v1705, %v1701
        %v2666 = vpack.c.b16 %v1706, %v1702
        %v2667 = vpack.c.b16 %v1707, %v1703
        %v2668 = vpack.c.b16 %v1712, %v1708
        %v2669 = vpack.c.b16 %v1713, %v1709
        %v2670 = vpack.c.b16 %v1714, %v1710
        %v2671 = vpack.c.b16 %v1715, %v1711
        %v2672 = vpack.c.b16 %v1720, %v1716
        %v2673 = vpack.c.b16 %v1721, %v1717
        %v2674 = vpack.c.b16 %v1722, %v1718
        %v2675 = vpack.c.b16 %v1723, %v1719
        %v2676 = vpack.c.b16 %v1728, %v1724
        %v2677 = vpack.c.b16 %v1729, %v1725
        %v2678 = vpack.c.b16 %v1730, %v1726
        %v2679 = vpack.c.b16 %v1731, %v1727
        %v2680 = vpack.c.b16 %v1736, %v1732
        %v2681 = vpack.c.b16 %v1737, %v1733
        %v2682 = vpack.c.b16 %v1738, %v1734
        %v2683 = vpack.c.b16 %v1739, %v1735
        %v2684 = vpack.c.b16 %v1744, %v1740
        %v2685 = vpack.c.b16 %v1745, %v1741
        %v2686 = vpack.c.b16 %v1746, %v1742
        %v2687 = vpack.c.b16 %v1747, %v1743
        %v2688 = vpack.c.b16 %v1752, %v1748
        %v2689 = vpack.c.b16 %v1753, %v1749
        %v2690 = vpack.c.b16 %v1754, %v1750
        %v2691 = vpack.c.b16 %v1755, %v1751
        %v2692 = vpack.c.b16 %v1760, %v1756
        %v2693 = vpack.c.b16 %v1761, %v1757
        %v2694 = vpack.c.b16 %v1762, %v1758
        %v2695 = vpack.c.b16 %v1763, %v1759
        %v2696 = vpack.c.b16 %v1768, %v1764
        %v2697 = vpack.c.b16 %v1769, %v1765
        %v2698 = vpack.c.b16 %v1770, %v1766
        %v2699 = vpack.c.b16 %v1771, %v1767
        %v2700 = vpack.c.b16 %v1776, %v1772
        %v2701 = vpack.c.b16 %v1777, %v1773
        %v2702 = vpack.c.b16 %v1778, %v1774
        %v2703 = vpack.c.b16 %v1779, %v1775
        %v2704 = vpack.c.b16 %v1784, %v1780
        %v2705 = vpack.c.b16 %v1785, %v1781
        %v2706 = vpack.c.b16 %v1786, %v1782
        %v2707 = vpack.c.b16 %v1787, %v1783
        %v2708 = vpack.c.b16 %v1792, %v1788
        %v2709 = vpack.c.b16 %v1793, %v1789
        %v2710 = vpack.c.b16 %v1794, %v1790
        %v2711 = vpack.c.b16 %v1795, %v1791
        %v2712 = vpack.c.b16 %v1800, %v1796
        %v2713 = vpack.c.b16 %v1801, %v1797
        %v2714 = vpack.c.b16 %v1802, %v1798
        %v2715 = vpack.c.b16 %v1803, %v1799
        %v2716 = vpack.c.b16 %v1808, %v1804
        %v2717 = vpack.c.b16 %v1809, %v1805
        %v2718 = vpack.c.b16 %v1810, %v1806
        %v2719 = vpack.c.b16 %v1811, %v1807
        %v2720 = vpack.c.b16 %v1816, %v1812
        %v2721 = vpack.c.b16 %v1817, %v1813
        %v2722 = vpack.c.b16 %v1818, %v1814
        %v2723 = vpack.c.b16 %v1819, %v1815
        %v2724 = vpack.c.b16 %v1824, %v1820
        %v2725 = vpack.c.b16 %v1825, %v1821
        %v2726 = vpack.c.b16 %v1826, %v1822
        %v2727 = vpack.c.b16 %v1827, %v1823
        %v2728 = vpack.c.b16 %v1832, %v1828
        %v2729 = vpack.c.b16 %v1833, %v1829
        %v2730 = vpack.c.b16 %v1834, %v1830
        %v2731 = vpack.c.b16 %v1835, %v1831
        %v2732 = vpack.c.b16 %v1840, %v1836
        %v2733 = vpack.c.b16 %v1841, %v1837
        %v2734 = vpack.c.b16 %v1842, %v1838
        %v2735 = vpack.c.b16 %v1843, %v1839
        %v2736 = vpack.c.b16 %v1848, %v1844
        %v2737 = vpack.c.b16 %v1849, %v1845
        %v2738 = vpack.c.b16 %v1850, %v1846
        %v2739 = vpack.c.b16 %v1851, %v1847
        %v2740 = vpack.c.b16 %v1856, %v1852
        %v2741 = vpack.c.b16 %v1857, %v1853
        %v2742 = vpack.c.b16 %v1858, %v1854
        %v2743 = vpack.c.b16 %v1859, %v1855
        %v2744 = vpack.c.b16 %v1864, %v1860
        %v2745 = vpack.c.b16 %v1865, %v1861
        %v2746 = vpack.c.b16 %v1866, %v1862
        %v2747 = vpack.c.b16 %v1867, %v1863
        %v2748 = vpack.c.b16 %v1872, %v1868
        %v2749 = vpack.c.b16 %v1873, %v1869
        %v2750 = vpack.c.b16 %v1874, %v1870
        %v2751 = vpack.c.b16 %v1875, %v1871
        %v2752 = vpack.c.b16 %v1880, %v1876
        %v2753 = vpack.c.b16 %v1881, %v1877
        %v2754 = vpack.c.b16 %v1882, %v1878
        %v2755 = vpack.c.b16 %v1883, %v1879
        %v2756 = vpack.c.b16 %v1888, %v1884
        %v2757 = vpack.c.b16 %v1889, %v1885
        %v2758 = vpack.c.b16 %v1890, %v1886
        %v2759 = vpack.c.b16 %v1891, %v1887
        %v2760 = vpack.c.b16 %v1896, %v1892
        %v2761 = vpack.c.b16 %v1897, %v1893
        %v2762 = vpack.c.b16 %v1898, %v1894
        %v2763 = vpack.c.b16 %v1899, %v1895
        %v2764 = vpack.c.b16 %v1904, %v1900
        %v2765 = vpack.c.b16 %v1905, %v1901
        %v2766 = vpack.c.b16 %v1906, %v1902
        %v2767 = vpack.c.b16 %v1907, %v1903
        %v2768 = vpack.c.b16 %v1912, %v1908
        %v2769 = vpack.c.b16 %v1913, %v1909
        %v2770 = vpack.c.b16 %v1914, %v1910
        %v2771 = vpack.c.b16 %v1915, %v1911
        %v2772 = vpack.c.b16 %v1920, %v1916
        %v2773 = vpack.c.b16 %v1921, %v1917
        %v2774 = vpack.c.b16 %v1922, %v1918
        %v2775 = vpack.c.b16 %v1923, %v1919
        %v2776 = vpack.c.b16 %v1928, %v1924
        %v2777 = vpack.c.b16 %v1929, %v1925
        %v2778 = vpack.c.b16 %v1930, %v1926
        %v2779 = vpack.c.b16 %v1931, %v1927
        %v2780 = vpack.c.b16 %v1936, %v1932
        %v2781 = vpack.c.b16 %v1937, %v1933
        %v2782 = vpack.c.b16 %v1938, %v1934
        %v2783 = vpack.c.b16 %v1939, %v1935
        %v2784 = vpack.c.b16 %v1944, %v1940
        %v2785 = vpack.c.b16 %v1945, %v1941
        %v2786 = vpack.c.b16 %v1946, %v1942
        %v2787 = vpack.c.b16 %v1947, %v1943
        %v2788 = vpack.c.b16 %v1952, %v1948
        %v2789 = vpack.c.b16 %v1953, %v1949
        %v2790 = vpack.c.b16 %v1954, %v1950
        %v2791 = vpack.c.b16 %v1955, %v1951
        %v2792 = vpack.c.b16 %v1960, %v1956
        %v2793 = vpack.c.b16 %v1961, %v1957
        %v2794 = vpack.c.b16 %v1962, %v1958
        %v2795 = vpack.c.b16 %v1963, %v1959
        %v2796 = vpack.c.b16 %v1968, %v1964
        %v2797 = vpack.c.b16 %v1969, %v1965
        %v2798 = vpack.c.b16 %v1970, %v1966
        %v2799 = vpack.c.b16 %v1971, %v1967
        %v2800 = vpack.c.b16 %v1976, %v1972
        %v2801 = vpack.c.b16 %v1977, %v1973
        %v2802 = vpack.c.b16 %v1978, %v1974
        %v2803 = vpack.c.b16 %v1979, %v1975
        %v2804 = vpack.c.b16 %v1984, %v1980
        %v2805 = vpack.c.b16 %v1985, %v1981
        %v2806 = vpack.c.b16 %v1986, %v1982
        %v2807 = vpack.c.b16 %v1987, %v1983
        %v2808 = vpack.c.b16 %v1992, %v1988
        %v2809 = vpack.c.b16 %v1993, %v1989
        %v2810 = vpack.c.b16 %v1994, %v1990
        %v2811 = vpack.c.b16 %v1995, %v1991
        %v2812 = vpack.c.b16 %v2000, %v1996
        %v2813 = vpack.c.b16 %v2001, %v1997
        %v2814 = vpack.c.b16 %v2002, %v1998
        %v2815 = vpack.c.b16 %v2003, %v1999
        %v2816 = vpack.c.b16 %v2008, %v2004
        %v2817 = vpack.c.b16 %v2009, %v2005
        %v2818 = vpack.c.b16 %v2010, %v2006
        %v2819 = vpack.c.b16 %v2011, %v2007
        %v2820 = vpack.c.b16 %v2016, %v2012
        %v2821 = vpack.c.b16 %v2017, %v2013
        %v2822 = vpack.c.b16 %v2018, %v2014
        %v2823 = vpack.c.b16 %v2019, %v2015
        %v2824 = vpack.c.b16 %v2024, %v2020
        %v2825 = vpack.c.b16 %v2025, %v2021
        %v2826 = vpack.c.b16 %v2026, %v2022
        %v2827 = vpack.c.b16 %v2027, %v2023
        %v2828 = vpack.c.b16 %v2032, %v2028
        %v2829 = vpack.c.b16 %v2033, %v2029
        %v2830 = vpack.c.b16 %v2034, %v2030
        %v2831 = vpack.c.b16 %v2035, %v2031
        %v2832 = vpack.c.b16 %v2040, %v2036
        %v2833 = vpack.c.b16 %v2041, %v2037
        %v2834 = vpack.c.b16 %v2042, %v2038
        %v2835 = vpack.c.b16 %v2043, %v2039
        %v2836 = vpack.c.b16 %v2048, %v2044
        %v2837 = vpack.c.b16 %v2049, %v2045
        %v2838 = vpack.c.b16 %v2050, %v2046
        %v2839 = vpack.c.b16 %v2051, %v2047
        %v2840 = vpack.c.b16 %v2056, %v2052
        %v2841 = vpack.c.b16 %v2057, %v2053
        %v2842 = vpack.c.b16 %v2058, %v2054
        %v2843 = vpack.c.b16 %v2059, %v2055
        %v2844 = vpack.c.b16 %v2064, %v2060
        %v2845 = vpack.c.b16 %v2065, %v2061
        %v2846 = vpack.c.b16 %v2066, %v2062
        %v2847 = vpack.c.b16 %v2067, %v2063
        %v2848 = vpack.c.b16 %v2072, %v2068
        %v2849 = vpack.c.b16 %v2073, %v2069
        %v2850 = vpack.c.b16 %v2074, %v2070
        %v2851 = vpack.c.b16 %v2075, %v2071
        %v2852 = vpack.c.b16 %v2080, %v2076
        %v2853 = vpack.c.b16 %v2081, %v2077
        %v2854 = vpack.c.b16 %v2082, %v2078
        %v2855 = vpack.c.b16 %v2083, %v2079
        %v2856 = vpack.c.b16 %v2088, %v2084
        %v2857 = vpack.c.b16 %v2089, %v2085
        %v2858 = vpack.c.b16 %v2090, %v2086
        %v2859 = vpack.c.b16 %v2091, %v2087
        %v2860 = vpack.c.b16 %v2096, %v2092
        %v2861 = vpack.c.b16 %v2097, %v2093
        %v2862 = vpack.c.b16 %v2098, %v2094
        %v2863 = vpack.c.b16 %v2099, %v2095
        %v2864 = vpack.c.b16 %v2104, %v2100
        %v2865 = vpack.c.b16 %v2105, %v2101
        %v2866 = vpack.c.b16 %v2106, %v2102
        %v2867 = vpack.c.b16 %v2107, %v2103
        %v2868 = vpack.c.b16 %v2112, %v2108
        %v2869 = vpack.c.b16 %v2113, %v2109
        %v2870 = vpack.c.b16 %v2114, %v2110
        %v2871 = vpack.c.b16 %v2115, %v2111
        %v2872 = vpack.c.b16 %v2120, %v2116
        %v2873 = vpack.c.b16 %v2121, %v2117
        %v2874 = vpack.c.b16 %v2122, %v2118
        %v2875 = vpack.c.b16 %v2123, %v2119
        %v2876 = vpack.c.b16 %v2128, %v2124
        %v2877 = vpack.c.b16 %v2129, %v2125
        %v2878 = vpack.c.b16 %v2130, %v2126
        %v2879 = vpack.c.b16 %v2131, %v2127
        %v2880 = vpack.c.b16 %v2136, %v2132
        %v2881 = vpack.c.b16 %v2137, %v2133
        %v2882 = vpack.c.b16 %v2138, %v2134
        %v2883 = vpack.c.b16 %v2139, %v2135
        %v2884 = vpack.c.b16 %v2144, %v2140
        %v2885 = vpack.c.b16 %v2145, %v2141
        %v2886 = vpack.c.b16 %v2146, %v2142
        %v2887 = vpack.c.b16 %v2147, %v2143
        %v2888 = vpack.c.b16 %v2152, %v2148
        %v2889 = vpack.c.b16 %v2153, %v2149
        %v2890 = vpack.c.b16 %v2154, %v2150
        %v2891 = vpack.c.b16 %v2155, %v2151
        %v2892 = vpack.c.b16 %v2160, %v2156
        %v2893 = vpack.c.b16 %v2161, %v2157
        %v2894 = vpack.c.b16 %v2162, %v2158
        %v2895 = vpack.c.b16 %v2163, %v2159
        %v2896 = vpack.c.b16 %v2168, %v2164
        %v2897 = vpack.c.b16 %v2169, %v2165
        %v2898 = vpack.c.b16 %v2170, %v2166
        %v2899 = vpack.c.b16 %v2171, %v2167
        %v2900 = vpack.c.b16 %v2176, %v2172
        %v2901 = vpack.c.b16 %v2177, %v2173
        %v2902 = vpack.c.b16 %v2178, %v2174
        %v2903 = vpack.c.b16 %v2179, %v2175
        %v2904 = vpack.c.b16 %v2184, %v2180
        %v2905 = vpack.c.b16 %v2185, %v2181
        %v2906 = vpack.c.b16 %v2186, %v2182
        %v2907 = vpack.c.b16 %v2187, %v2183
        %v2908 = vpack.c.b16 %v2192, %v2188
        %v2909 = vpack.c.b16 %v2193, %v2189
        %v2910 = vpack.c.b16 %v2194, %v2190
        %v2911 = vpack.c.b16 %v2195, %v2191
        %v2912 = vpack.c.b16 %v2200, %v2196
        %v2913 = vpack.c.b16 %v2201, %v2197
        %v2914 = vpack.c.b16 %v2202, %v2198
        %v2915 = vpack.c.b16 %v2203, %v2199
        %v2916 = vpack.c.b16 %v2208, %v2204
        %v2917 = vpack.c.b16 %v2209, %v2205
        %v2918 = vpack.c.b16 %v2210, %v2206
        %v2919 = vpack.c.b16 %v2211, %v2207
        %v2920 = vpack.c.b16 %v2216, %v2212
        %v2921 = vpack.c.b16 %v2217, %v2213
        %v2922 = vpack.c.b16 %v2218, %v2214
        %v2923 = vpack.c.b16 %v2219, %v2215
        %v2924 = vpack.c.b16 %v2224, %v2220
        %v2925 = vpack.c.b16 %v2225, %v2221
        %v2926 = vpack.c.b16 %v2226, %v2222
        %v2927 = vpack.c.b16 %v2227, %v2223
        %v2928 = vpack.c.b16 %v2232, %v2228
        %v2929 = vpack.c.b16 %v2233, %v2229
        %v2930 = vpack.c.b16 %v2234, %v2230
        %v2931 = vpack.c.b16 %v2235, %v2231
        %v2932 = vpack.c.b16 %v2240, %v2236
        %v2933 = vpack.c.b16 %v2241, %v2237
        %v2934 = vpack.c.b16 %v2242, %v2238
        %v2935 = vpack.c.b16 %v2243, %v2239
        %v2936 = vpack.c.b16 %v2248, %v2244
        %v2937 = vpack.c.b16 %v2249, %v2245
        %v2938 = vpack.c.b16 %v2250, %v2246
        %v2939 = vpack.c.b16 %v2251, %v2247
        %v2940 = vpack.c.b16 %v2256, %v2252
        %v2941 = vpack.c.b16 %v2257, %v2253
        %v2942 = vpack.c.b16 %v2258, %v2254
        %v2943 = vpack.c.b16 %v2259, %v2255
        %v2944 = vpack.c.b16 %v2264, %v2260
        %v2945 = vpack.c.b16 %v2265, %v2261
        %v2946 = vpack.c.b16 %v2266, %v2262
        %v2947 = vpack.c.b16 %v2267, %v2263
        %v2948 = vpack.c.b16 %v2272, %v2268
        %v2949 = vpack.c.b16 %v2273, %v2269
        %v2950 = vpack.c.b16 %v2274, %v2270
        %v2951 = vpack.c.b16 %v2275, %v2271
        %v2952 = vpack.c.b16 %v2280, %v2276
        %v2953 = vpack.c.b16 %v2281, %v2277
        %v2954 = vpack.c.b16 %v2282, %v2278
        %v2955 = vpack.c.b16 %v2283, %v2279
        %v2956 = vpack.c.b16 %v2288, %v2284
        %v2957 = vpack.c.b16 %v2289, %v2285
        %v2958 = vpack.c.b16 %v2290, %v2286
        %v2959 = vpack.c.b16 %v2291, %v2287
        %v2960 = vpack.c.b16 %v2296, %v2292
        %v2961 = vpack.c.b16 %v2297, %v2293
        %v2962 = vpack.c.b16 %v2298, %v2294
        %v2963 = vpack.c.b16 %v2299, %v2295
        %v2964 = vpack.c.b16 %v2304, %v2300
        %v2965 = vpack.c.b16 %v2305, %v2301
        %v2966 = vpack.c.b16 %v2306, %v2302
        %v2967 = vpack.c.b16 %v2307, %v2303
        %v2968 = vpack.c.b16 %v2312, %v2308
        %v2969 = vpack.c.b16 %v2313, %v2309
        %v2970 = vpack.c.b16 %v2314, %v2310
        %v2971 = vpack.c.b16 %v2315, %v2311
        %v2972 = vpack.c.b16 %v2320, %v2316
        %v2973 = vpack.c.b16 %v2321, %v2317
        %v2974 = vpack.c.b16 %v2322, %v2318
        %v2975 = vpack.c.b16 %v2323, %v2319
        %v2976 = vpack.c.b16 %v2328, %v2324
        %v2977 = vpack.c.b16 %v2329, %v2325
        %v2978 = vpack.c.b16 %v2330, %v2326
        %v2979 = vpack.c.b16 %v2331, %v2327
        %v2980 = vpack.c.b16 %v2336, %v2332
        %v2981 = vpack.c.b16 %v2337, %v2333
        %v2982 = vpack.c.b16 %v2338, %v2334
        %v2983 = vpack.c.b16 %v2339, %v2335
        %v2984 = vpack.c.b16 %v2344, %v2340
        %v2985 = vpack.c.b16 %v2345, %v2341
        %v2986 = vpack.c.b16 %v2346, %v2342
        %v2987 = vpack.c.b16 %v2347, %v2343
        %v2988 = vpack.c.b16 %v2352, %v2348
        %v2989 = vpack.c.b16 %v2353, %v2349
        %v2990 = vpack.c.b16 %v2354, %v2350
        %v2991 = vpack.c.b16 %v2355, %v2351
        %v2992 = vpack.c.b16 %v2360, %v2356
        %v2993 = vpack.c.b16 %v2361, %v2357
        %v2994 = vpack.c.b16 %v2362, %v2358
        %v2995 = vpack.c.b16 %v2363, %v2359
        %v2996 = vpack.c.b16 %v2368, %v2364
        %v2997 = vpack.c.b16 %v2369, %v2365
        %v2998 = vpack.c.b16 %v2370, %v2366
        %v2999 = vpack.c.b16 %v2371, %v2367
        %v3000 = vpack.c.b16 %v2376, %v2372
        %v3001 = vpack.c.b16 %v2377, %v2373
        %v3002 = vpack.c.b16 %v2378, %v2374
        %v3003 = vpack.c.b16 %v2379, %v2375
        %v3004 = vpack.c.b16 %v2384, %v2380
        %v3005 = vpack.c.b16 %v2385, %v2381
        %v3006 = vpack.c.b16 %v2386, %v2382
        %v3007 = vpack.c.b16 %v2387, %v2383
        %v3008 = vpack.c.b16 %v2392, %v2388
        %v3009 = vpack.c.b16 %v2393, %v2389
        %v3010 = vpack.c.b16 %v2394, %v2390
        %v3011 = vpack.c.b16 %v2395, %v2391
        %v3012 = vpack.c.b16 %v2400, %v2396
        %v3013 = vpack.c.b16 %v2401, %v2397
        %v3014 = vpack.c.b16 %v2402, %v2398
        %v3015 = vpack.c.b16 %v2403, %v2399
        %v3016 = vpack.c.b16 %v2408, %v2404
        %v3017 = vpack.c.b16 %v2409, %v2405
        %v3018 = vpack.c.b16 %v2410, %v2406
        %v3019 = vpack.c.b16 %v2411, %v2407
        %v3020 = vpack.c.b16 %v2416, %v2412
        %v3021 = vpack.c.b16 %v2417, %v2413
        %v3022 = vpack.c.b16 %v2418, %v2414
        %v3023 = vpack.c.b16 %v2419, %v2415
        %v3024 = vpack.c.b16 %v2424, %v2420
        %v3025 = vpack.c.b16 %v2425, %v2421
        %v3026 = vpack.c.b16 %v2426, %v2422
        %v3027 = vpack.c.b16 %v2427, %v2423
        %v3028 = vpack.c.b16 %v2432, %v2428
        %v3029 = vpack.c.b16 %v2433, %v2429
        %v3030 = vpack.c.b16 %v2434, %v2430
        %v3031 = vpack.c.b16 %v2435, %v2431
        %v3032 = vpack.c.b16 %v2440, %v2436
        %v3033 = vpack.c.b16 %v2441, %v2437
        %v3034 = vpack.c.b16 %v2442, %v2438
        %v3035 = vpack.c.b16 %v2443, %v2439
        %v3036 = vpack.c.b16 %v2448, %v2444
        %v3037 = vpack.c.b16 %v2449, %v2445
        %v3038 = vpack.c.b16 %v2450, %v2446
        %v3039 = vpack.c.b16 %v2451, %v2447
        %v3040 = vpack.c.b16 %v2456, %v2452
        %v3041 = vpack.c.b16 %v2457, %v2453
        %v3042 = vpack.c.b16 %v2458, %v2454
        %v3043 = vpack.c.b16 %v2459, %v2455
        %v3044 = vpack.c.b16 %v2464, %v2460
        %v3045 = vpack.c.b16 %v2465, %v2461
        %v3046 = vpack.c.b16 %v2466, %v2462
        %v3047 = vpack.c.b16 %v2467, %v2463
        %v3048 = vpack.c.b16 %v2472, %v2468
        %v3049 = vpack.c.b16 %v2473, %v2469
        %v3050 = vpack.c.b16 %v2474, %v2470
        %v3051 = vpack.c.b16 %v2475, %v2471
        %v3052 = vpack.c.b16 %v2480, %v2476
        %v3053 = vpack.c.b16 %v2481, %v2477
        %v3054 = vpack.c.b16 %v2482, %v2478
        %v3055 = vpack.c.b16 %v2483, %v2479
        %v3056 = vpack.c.b16 %v2488, %v2484
        %v3057 = vpack.c.b16 %v2489, %v2485
        %v3058 = vpack.c.b16 %v2490, %v2486
        %v3059 = vpack.c.b16 %v2491, %v2487
        %v3060 = vpack.c.b16 %v2496, %v2492
        %v3061 = vpack.c.b16 %v2497, %v2493
        %v3062 = vpack.c.b16 %v2498, %v2494
        %v3063 = vpack.c.b16 %v2499, %v2495
        %v3064 = vpack.c.b16 %v2504, %v2500
        %v3065 = vpack.c.b16 %v2505, %v2501
        %v3066 = vpack.c.b16 %v2506, %v2502
        %v3067 = vpack.c.b16 %v2507, %v2503
        %v3068 = vpack.c.b16 %v2512, %v2508
        %v3069 = vpack.c.b16 %v2513, %v2509
        %v3070 = vpack.c.b16 %v2514, %v2510
        %v3071 = vpack.c.b16 %v2515, %v2511
        %v3072 = vpack.c.b16 %v2520, %v2516
        %v3073 = vpack.c.b16 %v2521, %v2517
        %v3074 = vpack.c.b16 %v2522, %v2518
        %v3075 = vpack.c.b16 %v2523, %v2519
        %v3076 = vpack.c.b16 %v2528, %v2524
        %v3077 = vpack.c.b16 %v2529, %v2525
        %v3078 = vpack.c.b16 %v2530, %v2526
        %v3079 = vpack.c.b16 %v2531, %v2527
        %v3080 = vpack.c.b16 %v2536, %v2532
        %v3081 = vpack.c.b16 %v2537, %v2533
        %v3082 = vpack.c.b16 %v2538, %v2534
        %v3083 = vpack.c.b16 %v2539, %v2535
        %v3084 = vpack.c.b16 %v2544, %v2540
        %v3085 = vpack.c.b16 %v2545, %v2541
        %v3086 = vpack.c.b16 %v2546, %v2542
        %v3087 = vpack.c.b16 %v2547, %v2543
        %v3088 = vpack.c.b16 %v2552, %v2548
        %v3089 = vpack.c.b16 %v2553, %v2549
        %v3090 = vpack.c.b16 %v2554, %v2550
        %v3091 = vpack.c.b16 %v2555, %v2551
        %v3092 = vpack.c.b16 %v2560, %v2556
        %v3093 = vpack.c.b16 %v2561, %v2557
        %v3094 = vpack.c.b16 %v2562, %v2558
        %v3095 = vpack.c.b16 %v2563, %v2559
        %v3096 = vpack.c.b16 %v2568, %v2564
        %v3097 = vpack.c.b16 %v2569, %v2565
        %v3098 = vpack.c.b16 %v2570, %v2566
        %v3099 = vpack.c.b16 %v2571, %v2567
        %v3100 = vpack.c.b16 %v2576, %v2572
        %v3101 = vpack.c.b16 %v2577, %v2573
        %v3102 = vpack.c.b16 %v2578, %v2574
        %v3103 = vpack.c.b16 %v2579, %v2575
        %v3104 = vpack.c.b16 %v2584, %v2580
        %v3105 = vpack.c.b16 %v2585, %v2581
        %v3106 = vpack.c.b16 %v2586, %v2582
        %v3107 = vpack.c.b16 %v2587, %v2583
        %v3108 = vpack.c.b16 %v2592, %v2588
        %v3109 = vpack.c.b16 %v2593, %v2589
        %v3110 = vpack.c.b16 %v2594, %v2590
        %v3111 = vpack.c.b16 %v2595, %v2591
        %v3112 = vpack.c.b16 %v2600, %v2596
        %v3113 = vpack.c.b16 %v2601, %v2597
        %v3114 = vpack.c.b16 %v2602, %v2598
        %v3115 = vpack.c.b16 %v2603, %v2599
        %3628 = vmatprep.subr.bf16.mxu0 %v2605
        %3629 = vmatpush1.bf16.msra.mxu0 %v2604
        %3630 = vmatprep.subr.bf16.mxu0 %v2609
        %3631 = vmatpush1.bf16.msra.mxu0 %v2608
        %3632 = vmatprep.subr.bf16.mxu0 %v2613
        %3633 = vmatpush1.bf16.msra.mxu0 %v2612
        %3634 = vmatprep.subr.bf16.mxu0 %v2617
        %3635 = vmatpush1.bf16.msra.mxu0 %v2616
        %3636 = vmatprep.subr.bf16.mxu0 %v2621
        %3637 = vmatpush1.bf16.msra.mxu0 %v2620
        %3638 = vmatprep.subr.bf16.mxu0 %v2625
        %3639 = vmatpush1.bf16.msra.mxu0 %v2624
        %3640 = vmatprep.subr.bf16.mxu0 %v2629
        %3641 = vmatpush1.bf16.msra.mxu0 %v2628
        %3642 = vmatprep.subr.bf16.mxu0 %v2633
        %3643 = vmatpush1.bf16.msra.mxu0 %v2632
        %3644 = vmatprep.subr.bf16.mxu0 %v2637
        %3645 = vmatpush1.bf16.msra.mxu0 %v2636
        %3646 = vmatprep.subr.bf16.mxu0 %v2641
        %3647 = vmatpush1.bf16.msra.mxu0 %v2640
        %3648 = vmatprep.subr.bf16.mxu0 %v2645
        %3649 = vmatpush1.bf16.msra.mxu0 %v2644
        %3650 = vmatprep.subr.bf16.mxu0 %v2649
        %3651 = vmatpush1.bf16.msra.mxu0 %v2648
        %3652 = vmatprep.subr.bf16.mxu0 %v2653
        %3653 = vmatpush1.bf16.msra.mxu0 %v2652
        %3654 = vmatprep.subr.bf16.mxu0 %v2657
        %3655 = vmatpush1.bf16.msra.mxu0 %v2656
        %3656 = vmatprep.subr.bf16.mxu0 %v2661
        %3657 = vmatpush1.bf16.msra.mxu0 %v2660
        %3658 = vmatprep.subr.bf16.mxu0 %v2665
        %3659 = vmatpush1.bf16.msra.mxu0 %v2664
        %3660 = vmatprep.mubr.bf16.mxu0 %v519
        %3661 = vmatmul.mubr.bf16.gmra.mrb[0].mxu0 %v518
        %v3662 = vpop.f32.mrb[0].mxu0
        %v3663 = vadd.f32 %v1051, %v3662
        %v3664 = vpop.f32.mrb[0].mxu0
        %v3665 = vadd.f32 %v1055, %v3664
        %v3666 = vpop.f32.mrb[0].mxu0
        %v3667 = vpop.f32.mrb[0].mxu0
        %3668 = vdwg.mxu0
        %3669 = vmatprep.subr.bf16.mxu0 %v2669
        %3670 = vmatpush1.bf16.msra.mxu0 %v2668
        %3671 = vmatprep.subr.bf16.mxu0 %v2673
        %3672 = vmatpush1.bf16.msra.mxu0 %v2672
        %3673 = vmatprep.subr.bf16.mxu0 %v2677
        %3674 = vmatpush1.bf16.msra.mxu0 %v2676
        %3675 = vmatprep.subr.bf16.mxu0 %v2681
        %3676 = vmatpush1.bf16.msra.mxu0 %v2680
        %3677 = vmatprep.subr.bf16.mxu0 %v2685
        %3678 = vmatpush1.bf16.msra.mxu0 %v2684
        %3679 = vmatprep.subr.bf16.mxu0 %v2689
        %3680 = vmatpush1.bf16.msra.mxu0 %v2688
        %3681 = vmatprep.subr.bf16.mxu0 %v2693
        %3682 = vmatpush1.bf16.msra.mxu0 %v2692
        %3683 = vmatprep.subr.bf16.mxu0 %v2697
        %3684 = vmatpush1.bf16.msra.mxu0 %v2696
        %3685 = vmatprep.subr.bf16.mxu0 %v2701
        %3686 = vmatpush1.bf16.msra.mxu0 %v2700
        %3687 = vmatprep.subr.bf16.mxu0 %v2705
        %3688 = vmatpush1.bf16.msra.mxu0 %v2704
        %3689 = vmatprep.subr.bf16.mxu0 %v2709
        %3690 = vmatpush1.bf16.msra.mxu0 %v2708
        %3691 = vmatprep.subr.bf16.mxu0 %v2713
        %3692 = vmatpush1.bf16.msra.mxu0 %v2712
        %3693 = vmatprep.subr.bf16.mxu0 %v2717
        %3694 = vmatpush1.bf16.msra.mxu0 %v2716
        %3695 = vmatprep.subr.bf16.mxu0 %v2721
        %3696 = vmatpush1.bf16.msra.mxu0 %v2720
        %3697 = vmatprep.subr.bf16.mxu0 %v2725
        %3698 = vmatpush1.bf16.msra.mxu0 %v2724
        %3699 = vmatprep.subr.bf16.mxu0 %v2729
        %3700 = vmatpush1.bf16.msra.mxu0 %v2728
        %3701 = vmatprep.mubr.bf16.mxu0 %v521
        %3702 = vmatmul.mubr.bf16.gmra.mrb[0].mxu0 %v520
        %v3703 = vpop.f32.mrb[0].mxu0
        %v3704 = vadd.f32 %v3663, %v3703
        %v3705 = vpop.f32.mrb[0].mxu0
        %v3706 = vadd.f32 %v3665, %v3705
        %v3707 = vpop.f32.mrb[0].mxu0
        %v3708 = vpop.f32.mrb[0].mxu0
        %3709 = vdwg.mxu0
        %3710 = vmatprep.subr.bf16.mxu0 %v2733
        %3711 = vmatpush1.bf16.msra.mxu0 %v2732
        %3712 = vmatprep.subr.bf16.mxu0 %v2737
        %3713 = vmatpush1.bf16.msra.mxu0 %v2736
        %3714 = vmatprep.subr.bf16.mxu0 %v2741
        %3715 = vmatpush1.bf16.msra.mxu0 %v2740
        %3716 = vmatprep.subr.bf16.mxu0 %v2745
        %3717 = vmatpush1.bf16.msra.mxu0 %v2744
        %3718 = vmatprep.subr.bf16.mxu0 %v2749
        %3719 = vmatpush1.bf16.msra.mxu0 %v2748
        %3720 = vmatprep.subr.bf16.mxu0 %v2753
        %3721 = vmatpush1.bf16.msra.mxu0 %v2752
        %3722 = vmatprep.subr.bf16.mxu0 %v2757
        %3723 = vmatpush1.bf16.msra.mxu0 %v2756
        %3724 = vmatprep.subr.bf16.mxu0 %v2761
        %3725 = vmatpush1.bf16.msra.mxu0 %v2760
        %3726 = vmatprep.subr.bf16.mxu0 %v2765
        %3727 = vmatpush1.bf16.msra.mxu0 %v2764
        %3728 = vmatprep.subr.bf16.mxu0 %v2769
        %3729 = vmatpush1.bf16.msra.mxu0 %v2768
        %3730 = vmatprep.subr.bf16.mxu0 %v2773
        %3731 = vmatpush1.bf16.msra.mxu0 %v2772
        %3732 = vmatprep.subr.bf16.mxu0 %v2777
        %3733 = vmatpush1.bf16.msra.mxu0 %v2776
        %3734 = vmatprep.subr.bf16.mxu0 %v2781
        %3735 = vmatpush1.bf16.msra.mxu0 %v2780
        %3736 = vmatprep.subr.bf16.mxu0 %v2785
        %3737 = vmatpush1.bf16.msra.mxu0 %v2784
        %3738 = vmatprep.subr.bf16.mxu0 %v2789
        %3739 = vmatpush1.bf16.msra.mxu0 %v2788
        %3740 = vmatprep.subr.bf16.mxu0 %v2793
        %3741 = vmatpush1.bf16.msra.mxu0 %v2792
        %3742 = vmatprep.mubr.bf16.mxu0 %v523
        %3743 = vmatmul.mubr.bf16.gmra.mrb[0].mxu0 %v522
        %v3744 = vpop.f32.mrb[0].mxu0
        %v3745 = vadd.f32 %v3704, %v3744
        %v3746 = vpop.f32.mrb[0].mxu0
        %v3747 = vadd.f32 %v3706, %v3746
        %v3748 = vpop.f32.mrb[0].mxu0
        %v3749 = vpop.f32.mrb[0].mxu0
        %3750 = vdwg.mxu0
        %3751 = vmatprep.subr.bf16.mxu0 %v2797
        %3752 = vmatpush1.bf16.msra.mxu0 %v2796
        %3753 = vmatprep.subr.bf16.mxu0 %v2801
        %3754 = vmatpush1.bf16.msra.mxu0 %v2800
        %3755 = vmatprep.subr.bf16.mxu0 %v2805
        %3756 = vmatpush1.bf16.msra.mxu0 %v2804
        %3757 = vmatprep.subr.bf16.mxu0 %v2809
        %3758 = vmatpush1.bf16.msra.mxu0 %v2808
        %3759 = vmatprep.subr.bf16.mxu0 %v2813
        %3760 = vmatpush1.bf16.msra.mxu0 %v2812
        %3761 = vmatprep.subr.bf16.mxu0 %v2817
        %3762 = vmatpush1.bf16.msra.mxu0 %v2816
        %3763 = vmatprep.subr.bf16.mxu0 %v2821
        %3764 = vmatpush1.bf16.msra.mxu0 %v2820
        %3765 = vmatprep.subr.bf16.mxu0 %v2825
        %3766 = vmatpush1.bf16.msra.mxu0 %v2824
        %3767 = vmatprep.subr.bf16.mxu0 %v2829
        %3768 = vmatpush1.bf16.msra.mxu0 %v2828
        %3769 = vmatprep.subr.bf16.mxu0 %v2833
        %3770 = vmatpush1.bf16.msra.mxu0 %v2832
        %3771 = vmatprep.subr.bf16.mxu0 %v2837
        %3772 = vmatpush1.bf16.msra.mxu0 %v2836
        %3773 = vmatprep.subr.bf16.mxu0 %v2841
        %3774 = vmatpush1.bf16.msra.mxu0 %v2840
        %3775 = vmatprep.subr.bf16.mxu0 %v2845
        %3776 = vmatpush1.bf16.msra.mxu0 %v2844
        %3777 = vmatprep.subr.bf16.mxu0 %v2849
        %3778 = vmatpush1.bf16.msra.mxu0 %v2848
        %3779 = vmatprep.subr.bf16.mxu0 %v2853
        %3780 = vmatpush1.bf16.msra.mxu0 %v2852
        %3781 = vmatprep.subr.bf16.mxu0 %v2857
        %3782 = vmatpush1.bf16.msra.mxu0 %v2856
        %3783 = vmatprep.mubr.bf16.mxu0 %v525
        %3784 = vmatmul.mubr.bf16.gmra.mrb[0].mxu0 %v524
        %v3785 = vpop.f32.mrb[0].mxu0
        %v3786 = vadd.f32 %v3745, %v3785
        %v3787 = vpop.f32.mrb[0].mxu0
        %v3788 = vadd.f32 %v3747, %v3787
        %v3789 = vpop.f32.mrb[0].mxu0
        %v3790 = vpop.f32.mrb[0].mxu0
        %3791 = vdwg.mxu0
        %3792 = vmatprep.subr.bf16.mxu0 %v2861
        %3793 = vmatpush1.bf16.msra.mxu0 %v2860
        %3794 = vmatprep.subr.bf16.mxu0 %v2865
        %3795 = vmatpush1.bf16.msra.mxu0 %v2864
        %3796 = vmatprep.subr.bf16.mxu0 %v2869
        %3797 = vmatpush1.bf16.msra.mxu0 %v2868
        %3798 = vmatprep.subr.bf16.mxu0 %v2873
        %3799 = vmatpush1.bf16.msra.mxu0 %v2872
        %3800 = vmatprep.subr.bf16.mxu0 %v2877
        %3801 = vmatpush1.bf16.msra.mxu0 %v2876
        %3802 = vmatprep.subr.bf16.mxu0 %v2881
        %3803 = vmatpush1.bf16.msra.mxu0 %v2880
        %3804 = vmatprep.subr.bf16.mxu0 %v2885
        %3805 = vmatpush1.bf16.msra.mxu0 %v2884
        %3806 = vmatprep.subr.bf16.mxu0 %v2889
        %3807 = vmatpush1.bf16.msra.mxu0 %v2888
        %3808 = vmatprep.subr.bf16.mxu0 %v2893
        %3809 = vmatpush1.bf16.msra.mxu0 %v2892
        %3810 = vmatprep.subr.bf16.mxu0 %v2897
        %3811 = vmatpush1.bf16.msra.mxu0 %v2896
        %3812 = vmatprep.subr.bf16.mxu0 %v2901
        %3813 = vmatpush1.bf16.msra.mxu0 %v2900
        %3814 = vmatprep.subr.bf16.mxu0 %v2905
        %3815 = vmatpush1.bf16.msra.mxu0 %v2904
        %3816 = vmatprep.subr.bf16.mxu0 %v2909
        %3817 = vmatpush1.bf16.msra.mxu0 %v2908
        %3818 = vmatprep.subr.bf16.mxu0 %v2913
        %3819 = vmatpush1.bf16.msra.mxu0 %v2912
        %3820 = vmatprep.subr.bf16.mxu0 %v2917
        %3821 = vmatpush1.bf16.msra.mxu0 %v2916
        %3822 = vmatprep.subr.bf16.mxu0 %v2921
        %3823 = vmatpush1.bf16.msra.mxu0 %v2920
        %3824 = vmatprep.mubr.bf16.mxu0 %v527
        %3825 = vmatmul.mubr.bf16.gmra.mrb[0].mxu0 %v526
        %v3826 = vpop.f32.mrb[0].mxu0
        %v3827 = vadd.f32 %v3786, %v3826
        %v3828 = vpop.f32.mrb[0].mxu0
        %v3829 = vadd.f32 %v3788, %v3828
        %v3830 = vpop.f32.mrb[0].mxu0
        %v3831 = vpop.f32.mrb[0].mxu0
        %3832 = vdwg.mxu0
        %3833 = vmatprep.subr.bf16.mxu0 %v2925
        %3834 = vmatpush1.bf16.msra.mxu0 %v2924
        %3835 = vmatprep.subr.bf16.mxu0 %v2929
        %3836 = vmatpush1.bf16.msra.mxu0 %v2928
        %3837 = vmatprep.subr.bf16.mxu0 %v2933
        %3838 = vmatpush1.bf16.msra.mxu0 %v2932
        %3839 = vmatprep.subr.bf16.mxu0 %v2937
        %3840 = vmatpush1.bf16.msra.mxu0 %v2936
        %3841 = vmatprep.subr.bf16.mxu0 %v2941
        %3842 = vmatpush1.bf16.msra.mxu0 %v2940
        %3843 = vmatprep.subr.bf16.mxu0 %v2945
        %3844 = vmatpush1.bf16.msra.mxu0 %v2944
        %3845 = vmatprep.subr.bf16.mxu0 %v2949
        %3846 = vmatpush1.bf16.msra.mxu0 %v2948
        %3847 = vmatprep.subr.bf16.mxu0 %v2953
        %3848 = vmatpush1.bf16.msra.mxu0 %v2952
        %3849 = vmatprep.subr.bf16.mxu0 %v2957
        %3850 = vmatpush1.bf16.msra.mxu0 %v2956
        %3851 = vmatprep.subr.bf16.mxu0 %v2961
        %3852 = vmatpush1.bf16.msra.mxu0 %v2960
        %3853 = vmatprep.subr.bf16.mxu0 %v2965
        %3854 = vmatpush1.bf16.msra.mxu0 %v2964
        %3855 = vmatprep.subr.bf16.mxu0 %v2969
        %3856 = vmatpush1.bf16.msra.mxu0 %v2968
        %3857 = vmatprep.subr.bf16.mxu0 %v2973
        %3858 = vmatpush1.bf16.msra.mxu0 %v2972
        %3859 = vmatprep.subr.bf16.mxu0 %v2977
        %3860 = vmatpush1.bf16.msra.mxu0 %v2976
        %3861 = vmatprep.subr.bf16.mxu0 %v2981
        %3862 = vmatpush1.bf16.msra.mxu0 %v2980
        %3863 = vmatprep.subr.bf16.mxu0 %v2985
        %3864 = vmatpush1.bf16.msra.mxu0 %v2984
        %3865 = vmatprep.mubr.bf16.mxu0 %v529
        %3866 = vmatmul.mubr.bf16.gmra.mrb[0].mxu0 %v528
        %v3867 = vpop.f32.mrb[0].mxu0
        %v3868 = vadd.f32 %v3827, %v3867
        %v3869 = vpop.f32.mrb[0].mxu0
        %v3870 = vadd.f32 %v3829, %v3869
        %v3871 = vpop.f32.mrb[0].mxu0
        %v3872 = vpop.f32.mrb[0].mxu0
        %3873 = vdwg.mxu0
        %3874 = vmatprep.subr.bf16.mxu0 %v2989
        %3875 = vmatpush1.bf16.msra.mxu0 %v2988
        %3876 = vmatprep.subr.bf16.mxu0 %v2993
        %3877 = vmatpush1.bf16.msra.mxu0 %v2992
        %3878 = vmatprep.subr.bf16.mxu0 %v2997
        %3879 = vmatpush1.bf16.msra.mxu0 %v2996
        %3880 = vmatprep.subr.bf16.mxu0 %v3001
        %3881 = vmatpush1.bf16.msra.mxu0 %v3000
        %3882 = vmatprep.subr.bf16.mxu0 %v3005
        %3883 = vmatpush1.bf16.msra.mxu0 %v3004
        %3884 = vmatprep.subr.bf16.mxu0 %v3009
        %3885 = vmatpush1.bf16.msra.mxu0 %v3008
        %3886 = vmatprep.subr.bf16.mxu0 %v3013
        %3887 = vmatpush1.bf16.msra.mxu0 %v3012
        %3888 = vmatprep.subr.bf16.mxu0 %v3017
        %3889 = vmatpush1.bf16.msra.mxu0 %v3016
        %3890 = vmatprep.subr.bf16.mxu0 %v3021
        %3891 = vmatpush1.bf16.msra.mxu0 %v3020
        %3892 = vmatprep.subr.bf16.mxu0 %v3025
        %3893 = vmatpush1.bf16.msra.mxu0 %v3024
        %3894 = vmatprep.subr.bf16.mxu0 %v3029
        %3895 = vmatpush1.bf16.msra.mxu0 %v3028
        %3896 = vmatprep.subr.bf16.mxu0 %v3033
        %3897 = vmatpush1.bf16.msra.mxu0 %v3032
        %3898 = vmatprep.subr.bf16.mxu0 %v3037
        %3899 = vmatpush1.bf16.msra.mxu0 %v3036
        %3900 = vmatprep.subr.bf16.mxu0 %v3041
        %3901 = vmatpush1.bf16.msra.mxu0 %v3040
        %3902 = vmatprep.subr.bf16.mxu0 %v3045
        %3903 = vmatpush1.bf16.msra.mxu0 %v3044
        %3904 = vmatprep.subr.bf16.mxu0 %v3049
        %3905 = vmatpush1.bf16.msra.mxu0 %v3048
        %3906 = vmatprep.mubr.bf16.mxu0 %v531
        %3907 = vmatmul.mubr.bf16.gmra.mrb[0].mxu0 %v530
        %v3908 = vpop.f32.mrb[0].mxu0
        %v3909 = vadd.f32 %v3868, %v3908
        %v3910 = vpop.f32.mrb[0].mxu0
        %v3911 = vadd.f32 %v3870, %v3910
        %v3912 = vpop.f32.mrb[0].mxu0
        %v3913 = vpop.f32.mrb[0].mxu0
        %3914 = vdwg.mxu0
        %3915 = vmatprep.subr.bf16.mxu0 %v3053
        %3916 = vmatpush1.bf16.msra.mxu0 %v3052
        %3917 = vmatprep.subr.bf16.mxu0 %v3057
        %3918 = vmatpush1.bf16.msra.mxu0 %v3056
        %3919 = vmatprep.subr.bf16.mxu0 %v3061
        %3920 = vmatpush1.bf16.msra.mxu0 %v3060
        %3921 = vmatprep.subr.bf16.mxu0 %v3065
        %3922 = vmatpush1.bf16.msra.mxu0 %v3064
        %3923 = vmatprep.subr.bf16.mxu0 %v3069
        %3924 = vmatpush1.bf16.msra.mxu0 %v3068
        %3925 = vmatprep.subr.bf16.mxu0 %v3073
        %3926 = vmatpush1.bf16.msra.mxu0 %v3072
        %3927 = vmatprep.subr.bf16.mxu0 %v3077
        %3928 = vmatpush1.bf16.msra.mxu0 %v3076
        %3929 = vmatprep.subr.bf16.mxu0 %v3081
        %3930 = vmatpush1.bf16.msra.mxu0 %v3080
        %3931 = vmatprep.subr.bf16.mxu0 %v3085
        %3932 = vmatpush1.bf16.msra.mxu0 %v3084
        %3933 = vmatprep.subr.bf16.mxu0 %v3089
        %3934 = vmatpush1.bf16.msra.mxu0 %v3088
        %3935 = vmatprep.subr.bf16.mxu0 %v3093
        %3936 = vmatpush1.bf16.msra.mxu0 %v3092
        %3937 = vmatprep.subr.bf16.mxu0 %v3097
        %3938 = vmatpush1.bf16.msra.mxu0 %v3096
        %3939 = vmatprep.subr.bf16.mxu0 %v3101
        %3940 = vmatpush1.bf16.msra.mxu0 %v3100
        %3941 = vmatprep.subr.bf16.mxu0 %v3105
        %3942 = vmatpush1.bf16.msra.mxu0 %v3104
        %3943 = vmatprep.subr.bf16.mxu0 %v3109
        %3944 = vmatpush1.bf16.msra.mxu0 %v3108
        %3945 = vmatprep.subr.bf16.mxu0 %v3113
        %3946 = vmatpush1.bf16.msra.mxu0 %v3112
        %3947 = vmatprep.mubr.bf16.mxu0 %v533
        %3948 = vmatmul.mubr.bf16.gmra.mrb[0].mxu0 %v532
        %v3949 = vpop.f32.mrb[0].mxu0
        %v3950 = vadd.f32 %v3909, %v3949
        %v3951 = vpop.f32.mrb[0].mxu0
        %v3952 = vadd.f32 %v3911, %v3951
        %v3953 = vpop.f32.mrb[0].mxu0
        %v3954 = vpop.f32.mrb[0].mxu0
        %3955 = vdwg.mxu0
        %3956 = vmatprep.subr.bf16.mxu0 %v2607
        %3957 = vmatpush1.bf16.msra.mxu0 %v2606
        %3958 = vmatprep.subr.bf16.mxu0 %v2611
        %3959 = vmatpush1.bf16.msra.mxu0 %v2610
        %3960 = vmatprep.subr.bf16.mxu0 %v2615
        %3961 = vmatpush1.bf16.msra.mxu0 %v2614
        %3962 = vmatprep.subr.bf16.mxu0 %v2619
        %3963 = vmatpush1.bf16.msra.mxu0 %v2618
        %3964 = vmatprep.subr.bf16.mxu0 %v2623
        %3965 = vmatpush1.bf16.msra.mxu0 %v2622
        %3966 = vmatprep.subr.bf16.mxu0 %v2627
        %3967 = vmatpush1.bf16.msra.mxu0 %v2626
        %3968 = vmatprep.subr.bf16.mxu0 %v2631
        %3969 = vmatpush1.bf16.msra.mxu0 %v2630
        %3970 = vmatprep.subr.bf16.mxu0 %v2635
        %3971 = vmatpush1.bf16.msra.mxu0 %v2634
        %3972 = vmatprep.subr.bf16.mxu0 %v2639
        %3973 = vmatpush1.bf16.msra.mxu0 %v2638
        %3974 = vmatprep.subr.bf16.mxu0 %v2643
        %3975 = vmatpush1.bf16.msra.mxu0 %v2642
        %3976 = vmatprep.subr.bf16.mxu0 %v2647
        %3977 = vmatpush1.bf16.msra.mxu0 %v2646
        %3978 = vmatprep.subr.bf16.mxu0 %v2651
        %3979 = vmatpush1.bf16.msra.mxu0 %v2650
        %3980 = vmatprep.subr.bf16.mxu0 %v2655
        %3981 = vmatpush1.bf16.msra.mxu0 %v2654
        %3982 = vmatprep.subr.bf16.mxu0 %v2659
        %3983 = vmatpush1.bf16.msra.mxu0 %v2658
        %3984 = vmatprep.subr.bf16.mxu0 %v2663
        %3985 = vmatpush1.bf16.msra.mxu0 %v2662
        %3986 = vmatprep.subr.bf16.mxu0 %v2667
        %3987 = vmatpush1.bf16.msra.mxu0 %v2666
        %3988 = vmatprep.mubr.bf16.mxu0 %v519
        %3989 = vmatmul.mubr.bf16.gmra.mrb[0].mxu0 %v518
        %v3990 = vpop.f32.mrb[0].mxu0
        %v3991 = vadd.f32 %v1059, %v3990
        %v3992 = vpop.f32.mrb[0].mxu0
        %v3993 = vadd.f32 %v1063, %v3992
        %v3994 = vpop.f32.mrb[0].mxu0
        %v3995 = vpop.f32.mrb[0].mxu0
        %3996 = vdwg.mxu0
        %3997 = vmatprep.subr.bf16.mxu0 %v2671
        %3998 = vmatpush1.bf16.msra.mxu0 %v2670
        %3999 = vmatprep.subr.bf16.mxu0 %v2675
        %4000 = vmatpush1.bf16.msra.mxu0 %v2674
        %4001 = vmatprep.subr.bf16.mxu0 %v2679
        %4002 = vmatpush1.bf16.msra.mxu0 %v2678
        %4003 = vmatprep.subr.bf16.mxu0 %v2683
        %4004 = vmatpush1.bf16.msra.mxu0 %v2682
        %4005 = vmatprep.subr.bf16.mxu0 %v2687
        %4006 = vmatpush1.bf16.msra.mxu0 %v2686
        %4007 = vmatprep.subr.bf16.mxu0 %v2691
        %4008 = vmatpush1.bf16.msra.mxu0 %v2690
        %4009 = vmatprep.subr.bf16.mxu0 %v2695
        %4010 = vmatpush1.bf16.msra.mxu0 %v2694
        %4011 = vmatprep.subr.bf16.mxu0 %v2699
        %4012 = vmatpush1.bf16.msra.mxu0 %v2698
        %4013 = vmatprep.subr.bf16.mxu0 %v2703
        %4014 = vmatpush1.bf16.msra.mxu0 %v2702
        %4015 = vmatprep.subr.bf16.mxu0 %v2707
        %4016 = vmatpush1.bf16.msra.mxu0 %v2706
        %4017 = vmatprep.subr.bf16.mxu0 %v2711
        %4018 = vmatpush1.bf16.msra.mxu0 %v2710
        %4019 = vmatprep.subr.bf16.mxu0 %v2715
        %4020 = vmatpush1.bf16.msra.mxu0 %v2714
        %4021 = vmatprep.subr.bf16.mxu0 %v2719
        %4022 = vmatpush1.bf16.msra.mxu0 %v2718
        %4023 = vmatprep.subr.bf16.mxu0 %v2723
        %4024 = vmatpush1.bf16.msra.mxu0 %v2722
        %4025 = vmatprep.subr.bf16.mxu0 %v2727
        %4026 = vmatpush1.bf16.msra.mxu0 %v2726
        %4027 = vmatprep.subr.bf16.mxu0 %v2731
        %4028 = vmatpush1.bf16.msra.mxu0 %v2730
        %4029 = vmatprep.mubr.bf16.mxu0 %v521
        %4030 = vmatmul.mubr.bf16.gmra.mrb[0].mxu0 %v520
        %v4031 = vpop.f32.mrb[0].mxu0
        %v4032 = vadd.f32 %v3991, %v4031
        %v4033 = vpop.f32.mrb[0].mxu0
        %v4034 = vadd.f32 %v3993, %v4033
        %v4035 = vpop.f32.mrb[0].mxu0
        %v4036 = vpop.f32.mrb[0].mxu0
        %4037 = vdwg.mxu0
        %4038 = vmatprep.subr.bf16.mxu0 %v2735
        %4039 = vmatpush1.bf16.msra.mxu0 %v2734
        %4040 = vmatprep.subr.bf16.mxu0 %v2739
        %4041 = vmatpush1.bf16.msra.mxu0 %v2738
        %4042 = vmatprep.subr.bf16.mxu0 %v2743
        %4043 = vmatpush1.bf16.msra.mxu0 %v2742
        %4044 = vmatprep.subr.bf16.mxu0 %v2747
        %4045 = vmatpush1.bf16.msra.mxu0 %v2746
        %4046 = vmatprep.subr.bf16.mxu0 %v2751
        %4047 = vmatpush1.bf16.msra.mxu0 %v2750
        %4048 = vmatprep.subr.bf16.mxu0 %v2755
        %4049 = vmatpush1.bf16.msra.mxu0 %v2754
        %4050 = vmatprep.subr.bf16.mxu0 %v2759
        %4051 = vmatpush1.bf16.msra.mxu0 %v2758
        %4052 = vmatprep.subr.bf16.mxu0 %v2763
        %4053 = vmatpush1.bf16.msra.mxu0 %v2762
        %4054 = vmatprep.subr.bf16.mxu0 %v2767
        %4055 = vmatpush1.bf16.msra.mxu0 %v2766
        %4056 = vmatprep.subr.bf16.mxu0 %v2771
        %4057 = vmatpush1.bf16.msra.mxu0 %v2770
        %4058 = vmatprep.subr.bf16.mxu0 %v2775
        %4059 = vmatpush1.bf16.msra.mxu0 %v2774
        %4060 = vmatprep.subr.bf16.mxu0 %v2779
        %4061 = vmatpush1.bf16.msra.mxu0 %v2778
        %4062 = vmatprep.subr.bf16.mxu0 %v2783
        %4063 = vmatpush1.bf16.msra.mxu0 %v2782
        %4064 = vmatprep.subr.bf16.mxu0 %v2787
        %4065 = vmatpush1.bf16.msra.mxu0 %v2786
        %4066 = vmatprep.subr.bf16.mxu0 %v2791
        %4067 = vmatpush1.bf16.msra.mxu0 %v2790
        %4068 = vmatprep.subr.bf16.mxu0 %v2795
        %4069 = vmatpush1.bf16.msra.mxu0 %v2794
        %4070 = vmatprep.mubr.bf16.mxu0 %v523
        %4071 = vmatmul.mubr.bf16.gmra.mrb[0].mxu0 %v522
        %v4072 = vpop.f32.mrb[0].mxu0
        %v4073 = vadd.f32 %v4032, %v4072
        %v4074 = vpop.f32.mrb[0].mxu0
        %v4075 = vadd.f32 %v4034, %v4074
        %v4076 = vpop.f32.mrb[0].mxu0
        %v4077 = vpop.f32.mrb[0].mxu0
        %4078 = vdwg.mxu0
        %4079 = vmatprep.subr.bf16.mxu0 %v2799
        %4080 = vmatpush1.bf16.msra.mxu0 %v2798
        %4081 = vmatprep.subr.bf16.mxu0 %v2803
        %4082 = vmatpush1.bf16.msra.mxu0 %v2802
        %4083 = vmatprep.subr.bf16.mxu0 %v2807
        %4084 = vmatpush1.bf16.msra.mxu0 %v2806
        %4085 = vmatprep.subr.bf16.mxu0 %v2811
        %4086 = vmatpush1.bf16.msra.mxu0 %v2810
        %4087 = vmatprep.subr.bf16.mxu0 %v2815
        %4088 = vmatpush1.bf16.msra.mxu0 %v2814
        %4089 = vmatprep.subr.bf16.mxu0 %v2819
        %4090 = vmatpush1.bf16.msra.mxu0 %v2818
        %4091 = vmatprep.subr.bf16.mxu0 %v2823
        %4092 = vmatpush1.bf16.msra.mxu0 %v2822
        %4093 = vmatprep.subr.bf16.mxu0 %v2827
        %4094 = vmatpush1.bf16.msra.mxu0 %v2826
        %4095 = vmatprep.subr.bf16.mxu0 %v2831
        %4096 = vmatpush1.bf16.msra.mxu0 %v2830
        %4097 = vmatprep.subr.bf16.mxu0 %v2835
        %4098 = vmatpush1.bf16.msra.mxu0 %v2834
        %4099 = vmatprep.subr.bf16.mxu0 %v2839
        %4100 = vmatpush1.bf16.msra.mxu0 %v2838
        %4101 = vmatprep.subr.bf16.mxu0 %v2843
        %4102 = vmatpush1.bf16.msra.mxu0 %v2842
        %4103 = vmatprep.subr.bf16.mxu0 %v2847
        %4104 = vmatpush1.bf16.msra.mxu0 %v2846
        %4105 = vmatprep.subr.bf16.mxu0 %v2851
        %4106 = vmatpush1.bf16.msra.mxu0 %v2850
        %4107 = vmatprep.subr.bf16.mxu0 %v2855
        %4108 = vmatpush1.bf16.msra.mxu0 %v2854
        %4109 = vmatprep.subr.bf16.mxu0 %v2859
        %4110 = vmatpush1.bf16.msra.mxu0 %v2858
        %4111 = vmatprep.mubr.bf16.mxu0 %v525
        %4112 = vmatmul.mubr.bf16.gmra.mrb[0].mxu0 %v524
        %v4113 = vpop.f32.mrb[0].mxu0
        %v4114 = vadd.f32 %v4073, %v4113
        %v4115 = vpop.f32.mrb[0].mxu0
        %v4116 = vadd.f32 %v4075, %v4115
        %v4117 = vpop.f32.mrb[0].mxu0
        %v4118 = vpop.f32.mrb[0].mxu0
        %4119 = vdwg.mxu0
        %4120 = vmatprep.subr.bf16.mxu0 %v2863
        %4121 = vmatpush1.bf16.msra.mxu0 %v2862
        %4122 = vmatprep.subr.bf16.mxu0 %v2867
        %4123 = vmatpush1.bf16.msra.mxu0 %v2866
        %4124 = vmatprep.subr.bf16.mxu0 %v2871
        %4125 = vmatpush1.bf16.msra.mxu0 %v2870
        %4126 = vmatprep.subr.bf16.mxu0 %v2875
        %4127 = vmatpush1.bf16.msra.mxu0 %v2874
        %4128 = vmatprep.subr.bf16.mxu0 %v2879
        %4129 = vmatpush1.bf16.msra.mxu0 %v2878
        %4130 = vmatprep.subr.bf16.mxu0 %v2883
        %4131 = vmatpush1.bf16.msra.mxu0 %v2882
        %4132 = vmatprep.subr.bf16.mxu0 %v2887
        %4133 = vmatpush1.bf16.msra.mxu0 %v2886
        %4134 = vmatprep.subr.bf16.mxu0 %v2891
        %4135 = vmatpush1.bf16.msra.mxu0 %v2890
        %4136 = vmatprep.subr.bf16.mxu0 %v2895
        %4137 = vmatpush1.bf16.msra.mxu0 %v2894
        %4138 = vmatprep.subr.bf16.mxu0 %v2899
        %4139 = vmatpush1.bf16.msra.mxu0 %v2898
        %4140 = vmatprep.subr.bf16.mxu0 %v2903
        %4141 = vmatpush1.bf16.msra.mxu0 %v2902
        %4142 = vmatprep.subr.bf16.mxu0 %v2907
        %4143 = vmatpush1.bf16.msra.mxu0 %v2906
        %4144 = vmatprep.subr.bf16.mxu0 %v2911
        %4145 = vmatpush1.bf16.msra.mxu0 %v2910
        %4146 = vmatprep.subr.bf16.mxu0 %v2915
        %4147 = vmatpush1.bf16.msra.mxu0 %v2914
        %4148 = vmatprep.subr.bf16.mxu0 %v2919
        %4149 = vmatpush1.bf16.msra.mxu0 %v2918
        %4150 = vmatprep.subr.bf16.mxu0 %v2923
        %4151 = vmatpush1.bf16.msra.mxu0 %v2922
        %4152 = vmatprep.mubr.bf16.mxu0 %v527
        %4153 = vmatmul.mubr.bf16.gmra.mrb[0].mxu0 %v526
        %v4154 = vpop.f32.mrb[0].mxu0
        %v4155 = vadd.f32 %v4114, %v4154
        %v4156 = vpop.f32.mrb[0].mxu0
        %v4157 = vadd.f32 %v4116, %v4156
        %v4158 = vpop.f32.mrb[0].mxu0
        %v4159 = vpop.f32.mrb[0].mxu0
        %4160 = vdwg.mxu0
        %4161 = vmatprep.subr.bf16.mxu0 %v2927
        %4162 = vmatpush1.bf16.msra.mxu0 %v2926
        %4163 = vmatprep.subr.bf16.mxu0 %v2931
        %4164 = vmatpush1.bf16.msra.mxu0 %v2930
        %4165 = vmatprep.subr.bf16.mxu0 %v2935
        %4166 = vmatpush1.bf16.msra.mxu0 %v2934
        %4167 = vmatprep.subr.bf16.mxu0 %v2939
        %4168 = vmatpush1.bf16.msra.mxu0 %v2938
        %4169 = vmatprep.subr.bf16.mxu0 %v2943
        %4170 = vmatpush1.bf16.msra.mxu0 %v2942
        %4171 = vmatprep.subr.bf16.mxu0 %v2947
        %4172 = vmatpush1.bf16.msra.mxu0 %v2946
        %4173 = vmatprep.subr.bf16.mxu0 %v2951
        %4174 = vmatpush1.bf16.msra.mxu0 %v2950
        %4175 = vmatprep.subr.bf16.mxu0 %v2955
        %4176 = vmatpush1.bf16.msra.mxu0 %v2954
        %4177 = vmatprep.subr.bf16.mxu0 %v2959
        %4178 = vmatpush1.bf16.msra.mxu0 %v2958
        %4179 = vmatprep.subr.bf16.mxu0 %v2963
        %4180 = vmatpush1.bf16.msra.mxu0 %v2962
        %4181 = vmatprep.subr.bf16.mxu0 %v2967
        %4182 = vmatpush1.bf16.msra.mxu0 %v2966
        %4183 = vmatprep.subr.bf16.mxu0 %v2971
        %4184 = vmatpush1.bf16.msra.mxu0 %v2970
        %4185 = vmatprep.subr.bf16.mxu0 %v2975
        %4186 = vmatpush1.bf16.msra.mxu0 %v2974
        %4187 = vmatprep.subr.bf16.mxu0 %v2979
        %4188 = vmatpush1.bf16.msra.mxu0 %v2978
        %4189 = vmatprep.subr.bf16.mxu0 %v2983
        %4190 = vmatpush1.bf16.msra.mxu0 %v2982
        %4191 = vmatprep.subr.bf16.mxu0 %v2987
        %4192 = vmatpush1.bf16.msra.mxu0 %v2986
        %4193 = vmatprep.mubr.bf16.mxu0 %v529
        %4194 = vmatmul.mubr.bf16.gmra.mrb[0].mxu0 %v528
        %v4195 = vpop.f32.mrb[0].mxu0
        %v4196 = vadd.f32 %v4155, %v4195
        %v4197 = vpop.f32.mrb[0].mxu0
        %v4198 = vadd.f32 %v4157, %v4197
        %v4199 = vpop.f32.mrb[0].mxu0
        %v4200 = vpop.f32.mrb[0].mxu0
        %4201 = vdwg.mxu0
        %4202 = vmatprep.subr.bf16.mxu0 %v2991
        %4203 = vmatpush1.bf16.msra.mxu0 %v2990
        %4204 = vmatprep.subr.bf16.mxu0 %v2995
        %4205 = vmatpush1.bf16.msra.mxu0 %v2994
        %4206 = vmatprep.subr.bf16.mxu0 %v2999
        %4207 = vmatpush1.bf16.msra.mxu0 %v2998
        %4208 = vmatprep.subr.bf16.mxu0 %v3003
        %4209 = vmatpush1.bf16.msra.mxu0 %v3002
        %4210 = vmatprep.subr.bf16.mxu0 %v3007
        %4211 = vmatpush1.bf16.msra.mxu0 %v3006
        %4212 = vmatprep.subr.bf16.mxu0 %v3011
        %4213 = vmatpush1.bf16.msra.mxu0 %v3010
        %4214 = vmatprep.subr.bf16.mxu0 %v3015
        %4215 = vmatpush1.bf16.msra.mxu0 %v3014
        %4216 = vmatprep.subr.bf16.mxu0 %v3019
        %4217 = vmatpush1.bf16.msra.mxu0 %v3018
        %4218 = vmatprep.subr.bf16.mxu0 %v3023
        %4219 = vmatpush1.bf16.msra.mxu0 %v3022
        %4220 = vmatprep.subr.bf16.mxu0 %v3027
        %4221 = vmatpush1.bf16.msra.mxu0 %v3026
        %4222 = vmatprep.subr.bf16.mxu0 %v3031
        %4223 = vmatpush1.bf16.msra.mxu0 %v3030
        %4224 = vmatprep.subr.bf16.mxu0 %v3035
        %4225 = vmatpush1.bf16.msra.mxu0 %v3034
        %4226 = vmatprep.subr.bf16.mxu0 %v3039
        %4227 = vmatpush1.bf16.msra.mxu0 %v3038
        %4228 = vmatprep.subr.bf16.mxu0 %v3043
        %4229 = vmatpush1.bf16.msra.mxu0 %v3042
        %4230 = vmatprep.subr.bf16.mxu0 %v3047
        %4231 = vmatpush1.bf16.msra.mxu0 %v3046
        %4232 = vmatprep.subr.bf16.mxu0 %v3051
        %4233 = vmatpush1.bf16.msra.mxu0 %v3050
        %4234 = vmatprep.mubr.bf16.mxu0 %v531
        %4235 = vmatmul.mubr.bf16.gmra.mrb[0].mxu0 %v530
        %v4236 = vpop.f32.mrb[0].mxu0
        %v4237 = vadd.f32 %v4196, %v4236
        %v4238 = vpop.f32.mrb[0].mxu0
        %v4239 = vadd.f32 %v4198, %v4238
        %v4240 = vpop.f32.mrb[0].mxu0
        %v4241 = vpop.f32.mrb[0].mxu0
        %4242 = vdwg.mxu0
        %4243 = vmatprep.subr.bf16.mxu0 %v3055
        %4244 = vmatpush1.bf16.msra.mxu0 %v3054
        %4245 = vmatprep.subr.bf16.mxu0 %v3059
        %4246 = vmatpush1.bf16.msra.mxu0 %v3058
        %4247 = vmatprep.subr.bf16.mxu0 %v3063
        %4248 = vmatpush1.bf16.msra.mxu0 %v3062
        %4249 = vmatprep.subr.bf16.mxu0 %v3067
        %4250 = vmatpush1.bf16.msra.mxu0 %v3066
        %4251 = vmatprep.subr.bf16.mxu0 %v3071
        %4252 = vmatpush1.bf16.msra.mxu0 %v3070
        %4253 = vmatprep.subr.bf16.mxu0 %v3075
        %4254 = vmatpush1.bf16.msra.mxu0 %v3074
        %4255 = vmatprep.subr.bf16.mxu0 %v3079
        %4256 = vmatpush1.bf16.msra.mxu0 %v3078
        %4257 = vmatprep.subr.bf16.mxu0 %v3083
        %4258 = vmatpush1.bf16.msra.mxu0 %v3082
        %4259 = vmatprep.subr.bf16.mxu0 %v3087
        %4260 = vmatpush1.bf16.msra.mxu0 %v3086
        %4261 = vmatprep.subr.bf16.mxu0 %v3091
        %4262 = vmatpush1.bf16.msra.mxu0 %v3090
        %4263 = vmatprep.subr.bf16.mxu0 %v3095
        %4264 = vmatpush1.bf16.msra.mxu0 %v3094
        %4265 = vmatprep.subr.bf16.mxu0 %v3099
        %4266 = vmatpush1.bf16.msra.mxu0 %v3098
        %4267 = vmatprep.subr.bf16.mxu0 %v3103
        %4268 = vmatpush1.bf16.msra.mxu0 %v3102
        %4269 = vmatprep.subr.bf16.mxu0 %v3107
        %4270 = vmatpush1.bf16.msra.mxu0 %v3106
        %4271 = vmatprep.subr.bf16.mxu0 %v3111
        %4272 = vmatpush1.bf16.msra.mxu0 %v3110
        %4273 = vmatprep.subr.bf16.mxu0 %v3115
        %4274 = vmatpush1.bf16.msra.mxu0 %v3114
        %4275 = vmatprep.mubr.bf16.mxu0 %v533
        %4276 = vmatmul.mubr.bf16.gmra.mrb[0].mxu0 %v532
        %v4277 = vpop.f32.mrb[0].mxu0
        %v4278 = vadd.f32 %v4237, %v4277
        %v4279 = vpop.f32.mrb[0].mxu0
        %v4280 = vadd.f32 %v4239, %v4279
        %v4281 = vpop.f32.mrb[0].mxu0
        %v4282 = vpop.f32.mrb[0].mxu0
        %4283 = vdwg.mxu0
        %v4286 = vcombine.low %v4278, %v4280
        %v4288 = vunpack.c.l.s4 1983009808
        %v4289 = vunpack.c.0.s8 %v4288
        %v4290 = vlaneseq
        %v4291 = vshrl.u32 %v4290, 7
        %v4292 = vsub.s32 %v4289, %v4291
        %v4293 = vrot.slane %v4286, %v4292
        %4295 = vst [vmem:[%s424] sm:$0xf] %v4293
        %vm4296 = vcmp.ge.f32.partialorder %v3950, 0.0
        %vm4297 = vcmp.ge.f32.partialorder %v3952, 0.0
        %v4298 = vmul.f32 %v3950, 0.1
        %v4299 = vmul.f32 %v3952, 0.1
        %v4300 = vsel %vm4296, %v3950, %v4298
        %v4301 = vsel %vm4297, %v3952, %v4299
        %v4302 = vpack.c.bf16 %v4300, %v4300
        %v4303 = vpack.c.bf16 %v4301, %v4301
        %v4304 = vld [vmem:[%s364] sm:$0xf]
        %v4305 = vld [vmem:[%s364 + $0x4] sm:$0xf]
        %v4306 = vld [vmem:[%s364 + $0x8] sm:$0xf]
        %v4307 = vld [vmem:[%s364 + $0xc] sm:$0xf]
        %v4308 = vld [vmem:[%s364 + $0x10] sm:$0xf]
        %v4309 = vld [vmem:[%s364 + $0x14] sm:$0xf]
        %v4310 = vld [vmem:[%s364 + $0x18] sm:$0xf]
        %v4311 = vld [vmem:[%s364 + $0x1c] sm:$0xf]
        %v4312 = vld [vmem:[%s364 + $0x20] sm:$0xf]
        %v4313 = vld [vmem:[%s364 + $0x24] sm:$0xf]
        %v4314 = vld [vmem:[%s364 + $0x28] sm:$0xf]
        %v4315 = vld [vmem:[%s364 + $0x2c] sm:$0xf]
        %v4316 = vld [vmem:[%s364 + $0x30] sm:$0xf]
        %v4317 = vld [vmem:[%s364 + $0x34] sm:$0xf]
        %v4318 = vld [vmem:[%s364 + $0x38] sm:$0xf]
        %v4319 = vld [vmem:[%s364 + $0x3c] sm:$0xf]
        %v4320 = vld [vmem:[%s364 + $0x40] sm:$0xf]
        %v4321 = vld [vmem:[%s364 + $0x44] sm:$0xf]
        %v4322 = vld [vmem:[%s364 + $0x48] sm:$0xf]
        %v4323 = vld [vmem:[%s364 + $0x4c] sm:$0xf]
        %v4324 = vld [vmem:[%s364 + $0x50] sm:$0xf]
        %v4325 = vld [vmem:[%s364 + $0x54] sm:$0xf]
        %v4326 = vld [vmem:[%s364 + $0x58] sm:$0xf]
        %v4327 = vld [vmem:[%s364 + $0x5c] sm:$0xf]
        %v4328 = vld [vmem:[%s364 + $0x60] sm:$0xf]
        %v4329 = vld [vmem:[%s364 + $0x64] sm:$0xf]
        %v4330 = vld [vmem:[%s364 + $0x68] sm:$0xf]
        %v4331 = vld [vmem:[%s364 + $0x6c] sm:$0xf]
        %v4332 = vld [vmem:[%s364 + $0x70] sm:$0xf]
        %v4333 = vld [vmem:[%s364 + $0x74] sm:$0xf]
        %v4334 = vld [vmem:[%s364 + $0x78] sm:$0xf]
        %v4335 = vld [vmem:[%s364 + $0x7c] sm:$0xf]
        %v4336 = vld [vmem:[%s372] sm:$0x1]
        %v4338 = vlaneseq
        %v4339 = vshrl.u32 %v4338, 7
        %v4340 = vsub.s32 0, %v4339
        %v4341 = vrot.slane %v4336, %v4340
        %v4375 = vunpack.c.l.b16 %v4304
        %v4376 = vunpack.c.l.b16 %v4305
        %v4377 = vunpack.c.l.b16 %v4306
        %v4378 = vunpack.c.l.b16 %v4307
        %v4379 = vunpack.c.l.b16 %v4308
        %v4380 = vunpack.c.l.b16 %v4309
        %v4381 = vunpack.c.l.b16 %v4310
        %v4382 = vunpack.c.l.b16 %v4311
        %v4383 = vunpack.c.l.b16 %v4312
        %v4384 = vunpack.c.l.b16 %v4313
        %v4385 = vunpack.c.l.b16 %v4314
        %v4386 = vunpack.c.l.b16 %v4315
        %v4387 = vunpack.c.l.b16 %v4316
        %v4388 = vunpack.c.l.b16 %v4317
        %v4389 = vunpack.c.l.b16 %v4318
        %v4390 = vunpack.c.l.b16 %v4319
        %v4391 = vunpack.c.l.b16 %v4320
        %v4392 = vunpack.c.l.b16 %v4321
        %v4393 = vunpack.c.l.b16 %v4322
        %v4394 = vunpack.c.l.b16 %v4323
        %v4395 = vunpack.c.l.b16 %v4324
        %v4396 = vunpack.c.l.b16 %v4325
        %v4397 = vunpack.c.l.b16 %v4326
        %v4398 = vunpack.c.l.b16 %v4327
        %v4399 = vunpack.c.l.b16 %v4328
        %v4400 = vunpack.c.l.b16 %v4329
        %v4401 = vunpack.c.l.b16 %v4330
        %v4402 = vunpack.c.l.b16 %v4331
        %v4403 = vunpack.c.l.b16 %v4332
        %v4404 = vunpack.c.l.b16 %v4333
        %v4405 = vunpack.c.l.b16 %v4334
        %v4406 = vunpack.c.l.b16 %v4335
        %v4407 = vpack.c.b16 %v4376, %v4375
        %v4408 = vpack.c.b16 %v4378, %v4377
        %v4409 = vpack.c.b16 %v4380, %v4379
        %v4410 = vpack.c.b16 %v4382, %v4381
        %v4411 = vpack.c.b16 %v4384, %v4383
        %v4412 = vpack.c.b16 %v4386, %v4385
        %v4413 = vpack.c.b16 %v4388, %v4387
        %v4414 = vpack.c.b16 %v4390, %v4389
        %v4415 = vpack.c.b16 %v4392, %v4391
        %v4416 = vpack.c.b16 %v4394, %v4393
        %v4417 = vpack.c.b16 %v4396, %v4395
        %v4418 = vpack.c.b16 %v4398, %v4397
        %v4419 = vpack.c.b16 %v4400, %v4399
        %v4420 = vpack.c.b16 %v4402, %v4401
        %v4421 = vpack.c.b16 %v4404, %v4403
        %v4422 = vpack.c.b16 %v4406, %v4405
        %4439 = vmatprep.subr.bf16.mxu0 0
        %4440 = vmatpush1.bf16.msra.mxu0 %v4407
        %4441 = vmatprep.subr.bf16.mxu0 0
        %4442 = vmatpush1.bf16.msra.mxu0 %v4408
        %4443 = vmatprep.subr.bf16.mxu0 0
        %4444 = vmatpush1.bf16.msra.mxu0 %v4409
        %4445 = vmatprep.subr.bf16.mxu0 0
        %4446 = vmatpush1.bf16.msra.mxu0 %v4410
        %4447 = vmatprep.subr.bf16.mxu0 0
        %4448 = vmatpush1.bf16.msra.mxu0 %v4411
        %4449 = vmatprep.subr.bf16.mxu0 0
        %4450 = vmatpush1.bf16.msra.mxu0 %v4412
        %4451 = vmatprep.subr.bf16.mxu0 0
        %4452 = vmatpush1.bf16.msra.mxu0 %v4413
        %4453 = vmatprep.subr.bf16.mxu0 0
        %4454 = vmatpush1.bf16.msra.mxu0 %v4414
        %4455 = vmatprep.subr.bf16.mxu0 0
        %4456 = vmatpush1.bf16.msra.mxu0 %v4415
        %4457 = vmatprep.subr.bf16.mxu0 0
        %4458 = vmatpush1.bf16.msra.mxu0 %v4416
        %4459 = vmatprep.subr.bf16.mxu0 0
        %4460 = vmatpush1.bf16.msra.mxu0 %v4417
        %4461 = vmatprep.subr.bf16.mxu0 0
        %4462 = vmatpush1.bf16.msra.mxu0 %v4418
        %4463 = vmatprep.subr.bf16.mxu0 0
        %4464 = vmatpush1.bf16.msra.mxu0 %v4419
        %4465 = vmatprep.subr.bf16.mxu0 0
        %4466 = vmatpush1.bf16.msra.mxu0 %v4420
        %4467 = vmatprep.subr.bf16.mxu0 0
        %4468 = vmatpush1.bf16.msra.mxu0 %v4421
        %4469 = vmatprep.subr.bf16.mxu0 0
        %4470 = vmatpush1.bf16.msra.mxu0 %v4422
        %4471 = vmatprep.mubr.bf16.mxu0 %v4303
        %4472 = vmatmul.mubr.bf16.gmra.mrb[0].mxu0 %v4302
        %v4473 = vpop.f32.mrb[0].mxu0
        %v4474 = vadd.f32 %v4341, %v4473
        %v4475 = vpop.f32.mrb[0].mxu0
        %v4476 = vpop.f32.mrb[0].mxu0
        %v4477 = vpop.f32.mrb[0].mxu0
        %4478 = vdwg.mxu0
        %4479 = vst [vmem:[%s417] sm:$0x3] %v4474
        %s4480 = sand.u32 %s171, 1
        %s4481 = scalar_lea.sflag [#allocation4], %s4480
        %s4482 = sand.u32 %s171, 1
        %s4483 = smul.addr %s4482, 2
        %s4484 = scalar_lea.vmem [#allocation11], %s4483
        %s4485 = sand.u32 %s197, 1
        %s4486 = scalar_lea.sflag [#allocation13], %s4485
        %s4487 = sand.u32 %s197, 1
        %s4488 = smul.addr %s4487, 4
        %s4489 = scalar_lea.vmem [#allocation12], %s4488
        // Predicated region
        $region61: #{tpu_custom_call.1} parent=39 // pred_check
          %p4490 = pneg %p181
        $region62: #{tpu_custom_call.1} parent=39 // pred_check_branch
          %4492 = sbr.rel (%p4490) target = $region64
        $region63: #{tpu_custom_call.1} parent=39 // pred_region
          %s4494 = ssub.s32 32, 32
          %4495 = vsyncadd %s4481, %s4494
          %s4496 = smul.addr %s33, 32
          %s4497 = scalar_lea.hbm %s5, %s4496
          %s4499 = sshll.u32 %s4484, 4
          %s4500 = int_to_ptr.vmem [resolvable:$true] %s4499
          %4502 = dma.vmem_to_hbm [thread:$0]  %s4500, 32, %s4497, %s4481
        $region64: #{tpu_custom_call.1} parent=39 // pred_fallthru
          _
        // Predicated region
        $region65: #{tpu_custom_call.1} parent=39 // pred_check
          %p4503 = pneg %p207
        $region66: #{tpu_custom_call.1} parent=39 // pred_check_branch
          %4505 = sbr.rel (%p4503) target = $region68
        $region67: #{tpu_custom_call.1} parent=39 // pred_region
          %s4507 = ssub.s32 64, 64
          %4508 = vsyncadd %s4486, %s4507
          %s4509 = smul.addr %s33, 2
          %s4510 = smul.addr %s4509, 32
          %s4511 = scalar_lea.hbm %s6, %s4510
          %s4513 = sshll.u32 %s4489, 4
          %s4514 = int_to_ptr.vmem [resolvable:$true] %s4513
          %4516 = dma.vmem_to_hbm [thread:$0]  %s4514, 64, %s4511, %s4486
        $region68: #{tpu_custom_call.1} parent=39 // pred_fallthru
          _
      $region40: #{tpu_custom_call.1} parent=5 // pred_fallthru
        _
      %p4517 = scmp.le.s32.totalorder 2, %s28
      // Predicated region
      $region69: #{tpu_custom_call.1} parent=5 // pred_check
        %p4518 = pneg %p4517
      $region70: #{tpu_custom_call.1} parent=5 // pred_check_branch
        %4520 = sbr.rel (%p4518) target = $region72
      $region71: #{tpu_custom_call.1} parent=5 // pred_region
        %s4521 = ssub.s32 %s28, 2
        // Predicated region
        $region73: #{tpu_custom_call.1} parent=71 // pred_check
          %p4522 = pneg %p187
        $region74: #{tpu_custom_call.1} parent=71 // pred_check_branch
          %4524 = sbr.rel (%p4522) target = $region76
        $region75: #{tpu_custom_call.1} parent=71 // pred_region
          %s4525 = sand.u32 %s172, 1
          %s4526 = scalar_lea.sflag [#allocation4], %s4525
          %s4527 = sand.u32 %s172, 1
          %s4528 = smul.addr %s4527, 2
          %s4529 = scalar_lea.vmem [#allocation11], %s4528
          %4530 = dma.done %s4526, 32
        $region76: #{tpu_custom_call.1} parent=71 // pred_fallthru
          _
        // Predicated region
        $region77: #{tpu_custom_call.1} parent=71 // pred_check
          %p4531 = pneg %p213
        $region78: #{tpu_custom_call.1} parent=71 // pred_check_branch
          %4533 = sbr.rel (%p4531) target = $region80
        $region79: #{tpu_custom_call.1} parent=71 // pred_region
          %s4534 = sand.u32 %s198, 1
          %s4535 = scalar_lea.sflag [#allocation13], %s4534
          %s4536 = sand.u32 %s198, 1
          %s4537 = smul.addr %s4536, 4
          %s4538 = scalar_lea.vmem [#allocation12], %s4537
          %4539 = dma.done %s4535, 64
        $region80: #{tpu_custom_call.1} parent=71 // pred_fallthru
          _
      $region72: #{tpu_custom_call.1} parent=5 // pred_fallthru
        _
    $region6: #{tpu_custom_call.1} parent=1 // loop_footer
      %s32 = sadd.s32 1, %s28
    $region7: #{tpu_custom_call.1} parent=1 // loop_footer_branch
      %27 = sbr.rel target = $region3
    $region8: #{tpu_custom_call.1} parent=1 // loop_exit
      _
    %4540 = vsyncpa [#allocation3], 1
    %s4541 = scalar_lea.sflag [#allocation3], 1
    %4542 = vsyncpa %s4541, 1
    %4543 = vsyncpa [#allocation6], 1
    %s4544 = scalar_lea.sflag [#allocation6], 1
    %4545 = vsyncpa %s4544, 1
    %4546 = vsyncpa [#allocation9], 1
    %s4547 = scalar_lea.sflag [#allocation9], 1
    %4548 = vsyncpa %s4547, 1
    %4549 = vsyncpa [#allocation4], 1
    %s4550 = scalar_lea.sflag [#allocation4], 1
    %4551 = vsyncpa %s4550, 1
    %4552 = vsyncpa [#allocation13], 1
    %s4553 = scalar_lea.sflag [#allocation13], 1
    %4554 = vsyncpa %s4553, 1

</llo_original>
